<compile_context>
chip_gen: v5e
topology: v5e:2x2
jax: 0.10.0
libtpu: 0.0.40
codegen_flags: <defaults>
</compile_context>

<pallas_src>
import jax
import jax.numpy as jnp
from jax import lax
from jax.experimental import pallas as pl
from jax.experimental.pallas import tpu as pltpu

EPS = 1e-5


# ------------------------------ tiling helpers ----------------------------- #
def _round_up(x, m):
    return (x + m - 1) // m * m


def _pick_tile(dim, target, align):
    """Pad `dim` to a multiple of `align`; pick the largest tile (multiple of
    `align`, <= target) that divides the padded dim.  Returns (padded, tile)."""
    dim_a = _round_up(dim, align)
    t = max(align, (min(target, dim_a) // align) * align)
    while t > align and dim_a % t != 0:
        t -= align
    return dim_a, t


# ------------------------------ Pallas kernels ----------------------------- #
def matmul_stats_kernel(x_ref, w_ref, y_ref, st_ref, acc_ref):
    """One (tm, tn) tile of y = xcol @ w (bf16 inputs, f32 accumulate), with K
    streamed along the innermost grid axis.  At the final K step the tile is
    emitted together with its per-channel sum and sum-of-squares so BatchNorm
    batch statistics can be finalized without re-reading y from HBM."""
    k = pl.program_id(2)

    @pl.when(k == 0)
    def _():
        acc_ref[...] = jnp.zeros_like(acc_ref)

    acc_ref[...] += jnp.dot(x_ref[...], w_ref[...],
                            preferred_element_type=jnp.float32)

    @pl.when(k == pl.num_programs(2) - 1)
    def _():
        y = acc_ref[...]
        y_ref[...] = y
        st_ref[0, 0:1, :] = jnp.sum(y, axis=0, keepdims=True)
        st_ref[0, 1:2, :] = jnp.sum(y * y, axis=0, keepdims=True)


def bn_relu_kernel(y_ref, p_ref, o_ref):
    """Apply the finalized BatchNorm affine (row 0 = scale, row 1 = shift) and
    ReLU to one (tm, Cpad) tile."""
    y = y_ref[...]
    scale = p_ref[0:1, :]
    shift = p_ref[1:2, :]
    o_ref[...] = jnp.maximum(y * scale + shift, 0.0).astype(o_ref.dtype)


# ----------------------------- kernel wrappers ----------------------------- #
def matmul_stats_pallas(xcol, w2d, *, tm, tk, tn):
    Mp, Kp = xcol.shape
    _, Cp = w2d.shape
    nm, nn, nk = Mp // tm, Cp // tn, Kp // tk
    return pl.pallas_call(
        matmul_stats_kernel,
        grid_spec=pltpu.PrefetchScalarGridSpec(
            num_scalar_prefetch=0,
            grid=(nm, nn, nk),
            in_specs=[
                pl.BlockSpec((tm, tk), lambda i, j, k: (i, k)),
                pl.BlockSpec((tk, tn), lambda i, j, k: (k, j)),
            ],
            out_specs=(
                pl.BlockSpec((tm, tn), lambda i, j, k: (i, j)),
                pl.BlockSpec((1, 2, tn), lambda i, j, k: (i, 0, j)),
            ),
            scratch_shapes=[pltpu.VMEM((tm, tn), jnp.float32)],
        ),
        out_shape=(
            jax.ShapeDtypeStruct((Mp, Cp), jnp.float32),
            jax.ShapeDtypeStruct((nm, 2, Cp), jnp.float32),
        ),
        compiler_params=pltpu.CompilerParams(
            dimension_semantics=("parallel", "parallel", "arbitrary")),
    )(xcol, w2d)


def bn_relu_pallas(y, params, *, tm, out_dtype):
    Mp, Cp = y.shape
    nm = Mp // tm
    return pl.pallas_call(
        bn_relu_kernel,
        grid_spec=pltpu.PrefetchScalarGridSpec(
            num_scalar_prefetch=0,
            grid=(nm,),
            in_specs=[
                pl.BlockSpec((tm, Cp), lambda i: (i, 0)),
                pl.BlockSpec((2, Cp), lambda i: (0, 0)),
            ],
            out_specs=pl.BlockSpec((tm, Cp), lambda i: (i, 0)),
        ),
        out_shape=jax.ShapeDtypeStruct((Mp, Cp), out_dtype),
        compiler_params=pltpu.CompilerParams(
            dimension_semantics=("parallel",)),
    )(y, params)


# -------------------------------- JAX glue --------------------------------- #
def _lerp_indices(in_size, out_size):
    if out_size == 1:
        src = jnp.zeros((1,), jnp.float32)
    else:
        src = jnp.arange(out_size, dtype=jnp.float32) * (in_size - 1) / (out_size - 1)
    lo = jnp.clip(jnp.floor(src).astype(jnp.int32), 0, in_size - 1)
    hi = jnp.minimum(lo + 1, in_size - 1)
    frac = src - lo.astype(jnp.float32)
    return lo, hi, frac


def upsample_pad_concat(x1, x2):
    """nn.Upsample(scale_factor=2, bilinear, align_corners=True) on x1 via
    gather+lerp, pad to x2's spatial size, concat([x2, x1_up], dim=1)."""
    _, _, H1, W1 = x1.shape
    _, _, H2, W2 = x2.shape
    hlo, hhi, hf = _lerp_indices(H1, 2 * H1)
    wlo, whi, wf = _lerp_indices(W1, 2 * W1)
    xh = (x1[:, :, hlo, :] * (1.0 - hf)[None, None, :, None]
          + x1[:, :, hhi, :] * hf[None, None, :, None])
    xu = (xh[:, :, :, wlo] * (1.0 - wf)[None, None, None, :]
          + xh[:, :, :, whi] * wf[None, None, None, :])
    diffY = H2 - xu.shape[2]
    diffX = W2 - xu.shape[3]
    xu = jnp.pad(xu, ((0, 0), (0, 0),
                      (diffY // 2, diffY - diffY // 2),
                      (diffX // 2, diffX - diffX // 2)))
    return jnp.concatenate([x2, xu], axis=1)


def im2col3x3(x_nhwc):
    # padding=1, 3x3 kernel; columns ordered (kh, kw, ci) to match
    # w.reshape(9*Cin, Cout).
    N, H, W, C = x_nhwc.shape
    xp = jnp.pad(x_nhwc, ((0, 0), (1, 1), (1, 1), (0, 0)))
    cols = [xp[:, kh:kh + H, kw:kw + W, :] for kh in range(3) for kw in range(3)]
    col = jnp.concatenate(cols, axis=-1)            # (N, H, W, 9*C)
    return col.reshape(N * H * W, 9 * C)


def conv_bn_relu_stage(x_nhwc, w, gamma, beta, *, out_dtype):
    """3x3 conv (padding=1; bias skipped — it cancels exactly under the
    train-mode BatchNorm that follows) + BatchNorm(batch stats) + ReLU.
    Channels stay zero-padded to a multiple of 128 (lane-dense output)."""
    N, H, W, Cin_x = x_nhwc.shape
    Cin_w, Cout = w.shape[2], w.shape[3]
    # Match the weight's input-channel axis to the (possibly channel-padded)
    # activations.  Padded activation channels are exactly zero, so this is exact.
    w = jnp.pad(w, ((0, 0), (0, 0), (0, Cin_x - Cin_w), (0, 0)))

    M = N * H * W
    K = 9 * Cin_x
    Mp, tm = _pick_tile(M, 256, 128)
    Kp, tk = _pick_tile(K, 512, 128)
    Cp, tn = _pick_tile(Cout, 256, 128)

    # bf16 MXU inputs (f32 accumulation inside the kernel).
    xcol = im2col3x3(x_nhwc.astype(jnp.bfloat16))
    xcol = jnp.pad(xcol, ((0, Mp - M), (0, Kp - K)))
    w2d = w.reshape(K, Cout).astype(jnp.bfloat16)
    w2d = jnp.pad(w2d, ((0, Kp - K), (0, Cp - Cout)))

    y, st = matmul_stats_pallas(xcol, w2d, tm=tm, tk=tk, tn=tn)

    # Finalize BN batch statistics.  Zero-padded rows / channels contribute
    # exactly zero to the sums, so dividing by the true M is correct.
    s = jnp.sum(st, axis=0)                         # (2, Cp)
    mean = s[0] / M
    var = jnp.maximum(s[1] / M - mean * mean, 0.0)  # biased variance (train mode)
    g = jnp.pad(gamma, (0, Cp - Cout))
    b = jnp.pad(beta, (0, Cp - Cout))
    scale = g * lax.rsqrt(var + EPS)
    shift = b - mean * scale
    params = jnp.stack([scale, shift]).astype(jnp.float32)   # (2, Cp)

    out = bn_relu_pallas(y, params, tm=tm, out_dtype=out_dtype)
    return out[:M].reshape(N, H, W, Cp)


def up_forward(x1, x2, w1, b1, g1, be1, w2, b2, g2, be2):
    """Up.forward(down_conv_x1=x1, up_conv_x2=x2) with bilinear=True."""
    # Conv biases are accepted for API parity but mathematically cancel under
    # the train-mode BatchNorm that immediately follows each conv.
    del b1, b2
    Cout = w2.shape[-1]
    x = upsample_pad_concat(x1, x2)                 # (N, in_channels, H2, W2)
    xh = jnp.transpose(x, (0, 2, 3, 1))             # NHWC
    h = conv_bn_relu_stage(xh, w1, g1, be1, out_dtype=jnp.bfloat16)
    z = conv_bn_relu_stage(h, w2, g2, be2, out_dtype=jnp.float32)
    z = z[..., :Cout]
    return jnp.transpose(z, (0, 3, 1, 2))           # back to NCHW


# ---------------------------- pure-JAX reference ---------------------------- #
def conv_bn_relu_ref(x_nchw, w, b, gamma, beta):
    # Mirror the kernel's bf16 MXU-input precision so the comparison is tight.
    xb = x_nchw.astype(jnp.bfloat16).astype(jnp.float32)
    wb = w.astype(jnp.bfloat16).astype(jnp.float32)
    wo = jnp.transpose(wb, (3, 2, 0, 1))            # (Cout, Cin, 3, 3)
    y = lax.conv_general_dilated(
        xb, wo, (1, 1), ((1, 1), (1, 1)),
        dimension_numbers=("NCHW", "OIHW", "NCHW"))
    y = y + b.reshape(1, -1, 1, 1)                  # cancels under BN below
    mean = jnp.mean(y, axis=(0, 2, 3), keepdims=True)
    var = jnp.mean(jnp.square(y - mean), axis=(0, 2, 3), keepdims=True)
    y = (y - mean) * lax.rsqrt(var + EPS)
    y = y * gamma.reshape(1, -1, 1, 1) + beta.reshape(1, -1, 1, 1)
    return jnp.maximum(y, 0.0)


def up_forward_ref(x1, x2, w1, b1, g1, be1, w2, b2, g2, be2):
    x = upsample_pad_concat(x1, x2)
    y = conv_bn_relu_ref(x, w1, b1, g1, be1)
    # the kernel path stores the intermediate activations in bf16
    y = y.astype(jnp.bfloat16).astype(jnp.float32)
    return conv_bn_relu_ref(y, w2, b2, g2, be2)


# ----------------------------------- main ----------------------------------- #
if __name__ == "__main__":
    key = jax.random.PRNGKey(0)
    k = jax.random.split(key, 6)

    in_channels, out_channels = 8, 4
    mid_channels = in_channels // 2                 # double_conv mid (bilinear=True)
    N, H1, W1 = 2, 8, 8                             # deep feature map (upsampled)
    H2, W2 = 16, 16                                 # skip-connection feature map

    # channels(x1) + channels(x2) == in_channels (bilinear upsample keeps channels)
    x1 = jax.random.normal(k[0], (N, in_channels // 2, H1, W1), jnp.float32)
    x2 = jax.random.normal(k[1], (N, in_channels // 2, H2, W2), jnp.float32)

    # deterministic synthetic parameters (Conv2d weights in (kh, kw, in, out) layout)
    w1 = 0.1 * jax.random.normal(k[2], (3, 3, in_channels, mid_channels), jnp.float32)
    b1 = 0.1 * jax.random.normal(k[3], (mid_channels,), jnp.float32)
    g1 = jnp.ones((mid_channels,), jnp.float32)
    be1 = jnp.zeros((mid_channels,), jnp.float32)

    w2 = 0.1 * jax.random.normal(k[4], (3, 3, mid_channels, out_channels), jnp.float32)
    b2 = 0.1 * jax.random.normal(k[5], (out_channels,), jnp.float32)
    g2 = jnp.ones((out_channels,), jnp.float32)
    be2 = jnp.zeros((out_channels,), jnp.float32)

    fwd = jax.jit(up_forward)
    out = jax.block_until_ready(fwd(x1, x2, w1, b1, g1, be1, w2, b2, g2, be2))
    assert out.shape == (N, out_channels, H2, W2), out.shape

    ref = up_forward_ref(x1, x2, w1, b1, g1, be1, w2, b2, g2, be2)
    err = float(jnp.max(jnp.abs(out - ref)))
    assert err < 5e-3, f"mismatch vs reference: {err}"

    print("KERNEL_OK")
</pallas_src>

<mosaic_0001>
module attributes {stable_mosaic.version = 11 : i64} {
  func.func @matmul_stats_kernel(%arg0: i32, %arg1: i32, %arg2: i32, %arg3: memref<256x128xbf16, #tpu.memory_space<vmem>>, %arg4: memref<128x128xbf16, #tpu.memory_space<vmem>>, %arg5: memref<256x128xf32, #tpu.memory_space<vmem>>, %arg6: memref<1x2x128xf32, #tpu.memory_space<vmem>>, %arg7: memref<256x128xf32, #tpu.memory_space<vmem>>) attributes {dimension_semantics = [#tpu.dimension_semantics<parallel>, #tpu.dimension_semantics<parallel>, #tpu.dimension_semantics<arbitrary>], iteration_bounds = array<i64: 2, 1, 1>, scalar_prefetch = 0 : i64, scratch_operands = 1 : i64, tpu.core_type = #tpu.core_type<tc>, window_params = [{transform_indices = @transform_0, window_bounds = array<i64: 256, 128>}, {transform_indices = @transform_1, window_bounds = array<i64: 128, 128>}, {transform_indices = @transform_2, window_bounds = array<i64: 256, 128>}, {transform_indices = @transform_3, window_bounds = array<i64: 1, 2, 128>}]} {
    %c0_i32 = arith.constant 0 : i32
    %0 = arith.cmpi eq, %arg2, %c0_i32 : i32
    %1 = arith.extui %0 : i1 to i32
    %c0_i32_0 = arith.constant 0 : i32
    %2 = arith.cmpi ne, %1, %c0_i32_0 : i32
    scf.if %2 {
      %cst_10 = arith.constant 0.000000e+00 : f32
      %12 = vector.broadcast %cst_10 : f32 to vector<256x128xf32>
      %c0_11 = arith.constant 0 : index
      %c0_12 = arith.constant 0 : index
      %13 = vector.load %arg7[%c0_11, %c0_12] : memref<256x128xf32, #tpu.memory_space<vmem>>, vector<256x128xf32>
      tpu.vector_store %arg7[%c0_11, %c0_12], %12 {strides = array<i32>} : memref<256x128xf32, #tpu.memory_space<vmem>>, vector<256x128xf32>,
    } else {
    }
    %c0 = arith.constant 0 : index
    %c0_1 = arith.constant 0 : index
    %3 = vector.load %arg7[%c0, %c0_1] : memref<256x128xf32, #tpu.memory_space<vmem>>, vector<256x128xf32>
    %c0_2 = arith.constant 0 : index
    %c0_3 = arith.constant 0 : index
    %4 = vector.load %arg3[%c0_2, %c0_3] : memref<256x128xbf16, #tpu.memory_space<vmem>>, vector<256x128xbf16>
    %c0_4 = arith.constant 0 : index
    %c0_5 = arith.constant 0 : index
    %5 = vector.load %arg4[%c0_4, %c0_5] : memref<128x128xbf16, #tpu.memory_space<vmem>>, vector<128x128xbf16>
    %cst = arith.constant dense<0.000000e+00> : vector<256x128xf32>
    %6 = tpu.matmul %4, %5, %cst {dimension_numbers = #tpu.dot_dimension_numbers<[1], [0], [0], [1], [0, 0, 1, 1], [], []>} : vector<256x128xbf16>, vector<128x128xbf16>, vector<256x128xf32> -> vector<256x128xf32>
    %7 = arith.addf %3, %6 : vector<256x128xf32>
    %c0_6 = arith.constant 0 : index
    %c0_7 = arith.constant 0 : index
    %8 = vector.load %arg7[%c0_6, %c0_7] : memref<256x128xf32, #tpu.memory_space<vmem>>, vector<256x128xf32>
    tpu.vector_store %arg7[%c0_6, %c0_7], %7 {strides = array<i32>} : memref<256x128xf32, #tpu.memory_space<vmem>>, vector<256x128xf32>,
    %c0_i32_8 = arith.constant 0 : i32
    %9 = arith.cmpi eq, %arg2, %c0_i32_8 : i32
    %10 = arith.extui %9 : i1 to i32
    %c0_i32_9 = arith.constant 0 : i32
    %11 = arith.cmpi ne, %10, %c0_i32_9 : i32
    scf.if %11 {
      %c0_10 = arith.constant 0 : index
      %c0_11 = arith.constant 0 : index
      %12 = vector.load %arg7[%c0_10, %c0_11] : memref<256x128xf32, #tpu.memory_space<vmem>>, vector<256x128xf32>
      %c0_12 = arith.constant 0 : index
      %c0_13 = arith.constant 0 : index
      %13 = vector.load %arg5[%c0_12, %c0_13] : memref<256x128xf32, #tpu.memory_space<vmem>>, vector<256x128xf32>
      tpu.vector_store %arg5[%c0_12, %c0_13], %12 {strides = array<i32>} : memref<256x128xf32, #tpu.memory_space<vmem>>, vector<256x128xf32>,
      %cst_14 = arith.constant dense<0.000000e+00> : vector<128xf32>
      %14 = vector.multi_reduction <add>, %12, %cst_14 [0] : vector<256x128xf32> to vector<128xf32>
      %15 = vector.shape_cast %14 : vector<128xf32> to vector<1x128xf32>
      %c0_15 = arith.constant 0 : index
      %c0_16 = arith.constant 0 : index
      %c0_17 = arith.constant 0 : index
      %16 = vector.load %arg6[%c0_15, %c0_16, %c0_17] : memref<1x2x128xf32, #tpu.memory_space<vmem>>, vector<1x1x128xf32>
      %17 = vector.shape_cast %16 : vector<1x1x128xf32> to vector<1x128xf32>
      %18 = vector.shape_cast %15 : vector<1x128xf32> to vector<1x1x128xf32>
      tpu.vector_store %arg6[%c0_15, %c0_16, %c0_17], %18 {strides = array<i32>} : memref<1x2x128xf32, #tpu.memory_space<vmem>>, vector<1x1x128xf32>,
      %19 = arith.mulf %12, %12 : vector<256x128xf32>
      %cst_18 = arith.constant dense<0.000000e+00> : vector<128xf32>
      %20 = vector.multi_reduction <add>, %19, %cst_18 [0] : vector<256x128xf32> to vector<128xf32>
      %21 = vector.shape_cast %20 : vector<128xf32> to vector<1x128xf32>
      %c0_19 = arith.constant 0 : index
      %c1 = arith.constant 1 : index
      %c0_20 = arith.constant 0 : index
      %22 = vector.load %arg6[%c0_19, %c1, %c0_20] : memref<1x2x128xf32, #tpu.memory_space<vmem>>, vector<1x1x128xf32>
      %23 = vector.shape_cast %22 : vector<1x1x128xf32> to vector<1x128xf32>
      %24 = vector.shape_cast %21 : vector<1x128xf32> to vector<1x1x128xf32>
      tpu.vector_store %arg6[%c0_19, %c1, %c0_20], %24 {strides = array<i32>} : memref<1x2x128xf32, #tpu.memory_space<vmem>>, vector<1x1x128xf32>,
    } else {
    }
    return
  }
  func.func @transform_0(%arg0: i32, %arg1: i32, %arg2: i32) -> (i32, i32) {
    %c0_i32 = arith.constant 0 : i32
    return %arg0, %arg2 : i32, i32
  }
  func.func @transform_1(%arg0: i32, %arg1: i32, %arg2: i32) -> (i32, i32) {
    %c0_i32 = arith.constant 0 : i32
    return %arg2, %arg1 : i32, i32
  }
  func.func @transform_2(%arg0: i32, %arg1: i32, %arg2: i32) -> (i32, i32) {
    %c0_i32 = arith.constant 0 : i32
    return %arg0, %arg1 : i32, i32
  }
  func.func @transform_3(%arg0: i32, %arg1: i32, %arg2: i32) -> (i32, i32, i32) {
    %c0_i32 = arith.constant 0 : i32
    %c0_i32_0 = arith.constant 0 : i32
    return %arg0, %c0_i32, %arg1 : i32, i32, i32
  }
}

module attributes {stable_mosaic.version = 11 : i64} {
  func.func @bn_relu_kernel(%arg0: i32, %arg1: memref<256x128xf32, #tpu.memory_space<vmem>>, %arg2: memref<2x128xf32, #tpu.memory_space<vmem>>, %arg3: memref<256x128xbf16, #tpu.memory_space<vmem>>) attributes {dimension_semantics = [#tpu.dimension_semantics<parallel>], iteration_bounds = array<i64: 2>, scalar_prefetch = 0 : i64, scratch_operands = 0 : i64, tpu.core_type = #tpu.core_type<tc>, window_params = [{transform_indices = @transform_0, window_bounds = array<i64: 256, 128>}, {pipeline_mode = #tpu.pipeline_mode<synchronous>, transform_indices = @transform_1, window_bounds = array<i64: 2, 128>}, {transform_indices = @transform_2, window_bounds = array<i64: 256, 128>}]} {
    %c0 = arith.constant 0 : index
    %c0_0 = arith.constant 0 : index
    %0 = vector.load %arg1[%c0, %c0_0] : memref<256x128xf32, #tpu.memory_space<vmem>>, vector<256x128xf32>
    %c0_1 = arith.constant 0 : index
    %c0_2 = arith.constant 0 : index
    %1 = vector.load %arg2[%c0_1, %c0_2] : memref<2x128xf32, #tpu.memory_space<vmem>>, vector<1x128xf32>
    %c1 = arith.constant 1 : index
    %c0_3 = arith.constant 0 : index
    %2 = vector.load %arg2[%c1, %c0_3] : memref<2x128xf32, #tpu.memory_space<vmem>>, vector<1x128xf32>
    %3 = vector.broadcast %1 : vector<1x128xf32> to vector<256x128xf32>
    %4 = arith.mulf %0, %3 : vector<256x128xf32>
    %5 = vector.broadcast %2 : vector<1x128xf32> to vector<256x128xf32>
    %6 = arith.addf %4, %5 : vector<256x128xf32>
    %cst = arith.constant 0.000000e+00 : f32
    %7 = vector.broadcast %cst : f32 to vector<256x128xf32>
    %8 = arith.maximumf %6, %7 : vector<256x128xf32>
    %9 = arith.truncf %8 : vector<256x128xf32> to vector<256x128xbf16>
    %c0_4 = arith.constant 0 : index
    %c0_5 = arith.constant 0 : index
    %10 = vector.load %arg3[%c0_4, %c0_5] : memref<256x128xbf16, #tpu.memory_space<vmem>>, vector<256x128xbf16>
    tpu.vector_store %arg3[%c0_4, %c0_5], %9 {strides = array<i32>} : memref<256x128xbf16, #tpu.memory_space<vmem>>, vector<256x128xbf16>,
    return
  }
  func.func @transform_0(%arg0: i32) -> (i32, i32) {
    %c0_i32 = arith.constant 0 : i32
    %c0_i32_0 = arith.constant 0 : i32
    return %arg0, %c0_i32 : i32, i32
  }
  func.func @transform_1(%arg0: i32) -> (i32, i32) {
    %c0_i32 = arith.constant 0 : i32
    %c0_i32_0 = arith.constant 0 : i32
    %c0_i32_1 = arith.constant 0 : i32
    return %c0_i32, %c0_i32_0 : i32, i32
  }
  func.func @transform_2(%arg0: i32) -> (i32, i32) {
    %c0_i32 = arith.constant 0 : i32
    %c0_i32_0 = arith.constant 0 : i32
    return %arg0, %c0_i32 : i32, i32
  }
}

module attributes {stable_mosaic.version = 11 : i64} {
  func.func @matmul_stats_kernel(%arg0: i32, %arg1: i32, %arg2: i32, %arg3: memref<256x384xbf16, #tpu.memory_space<vmem>>, %arg4: memref<384x128xbf16, #tpu.memory_space<vmem>>, %arg5: memref<256x128xf32, #tpu.memory_space<vmem>>, %arg6: memref<1x2x128xf32, #tpu.memory_space<vmem>>, %arg7: memref<256x128xf32, #tpu.memory_space<vmem>>) attributes {dimension_semantics = [#tpu.dimension_semantics<parallel>, #tpu.dimension_semantics<parallel>, #tpu.dimension_semantics<arbitrary>], iteration_bounds = array<i64: 2, 1, 3>, scalar_prefetch = 0 : i64, scratch_operands = 1 : i64, tpu.core_type = #tpu.core_type<tc>, window_params = [{transform_indices = @transform_0, window_bounds = array<i64: 256, 384>}, {transform_indices = @transform_1, window_bounds = array<i64: 384, 128>}, {transform_indices = @transform_2, window_bounds = array<i64: 256, 128>}, {transform_indices = @transform_3, window_bounds = array<i64: 1, 2, 128>}]} {
    %c0_i32 = arith.constant 0 : i32
    %0 = arith.cmpi eq, %arg2, %c0_i32 : i32
    %1 = arith.extui %0 : i1 to i32
    %c0_i32_0 = arith.constant 0 : i32
    %2 = arith.cmpi ne, %1, %c0_i32_0 : i32
    scf.if %2 {
      %cst_9 = arith.constant 0.000000e+00 : f32
      %12 = vector.broadcast %cst_9 : f32 to vector<256x128xf32>
      %c0_10 = arith.constant 0 : index
      %c0_11 = arith.constant 0 : index
      %13 = vector.load %arg7[%c0_10, %c0_11] : memref<256x128xf32, #tpu.memory_space<vmem>>, vector<256x128xf32>
      tpu.vector_store %arg7[%c0_10, %c0_11], %12 {strides = array<i32>} : memref<256x128xf32, #tpu.memory_space<vmem>>, vector<256x128xf32>,
    } else {
    }
    %c0 = arith.constant 0 : index
    %c0_1 = arith.constant 0 : index
    %3 = vector.load %arg7[%c0, %c0_1] : memref<256x128xf32, #tpu.memory_space<vmem>>, vector<256x128xf32>
    %c0_2 = arith.constant 0 : index
    %c0_3 = arith.constant 0 : index
    %4 = vector.load %arg3[%c0_2, %c0_3] : memref<256x384xbf16, #tpu.memory_space<vmem>>, vector<256x384xbf16>
    %c0_4 = arith.constant 0 : index
    %c0_5 = arith.constant 0 : index
    %5 = vector.load %arg4[%c0_4, %c0_5] : memref<384x128xbf16, #tpu.memory_space<vmem>>, vector<384x128xbf16>
    %cst = arith.constant dense<0.000000e+00> : vector<256x128xf32>
    %6 = tpu.matmul %4, %5, %cst {dimension_numbers = #tpu.dot_dimension_numbers<[1], [0], [0], [1], [0, 0, 1, 1], [], []>} : vector<256x384xbf16>, vector<384x128xbf16>, vector<256x128xf32> -> vector<256x128xf32>
    %7 = arith.addf %3, %6 : vector<256x128xf32>
    %c0_6 = arith.constant 0 : index
    %c0_7 = arith.constant 0 : index
    %8 = vector.load %arg7[%c0_6, %c0_7] : memref<256x128xf32, #tpu.memory_space<vmem>>, vector<256x128xf32>
    tpu.vector_store %arg7[%c0_6, %c0_7], %7 {strides = array<i32>} : memref<256x128xf32, #tpu.memory_space<vmem>>, vector<256x128xf32>,
    %c2_i32 = arith.constant 2 : i32
    %9 = arith.cmpi eq, %arg2, %c2_i32 : i32
    %10 = arith.extui %9 : i1 to i32
    %c0_i32_8 = arith.constant 0 : i32
    %11 = arith.cmpi ne, %10, %c0_i32_8 : i32
    scf.if %11 {
      %c0_9 = arith.constant 0 : index
      %c0_10 = arith.constant 0 : index
      %12 = vector.load %arg7[%c0_9, %c0_10] : memref<256x128xf32, #tpu.memory_space<vmem>>, vector<256x128xf32>
      %c0_11 = arith.constant 0 : index
      %c0_12 = arith.constant 0 : index
      %13 = vector.load %arg5[%c0_11, %c0_12] : memref<256x128xf32, #tpu.memory_space<vmem>>, vector<256x128xf32>
      tpu.vector_store %arg5[%c0_11, %c0_12], %12 {strides = array<i32>} : memref<256x128xf32, #tpu.memory_space<vmem>>, vector<256x128xf32>,
      %cst_13 = arith.constant dense<0.000000e+00> : vector<128xf32>
      %14 = vector.multi_reduction <add>, %12, %cst_13 [0] : vector<256x128xf32> to vector<128xf32>
      %15 = vector.shape_cast %14 : vector<128xf32> to vector<1x128xf32>
      %c0_14 = arith.constant 0 : index
      %c0_15 = arith.constant 0 : index
      %c0_16 = arith.constant 0 : index
      %16 = vector.load %arg6[%c0_14, %c0_15, %c0_16] : memref<1x2x128xf32, #tpu.memory_space<vmem>>, vector<1x1x128xf32>
      %17 = vector.shape_cast %16 : vector<1x1x128xf32> to vector<1x128xf32>
      %18 = vector.shape_cast %15 : vector<1x128xf32> to vector<1x1x128xf32>
      tpu.vector_store %arg6[%c0_14, %c0_15, %c0_16], %18 {strides = array<i32>} : memref<1x2x128xf32, #tpu.memory_space<vmem>>, vector<1x1x128xf32>,
      %19 = arith.mulf %12, %12 : vector<256x128xf32>
      %cst_17 = arith.constant dense<0.000000e+00> : vector<128xf32>
      %20 = vector.multi_reduction <add>, %19, %cst_17 [0] : vector<256x128xf32> to vector<128xf32>
      %21 = vector.shape_cast %20 : vector<128xf32> to vector<1x128xf32>
      %c0_18 = arith.constant 0 : index
      %c1 = arith.constant 1 : index
      %c0_19 = arith.constant 0 : index
      %22 = vector.load %arg6[%c0_18, %c1, %c0_19] : memref<1x2x128xf32, #tpu.memory_space<vmem>>, vector<1x1x128xf32>
      %23 = vector.shape_cast %22 : vector<1x1x128xf32> to vector<1x128xf32>
      %24 = vector.shape_cast %21 : vector<1x128xf32> to vector<1x1x128xf32>
      tpu.vector_store %arg6[%c0_18, %c1, %c0_19], %24 {strides = array<i32>} : memref<1x2x128xf32, #tpu.memory_space<vmem>>, vector<1x1x128xf32>,
    } else {
    }
    return
  }
  func.func @transform_0(%arg0: i32, %arg1: i32, %arg2: i32) -> (i32, i32) {
    %c0_i32 = arith.constant 0 : i32
    return %arg0, %arg2 : i32, i32
  }
  func.func @transform_1(%arg0: i32, %arg1: i32, %arg2: i32) -> (i32, i32) {
    %c0_i32 = arith.constant 0 : i32
    return %arg2, %arg1 : i32, i32
  }
  func.func @transform_2(%arg0: i32, %arg1: i32, %arg2: i32) -> (i32, i32) {
    %c0_i32 = arith.constant 0 : i32
    return %arg0, %arg1 : i32, i32
  }
  func.func @transform_3(%arg0: i32, %arg1: i32, %arg2: i32) -> (i32, i32, i32) {
    %c0_i32 = arith.constant 0 : i32
    %c0_i32_0 = arith.constant 0 : i32
    return %arg0, %c0_i32, %arg1 : i32, i32, i32
  }
}

module attributes {stable_mosaic.version = 11 : i64} {
  func.func @bn_relu_kernel(%arg0: i32, %arg1: memref<256x128xf32, #tpu.memory_space<vmem>>, %arg2: memref<2x128xf32, #tpu.memory_space<vmem>>, %arg3: memref<256x128xf32, #tpu.memory_space<vmem>>) attributes {dimension_semantics = [#tpu.dimension_semantics<parallel>], iteration_bounds = array<i64: 2>, scalar_prefetch = 0 : i64, scratch_operands = 0 : i64, tpu.core_type = #tpu.core_type<tc>, window_params = [{transform_indices = @transform_0, window_bounds = array<i64: 256, 128>}, {pipeline_mode = #tpu.pipeline_mode<synchronous>, transform_indices = @transform_1, window_bounds = array<i64: 2, 128>}, {transform_indices = @transform_2, window_bounds = array<i64: 256, 128>}]} {
    %c0 = arith.constant 0 : index
    %c0_0 = arith.constant 0 : index
    %0 = vector.load %arg1[%c0, %c0_0] : memref<256x128xf32, #tpu.memory_space<vmem>>, vector<256x128xf32>
    %c0_1 = arith.constant 0 : index
    %c0_2 = arith.constant 0 : index
    %1 = vector.load %arg2[%c0_1, %c0_2] : memref<2x128xf32, #tpu.memory_space<vmem>>, vector<1x128xf32>
    %c1 = arith.constant 1 : index
    %c0_3 = arith.constant 0 : index
    %2 = vector.load %arg2[%c1, %c0_3] : memref<2x128xf32, #tpu.memory_space<vmem>>, vector<1x128xf32>
    %3 = vector.broadcast %1 : vector<1x128xf32> to vector<256x128xf32>
    %4 = arith.mulf %0, %3 : vector<256x128xf32>
    %5 = vector.broadcast %2 : vector<1x128xf32> to vector<256x128xf32>
    %6 = arith.addf %4, %5 : vector<256x128xf32>
    %cst = arith.constant 0.000000e+00 : f32
    %7 = vector.broadcast %cst : f32 to vector<256x128xf32>
    %8 = arith.maximumf %6, %7 : vector<256x128xf32>
    %c0_4 = arith.constant 0 : index
    %c0_5 = arith.constant 0 : index
    %9 = vector.load %arg3[%c0_4, %c0_5] : memref<256x128xf32, #tpu.memory_space<vmem>>, vector<256x128xf32>
    tpu.vector_store %arg3[%c0_4, %c0_5], %8 {strides = array<i32>} : memref<256x128xf32, #tpu.memory_space<vmem>>, vector<256x128xf32>,
    return
  }
  func.func @transform_0(%arg0: i32) -> (i32, i32) {
    %c0_i32 = arith.constant 0 : i32
    %c0_i32_0 = arith.constant 0 : i32
    return %arg0, %c0_i32 : i32, i32
  }
  func.func @transform_1(%arg0: i32) -> (i32, i32) {
    %c0_i32 = arith.constant 0 : i32
    %c0_i32_0 = arith.constant 0 : i32
    %c0_i32_1 = arith.constant 0 : i32
    return %c0_i32, %c0_i32_0 : i32, i32
  }
  func.func @transform_2(%arg0: i32) -> (i32, i32) {
    %c0_i32 = arith.constant 0 : i32
    %c0_i32_0 = arith.constant 0 : i32
    return %arg0, %c0_i32 : i32, i32
  }
}

</mosaic_0001>

<llo_original>
// kernel: up_forward.5
$region0: #{up_forward.5}
  #allocation0 [shape = 'u32[]', space=smem, size = 0x4, offset = 0x4, fixed_abs, tag = 'smem constant byte address 0x4 - core index']
  #allocation1 [shape = 'u32[72,128]{1,0:T(1,128)}', space=vmem, size = 0x9000, scoped, tag = 'internal scratch']
  %s0 = inlined_call_operand.vmem [shape: f32[512,128], index: 0, kind: input, shape index: {}]
  %s1 = inlined_call_operand.vmem [shape: f32[2,128], index: 1, kind: input, shape index: {}]
  %s2 = inlined_call_operand.vmem [shape: bf16[512,128], index: 2, kind: output, shape index: {}]
  %s3 = sld [smem:[#allocation0]]
  $region41: #{up_forward.5} parent=0
    _
  %s5 = ssub.s32 1, %s3
  %s6 = scalar_select 0, %s5, %s3
  loop: start=0, step=1, limit=4
  $region2: #{up_forward.5} parent=0 // loop_pre_header
    _
  $region3: #{up_forward.5} parent=0 // loop_header
    %s8 = sphi 0, %s12
    %p9 = scmp.ge.s32.totalorder %s8, 4
    %s18 = sphi 0, %s20
    %s21 = sphi 0, %s18
    %s22 = sphi 0, %s21
    %s38 = sphi 0, %s22
    %s42 = sphi 0, %s42
    %s44 = sphi 0, %s42
    %s45 = sphi 0, %s44
    %s59 = sphi 0, %s45
    %s65 = sphi 0, %s67
    %s68 = sphi 0, %s65
    %s69 = sphi 0, %s68
    %s85 = sphi 0, %s69
  $region4: #{up_forward.5} parent=0 // loop_header_branch
    %11 = sbr.rel (%p9) target = $region8
  $region5: #{up_forward.5} parent=0 // loop_body
    %s13 = ssub.s32 %s8, 1
    %s14 = ssub.s32 %s8, 2
    %s15 = sadd.s32 %s8, 1
    %s16 = ssub.s32 %s8, %s15
    %p17 = scmp.eq.s32.totalorder %s16, 0
    %s19 = sadd.s32 %s18, 1
    %s20 = scalar_select %p17, %s18, %s19
    %p23 = pneg %p17
    %p24 = scmp.eq.s32.totalorder %s8, 1
    %p25 = por %p23, %p24
    %p26 = scmp.ne.s32.totalorder %s18, %s21
    %p27 = scmp.eq.s32.totalorder %s8, 0
    %p28 = por %p26, %p27
    %p29 = scmp.ne.s32.totalorder %s18, %s21
    %p30 = scmp.eq.s32.totalorder %s13, 1
    %p31 = por %p29, %p30
    %p32 = scmp.ne.s32.totalorder %s21, %s22
    %p33 = scmp.eq.s32.totalorder %s13, 0
    %p34 = por %p32, %p33
    %p35 = scmp.ne.s32.totalorder %s21, %s22
    %p36 = scmp.eq.s32.totalorder %s14, 1
    %p37 = por %p35, %p36
    %p39 = scmp.ne.s32.totalorder %s22, %s38
    %p40 = scmp.eq.s32.totalorder %s14, 0
    %p41 = por %p39, %p40
    %s43 = sadd.s32 %s42, 1
    %p46 = scmp.eq.s32.totalorder %s8, 1
    %p47 = scmp.ne.s32.totalorder %s42, %s44
    %p48 = scmp.eq.s32.totalorder %s8, 0
    %p49 = por %p47, %p48
    %p50 = scmp.ne.s32.totalorder %s42, %s44
    %p51 = scmp.eq.s32.totalorder %s13, 1
    %p52 = por %p50, %p51
    %p53 = scmp.ne.s32.totalorder %s44, %s45
    %p54 = scmp.eq.s32.totalorder %s13, 0
    %p55 = por %p53, %p54
    %p56 = scmp.ne.s32.totalorder %s44, %s45
    %p57 = scmp.eq.s32.totalorder %s14, 1
    %p58 = por %p56, %p57
    %p60 = scmp.ne.s32.totalorder %s45, %s59
    %p61 = scmp.eq.s32.totalorder %s14, 0
    %p62 = por %p60, %p61
    %s63 = ssub.s32 %s8, %s15
    %p64 = scmp.eq.s32.totalorder %s63, 0
    %s66 = sadd.s32 %s65, 1
    %s67 = scalar_select %p64, %s65, %s66
    %p70 = pneg %p64
    %p71 = scmp.eq.s32.totalorder %s8, 1
    %p72 = por %p70, %p71
    %p73 = scmp.ne.s32.totalorder %s65, %s68
    %p74 = scmp.eq.s32.totalorder %s8, 0
    %p75 = por %p73, %p74
    %p76 = scmp.ne.s32.totalorder %s65, %s68
    %p77 = scmp.eq.s32.totalorder %s13, 1
    %p78 = por %p76, %p77
    %p79 = scmp.ne.s32.totalorder %s68, %s69
    %p80 = scmp.eq.s32.totalorder %s13, 0
    %p81 = por %p79, %p80
    %p82 = scmp.ne.s32.totalorder %s68, %s69
    %p83 = scmp.eq.s32.totalorder %s14, 1
    %p84 = por %p82, %p83
    %p86 = scmp.ne.s32.totalorder %s69, %s85
    %p87 = scmp.eq.s32.totalorder %s14, 0
    %p88 = por %p86, %p87
    %p89 = scmp.le.s32.totalorder 1, %s8
    %p90 = scmp.lt.s32.totalorder %s8, 3
    %p91 = pnand %p89, %p90
    %p92 = pneg %p91
    // Predicated region
    $region9: #{up_forward.5} parent=5 // pred_check
      _
    $region10: #{up_forward.5} parent=5 // pred_check_branch
      %94 = sbr.rel (%p91) target = $region12
    $region11: #{up_forward.5} parent=5 // pred_region
      %s95 = ssub.s32 %s8, 1
      // Predicated region
      $region13: #{up_forward.5} parent=11 // pred_check
        %p96 = pneg %p55
      $region14: #{up_forward.5} parent=11 // pred_check_branch
        %98 = sbr.rel (%p96) target = $region16
      $region15: #{up_forward.5} parent=11 // pred_region
        _
      $region16: #{up_forward.5} parent=11 // pred_fallthru
        _
    $region12: #{up_forward.5} parent=5 // pred_fallthru
      _
    %p99 = scmp.lt.s32.totalorder %s8, 2
    // Predicated region
    $region17: #{up_forward.5} parent=5 // pred_check
      %p100 = pneg %p99
    $region18: #{up_forward.5} parent=5 // pred_check_branch
      %102 = sbr.rel (%p100) target = $region20
    $region19: #{up_forward.5} parent=5 // pred_region
      // Predicated region
      $region21: #{up_forward.5} parent=19 // pred_check
        %p103 = pneg %p28
      $region22: #{up_forward.5} parent=19 // pred_check_branch
        %105 = sbr.rel (%p103) target = $region24
      $region23: #{up_forward.5} parent=19 // pred_region
        %s106 = smul.u32 32, %s8
        %p107 = scmp.lt.s32.totalorder %s106, 63
        %s108 = scalar_select %p107, %s106, 63
        %s109 = smul.addr %s108, 8
        %s110 = scalar_lea.vmem %s0, %s109
        %s111 = smul.u32 32, %s8
      $region24: #{up_forward.5} parent=19 // pred_fallthru
        _
    $region20: #{up_forward.5} parent=5 // pred_fallthru
      _
    %p112 = scmp.le.s32.totalorder 1, %s8
    %p113 = scmp.lt.s32.totalorder %s8, 3
    %p114 = pnand %p112, %p113
    %p115 = pneg %p114
    // Predicated region
    $region25: #{up_forward.5} parent=5 // pred_check
      _
    $region26: #{up_forward.5} parent=5 // pred_check_branch
      %117 = sbr.rel (%p114) target = $region28
    $region27: #{up_forward.5} parent=5 // pred_region
      %s118 = ssub.s32 %s8, 1
      %s119 = smul.u32 32, %s13
      %p120 = scmp.lt.s32.totalorder %s119, 63
      %s121 = scalar_select %p120, %s119, 63
      %s122 = smul.addr %s121, 8
      %s123 = scalar_lea.vmem %s0, %s122
      %p124 = pneg %p34
      %p125 = pneg %p31
      %p126 = pneg %p55
      %p127 = pneg %p52
      %p128 = pneg %p81
      %p129 = pneg %p78
      %s130 = smul.u32 32, %s13
      %p131 = scmp.lt.s32.totalorder %s130, 63
      %s132 = scalar_select %p131, %s130, 63
      %s133 = smul.addr %s132, 4
      %s134 = scalar_lea.vmem %s2, %s133
      %s135 = smul.u32 32, %s13
      %p136 = scmp.lt.s32.totalorder %s135, 63
      %s137 = scalar_select %p136, %s135, 63
      %s138 = smul.addr %s137, 8
      %s139 = scalar_lea.vmem %s0, %s138
      %s140 = smul.u32 32, %s13
      %s141 = smul.u32 32, %s13
      %p142 = scmp.lt.s32.totalorder %s141, 63
      %s143 = scalar_select %p142, %s141, 63
      %s144 = smul.addr %s143, 4
      %s145 = scalar_lea.vmem %s2, %s144
      %s146 = smul.u32 32, %s13
      %v147 = vld [vmem:[%s139] sm:$0xff]
      %v148 = vld [vmem:[%s139 + $0x8] sm:$0xff]
      %v149 = vld [vmem:[%s139 + $0x10] sm:$0xff]
      %v150 = vld [vmem:[%s139 + $0x18] sm:$0xff]
      %v151 = vld [vmem:[%s139 + $0x20] sm:$0xff]
      %v152 = vld [vmem:[%s139 + $0x28] sm:$0xff]
      %v153 = vld [vmem:[%s139 + $0x30] sm:$0xff]
      %v154 = vld [vmem:[%s139 + $0x38] sm:$0xff]
      %v155 = vld [vmem:[%s139 + $0x40] sm:$0xff]
      %v156 = vld [vmem:[%s139 + $0x48] sm:$0xff]
      %v157 = vld [vmem:[%s139 + $0x50] sm:$0xff]
      %v158 = vld [vmem:[%s139 + $0x58] sm:$0xff]
      %v159 = vld [vmem:[%s139 + $0x60] sm:$0xff]
      %v160 = vld [vmem:[%s139 + $0x68] sm:$0xff]
      %v161 = vld [vmem:[%s139 + $0x70] sm:$0xff]
      %v162 = vld [vmem:[%s139 + $0x78] sm:$0xff]
      %v163 = vld [vmem:[%s139 + $0x80] sm:$0xff]
      %v164 = vld [vmem:[%s139 + $0x88] sm:$0xff]
      %v165 = vld [vmem:[%s139 + $0x90] sm:$0xff]
      %v166 = vld [vmem:[%s139 + $0x98] sm:$0xff]
      %v167 = vld [vmem:[%s139 + $0xa0] sm:$0xff]
      %v168 = vld [vmem:[%s139 + $0xa8] sm:$0xff]
      %v169 = vld [vmem:[%s139 + $0xb0] sm:$0xff]
      %v170 = vld [vmem:[%s139 + $0xb8] sm:$0xff]
      %v171 = vld [vmem:[%s139 + $0xc0] sm:$0xff]
      %v172 = vld [vmem:[%s139 + $0xc8] sm:$0xff]
      %v173 = vld [vmem:[%s139 + $0xd0] sm:$0xff]
      %v174 = vld [vmem:[%s139 + $0xd8] sm:$0xff]
      %v175 = vld [vmem:[%s139 + $0xe0] sm:$0xff]
      %v176 = vld [vmem:[%s139 + $0xe8] sm:$0xff]
      %v177 = vld [vmem:[%s139 + $0xf0] sm:$0xff]
      %v178 = vld [vmem:[%s139 + $0xf8] sm:$0xff]
      %v179 = vld [vmem:[%s1] sm:$0x1]
      %v180 = vld [vmem:[%s1 + $0x1] sm:$0x1]
      %v181 = vperm.slane %v179, 0
      %v182 = vmul.f32 %v147, %v181
      %v183 = vmul.f32 %v148, %v181
      %v184 = vmul.f32 %v149, %v181
      %v185 = vmul.f32 %v150, %v181
      %v186 = vmul.f32 %v151, %v181
      %v187 = vmul.f32 %v152, %v181
      %v188 = vmul.f32 %v153, %v181
      %v189 = vmul.f32 %v154, %v181
      %v190 = vmul.f32 %v155, %v181
      %v191 = vmul.f32 %v156, %v181
      %v192 = vmul.f32 %v157, %v181
      %v193 = vmul.f32 %v158, %v181
      %v194 = vmul.f32 %v159, %v181
      %v195 = vmul.f32 %v160, %v181
      %v196 = vmul.f32 %v161, %v181
      %v197 = vmul.f32 %v162, %v181
      %v198 = vmul.f32 %v163, %v181
      %v199 = vmul.f32 %v164, %v181
      %v200 = vmul.f32 %v165, %v181
      %v201 = vmul.f32 %v166, %v181
      %v202 = vmul.f32 %v167, %v181
      %v203 = vmul.f32 %v168, %v181
      %v204 = vmul.f32 %v169, %v181
      %v205 = vmul.f32 %v170, %v181
      %v206 = vmul.f32 %v171, %v181
      %v207 = vmul.f32 %v172, %v181
      %v208 = vmul.f32 %v173, %v181
      %v209 = vmul.f32 %v174, %v181
      %v210 = vmul.f32 %v175, %v181
      %v211 = vmul.f32 %v176, %v181
      %v212 = vmul.f32 %v177, %v181
      %v213 = vmul.f32 %v178, %v181
      %v214 = vperm.slane %v180, 0
      %v215 = vadd.f32 %v182, %v214
      %v216 = vadd.f32 %v183, %v214
      %v217 = vadd.f32 %v184, %v214
      %v218 = vadd.f32 %v185, %v214
      %v219 = vadd.f32 %v186, %v214
      %v220 = vadd.f32 %v187, %v214
      %v221 = vadd.f32 %v188, %v214
      %v222 = vadd.f32 %v189, %v214
      %v223 = vadd.f32 %v190, %v214
      %v224 = vadd.f32 %v191, %v214
      %v225 = vadd.f32 %v192, %v214
      %v226 = vadd.f32 %v193, %v214
      %v227 = vadd.f32 %v194, %v214
      %v228 = vadd.f32 %v195, %v214
      %v229 = vadd.f32 %v196, %v214
      %v230 = vadd.f32 %v197, %v214
      %v231 = vadd.f32 %v198, %v214
      %v232 = vadd.f32 %v199, %v214
      %v233 = vadd.f32 %v200, %v214
      %v234 = vadd.f32 %v201, %v214
      %v235 = vadd.f32 %v202, %v214
      %v236 = vadd.f32 %v203, %v214
      %v237 = vadd.f32 %v204, %v214
      %v238 = vadd.f32 %v205, %v214
      %v239 = vadd.f32 %v206, %v214
      %v240 = vadd.f32 %v207, %v214
      %v241 = vadd.f32 %v208, %v214
      %v242 = vadd.f32 %v209, %v214
      %v243 = vadd.f32 %v210, %v214
      %v244 = vadd.f32 %v211, %v214
      %v245 = vadd.f32 %v212, %v214
      %v246 = vadd.f32 %v213, %v214
      %v247 = vmax.f32 %v215, 0.0
      %v248 = vmax.f32 %v216, 0.0
      %v249 = vmax.f32 %v217, 0.0
      %v250 = vmax.f32 %v218, 0.0
      %v251 = vmax.f32 %v219, 0.0
      %v252 = vmax.f32 %v220, 0.0
      %v253 = vmax.f32 %v221, 0.0
      %v254 = vmax.f32 %v222, 0.0
      %v255 = vmax.f32 %v223, 0.0
      %v256 = vmax.f32 %v224, 0.0
      %v257 = vmax.f32 %v225, 0.0
      %v258 = vmax.f32 %v226, 0.0
      %v259 = vmax.f32 %v227, 0.0
      %v260 = vmax.f32 %v228, 0.0
      %v261 = vmax.f32 %v229, 0.0
      %v262 = vmax.f32 %v230, 0.0
      %v263 = vmax.f32 %v231, 0.0
      %v264 = vmax.f32 %v232, 0.0
      %v265 = vmax.f32 %v233, 0.0
      %v266 = vmax.f32 %v234, 0.0
      %v267 = vmax.f32 %v235, 0.0
      %v268 = vmax.f32 %v236, 0.0
      %v269 = vmax.f32 %v237, 0.0
      %v270 = vmax.f32 %v238, 0.0
      %v271 = vmax.f32 %v239, 0.0
      %v272 = vmax.f32 %v240, 0.0
      %v273 = vmax.f32 %v241, 0.0
      %v274 = vmax.f32 %v242, 0.0
      %v275 = vmax.f32 %v243, 0.0
      %v276 = vmax.f32 %v244, 0.0
      %v277 = vmax.f32 %v245, 0.0
      %v278 = vmax.f32 %v246, 0.0
      %v279 = vpack.c.bf16 %v247, %v247
      %v280 = vpack.c.bf16 %v248, %v248
      %v281 = vpack.c.bf16 %v249, %v249
      %v282 = vpack.c.bf16 %v250, %v250
      %v283 = vpack.c.bf16 %v251, %v251
      %v284 = vpack.c.bf16 %v252, %v252
      %v285 = vpack.c.bf16 %v253, %v253
      %v286 = vpack.c.bf16 %v254, %v254
      %v287 = vpack.c.bf16 %v255, %v255
      %v288 = vpack.c.bf16 %v256, %v256
      %v289 = vpack.c.bf16 %v257, %v257
      %v290 = vpack.c.bf16 %v258, %v258
      %v291 = vpack.c.bf16 %v259, %v259
      %v292 = vpack.c.bf16 %v260, %v260
      %v293 = vpack.c.bf16 %v261, %v261
      %v294 = vpack.c.bf16 %v262, %v262
      %v295 = vpack.c.bf16 %v263, %v263
      %v296 = vpack.c.bf16 %v264, %v264
      %v297 = vpack.c.bf16 %v265, %v265
      %v298 = vpack.c.bf16 %v266, %v266
      %v299 = vpack.c.bf16 %v267, %v267
      %v300 = vpack.c.bf16 %v268, %v268
      %v301 = vpack.c.bf16 %v269, %v269
      %v302 = vpack.c.bf16 %v270, %v270
      %v303 = vpack.c.bf16 %v271, %v271
      %v304 = vpack.c.bf16 %v272, %v272
      %v305 = vpack.c.bf16 %v273, %v273
      %v306 = vpack.c.bf16 %v274, %v274
      %v307 = vpack.c.bf16 %v275, %v275
      %v308 = vpack.c.bf16 %v276, %v276
      %v309 = vpack.c.bf16 %v277, %v277
      %v310 = vpack.c.bf16 %v278, %v278
      %311 = vst [vmem:[%s145] sm:$0xf] %v279
      %312 = vst [vmem:[%s145 + $0x4] sm:$0xf] %v280
      %313 = vst [vmem:[%s145 + $0x8] sm:$0xf] %v281
      %314 = vst [vmem:[%s145 + $0xc] sm:$0xf] %v282
      %315 = vst [vmem:[%s145 + $0x10] sm:$0xf] %v283
      %316 = vst [vmem:[%s145 + $0x14] sm:$0xf] %v284
      %317 = vst [vmem:[%s145 + $0x18] sm:$0xf] %v285
      %318 = vst [vmem:[%s145 + $0x1c] sm:$0xf] %v286
      %319 = vst [vmem:[%s145 + $0x20] sm:$0xf] %v287
      %320 = vst [vmem:[%s145 + $0x24] sm:$0xf] %v288
      %321 = vst [vmem:[%s145 + $0x28] sm:$0xf] %v289
      %322 = vst [vmem:[%s145 + $0x2c] sm:$0xf] %v290
      %323 = vst [vmem:[%s145 + $0x30] sm:$0xf] %v291
      %324 = vst [vmem:[%s145 + $0x34] sm:$0xf] %v292
      %325 = vst [vmem:[%s145 + $0x38] sm:$0xf] %v293
      %326 = vst [vmem:[%s145 + $0x3c] sm:$0xf] %v294
      %327 = vst [vmem:[%s145 + $0x40] sm:$0xf] %v295
      %328 = vst [vmem:[%s145 + $0x44] sm:$0xf] %v296
      %329 = vst [vmem:[%s145 + $0x48] sm:$0xf] %v297
      %330 = vst [vmem:[%s145 + $0x4c] sm:$0xf] %v298
      %331 = vst [vmem:[%s145 + $0x50] sm:$0xf] %v299
      %332 = vst [vmem:[%s145 + $0x54] sm:$0xf] %v300
      %333 = vst [vmem:[%s145 + $0x58] sm:$0xf] %v301
      %334 = vst [vmem:[%s145 + $0x5c] sm:$0xf] %v302
      %335 = vst [vmem:[%s145 + $0x60] sm:$0xf] %v303
      %336 = vst [vmem:[%s145 + $0x64] sm:$0xf] %v304
      %337 = vst [vmem:[%s145 + $0x68] sm:$0xf] %v305
      %338 = vst [vmem:[%s145 + $0x6c] sm:$0xf] %v306
      %339 = vst [vmem:[%s145 + $0x70] sm:$0xf] %v307
      %340 = vst [vmem:[%s145 + $0x74] sm:$0xf] %v308
      %341 = vst [vmem:[%s145 + $0x78] sm:$0xf] %v309
      %342 = vst [vmem:[%s145 + $0x7c] sm:$0xf] %v310
      %s343 = smul.u32 32, %s13
      %p344 = scmp.lt.s32.totalorder %s343, 63
      %s345 = scalar_select %p344, %s343, 63
      %s346 = smul.addr %s345, 4
      %s347 = scalar_lea.vmem %s2, %s346
      // Predicated region
      $region29: #{up_forward.5} parent=27 // pred_check
        %p348 = pneg %p78
      $region30: #{up_forward.5} parent=27 // pred_check_branch
        %350 = sbr.rel (%p348) target = $region32
      $region31: #{up_forward.5} parent=27 // pred_region
        %s351 = smul.u32 32, %s13
      $region32: #{up_forward.5} parent=27 // pred_fallthru
        _
    $region28: #{up_forward.5} parent=5 // pred_fallthru
      _
    %p352 = scmp.le.s32.totalorder 2, %s8
    // Predicated region
    $region33: #{up_forward.5} parent=5 // pred_check
      %p353 = pneg %p352
    $region34: #{up_forward.5} parent=5 // pred_check_branch
      %355 = sbr.rel (%p353) target = $region36
    $region35: #{up_forward.5} parent=5 // pred_region
      %s356 = ssub.s32 %s8, 2
      // Predicated region
      $region37: #{up_forward.5} parent=35 // pred_check
        %p357 = pneg %p84
      $region38: #{up_forward.5} parent=35 // pred_check_branch
        %359 = sbr.rel (%p357) target = $region40
      $region39: #{up_forward.5} parent=35 // pred_region
        %s360 = smul.u32 32, %s14
        %p361 = scmp.lt.s32.totalorder %s360, 63
        %s362 = scalar_select %p361, %s360, 63
        %s363 = smul.addr %s362, 4
        %s364 = scalar_lea.vmem %s2, %s363
      $region40: #{up_forward.5} parent=35 // pred_fallthru
        _
    $region36: #{up_forward.5} parent=5 // pred_fallthru
      _
  $region6: #{up_forward.5} parent=0 // loop_footer
    %s12 = sadd.s32 1, %s8
  $region7: #{up_forward.5} parent=0 // loop_footer_branch
    %7 = sbr.rel target = $region3
  $region8: #{up_forward.5} parent=0 // loop_exit
    _

// kernel: up_forward.4
$region0: #{up_forward.4}
  #allocation0 [shape = 'u32[]', space=smem, size = 0x4, offset = 0x4, fixed_abs, tag = 'smem constant byte address 0x4 - core index']
  #allocation1 [shape = 'u32[72,128]{1,0:T(1,128)}', space=vmem, size = 0x9000, scoped, tag = 'internal scratch']
  #allocation2 [shape = 'f32[256,128]{1,0:T(8,128)}', space=vmem, size = 0x20000, scoped, tag = 'scratch operand']
  %s0 = inlined_call_operand.vmem [shape: bf16[512,128], index: 0, kind: input, shape index: {}]
  %s1 = inlined_call_operand.vmem [shape: bf16[128,128], index: 1, kind: input, shape index: {}]
  %s2 = inlined_call_operand.vmem [shape: f32[512,128], index: 2, kind: output, shape index: {0}]
  %s3 = inlined_call_operand.vmem [shape: f32[2,2,128], index: 3, kind: output, shape index: {1}]
  %4 = xla_tuple %s2, %s3
  %s5 = sld [smem:[#allocation0]]
  $region57: #{up_forward.4} parent=0
    _
  %s7 = ssub.s32 1, %s5
  %s8 = scalar_select 0, %s7, %s5
  loop: start=0, step=1, limit=4
  $region2: #{up_forward.4} parent=0 // loop_pre_header
    _
  $region3: #{up_forward.4} parent=0 // loop_header
    %s10 = sphi 0, %s14
    %p11 = scmp.ge.s32.totalorder %s10, 4
    %s17 = sphi 0, %s36
    %s18 = sphi 0, %s32
    %s19 = sphi 0, %s28
    %s20 = sphi 0, %s17
    %s21 = sphi 0, %s18
    %s22 = sphi 0, %s19
    %s23 = sphi 0, %s20
    %s24 = sphi 0, %s21
    %s25 = sphi 0, %s22
    %s41 = sphi 0, %s43
    %s44 = sphi 0, %s41
    %s45 = sphi 0, %s44
    %s61 = sphi 0, %s45
    %s69 = sphi 0, %s71
    %s72 = sphi 0, %s69
    %s73 = sphi 0, %s72
    %s89 = sphi 0, %s73
    %s97 = sphi 0, %s99
    %s100 = sphi 0, %s97
    %s101 = sphi 0, %s100
    %s117 = sphi 0, %s101
    %s125 = sphi 0, %s127
    %s128 = sphi 0, %s125
    %s129 = sphi 0, %s128
    %s145 = sphi 0, %s129
  $region4: #{up_forward.4} parent=0 // loop_header_branch
    %13 = sbr.rel (%p11) target = $region8
  $region5: #{up_forward.4} parent=0 // loop_body
    %s15 = ssub.s32 %s10, 1
    %s16 = ssub.s32 %s10, 2
    %s26 = sadd.s32 1, %s19
    %p27 = scmp.ge.s32.totalorder %s26, 1
    %s28 = scalar_select %p27, 0, %s26
    %s29 = sadd.s32 1, %s18
    %s30 = scalar_select %p27, %s29, %s18
    %p31 = scmp.ge.s32.totalorder %s30, 1
    %s32 = scalar_select %p31, 0, %s30
    %s33 = sadd.s32 1, %s17
    %s34 = scalar_select %p31, %s33, %s17
    %p35 = scmp.ge.s32.totalorder %s34, 2
    %s36 = scalar_select %p35, 0, %s34
    %s37 = ssub.s32 %s17, %s36
    %s38 = ssub.s32 %s19, %s28
    %s39 = sor.u32 %s37, %s38
    %p40 = scmp.eq.s32.totalorder %s39, 0
    %s42 = sadd.s32 %s41, 1
    %s43 = scalar_select %p40, %s41, %s42
    %p46 = pneg %p40
    %p47 = scmp.eq.s32.totalorder %s10, 1
    %p48 = por %p46, %p47
    %p49 = scmp.ne.s32.totalorder %s41, %s44
    %p50 = scmp.eq.s32.totalorder %s10, 0
    %p51 = por %p49, %p50
    %p52 = scmp.ne.s32.totalorder %s41, %s44
    %p53 = scmp.eq.s32.totalorder %s15, 1
    %p54 = por %p52, %p53
    %p55 = scmp.ne.s32.totalorder %s44, %s45
    %p56 = scmp.eq.s32.totalorder %s15, 0
    %p57 = por %p55, %p56
    %p58 = scmp.ne.s32.totalorder %s44, %s45
    %p59 = scmp.eq.s32.totalorder %s16, 1
    %p60 = por %p58, %p59
    %p62 = scmp.ne.s32.totalorder %s45, %s61
    %p63 = scmp.eq.s32.totalorder %s16, 0
    %p64 = por %p62, %p63
    %s65 = ssub.s32 %s19, %s28
    %s66 = ssub.s32 %s18, %s32
    %s67 = sor.u32 %s65, %s66
    %p68 = scmp.eq.s32.totalorder %s67, 0
    %s70 = sadd.s32 %s69, 1
    %s71 = scalar_select %p68, %s69, %s70
    %p74 = pneg %p68
    %p75 = scmp.eq.s32.totalorder %s10, 1
    %p76 = por %p74, %p75
    %p77 = scmp.ne.s32.totalorder %s69, %s72
    %p78 = scmp.eq.s32.totalorder %s10, 0
    %p79 = por %p77, %p78
    %p80 = scmp.ne.s32.totalorder %s69, %s72
    %p81 = scmp.eq.s32.totalorder %s15, 1
    %p82 = por %p80, %p81
    %p83 = scmp.ne.s32.totalorder %s72, %s73
    %p84 = scmp.eq.s32.totalorder %s15, 0
    %p85 = por %p83, %p84
    %p86 = scmp.ne.s32.totalorder %s72, %s73
    %p87 = scmp.eq.s32.totalorder %s16, 1
    %p88 = por %p86, %p87
    %p90 = scmp.ne.s32.totalorder %s73, %s89
    %p91 = scmp.eq.s32.totalorder %s16, 0
    %p92 = por %p90, %p91
    %s93 = ssub.s32 %s17, %s36
    %s94 = ssub.s32 %s18, %s32
    %s95 = sor.u32 %s93, %s94
    %p96 = scmp.eq.s32.totalorder %s95, 0
    %s98 = sadd.s32 %s97, 1
    %s99 = scalar_select %p96, %s97, %s98
    %p102 = pneg %p96
    %p103 = scmp.eq.s32.totalorder %s10, 1
    %p104 = por %p102, %p103
    %p105 = scmp.ne.s32.totalorder %s97, %s100
    %p106 = scmp.eq.s32.totalorder %s10, 0
    %p107 = por %p105, %p106
    %p108 = scmp.ne.s32.totalorder %s97, %s100
    %p109 = scmp.eq.s32.totalorder %s15, 1
    %p110 = por %p108, %p109
    %p111 = scmp.ne.s32.totalorder %s100, %s101
    %p112 = scmp.eq.s32.totalorder %s15, 0
    %p113 = por %p111, %p112
    %p114 = scmp.ne.s32.totalorder %s100, %s101
    %p115 = scmp.eq.s32.totalorder %s16, 1
    %p116 = por %p114, %p115
    %p118 = scmp.ne.s32.totalorder %s101, %s117
    %p119 = scmp.eq.s32.totalorder %s16, 0
    %p120 = por %p118, %p119
    %s121 = ssub.s32 %s17, %s36
    %s122 = ssub.s32 %s18, %s32
    %s123 = sor.u32 %s121, %s122
    %p124 = scmp.eq.s32.totalorder %s123, 0
    %s126 = sadd.s32 %s125, 1
    %s127 = scalar_select %p124, %s125, %s126
    %p130 = pneg %p124
    %p131 = scmp.eq.s32.totalorder %s10, 1
    %p132 = por %p130, %p131
    %p133 = scmp.ne.s32.totalorder %s125, %s128
    %p134 = scmp.eq.s32.totalorder %s10, 0
    %p135 = por %p133, %p134
    %p136 = scmp.ne.s32.totalorder %s125, %s128
    %p137 = scmp.eq.s32.totalorder %s15, 1
    %p138 = por %p136, %p137
    %p139 = scmp.ne.s32.totalorder %s128, %s129
    %p140 = scmp.eq.s32.totalorder %s15, 0
    %p141 = por %p139, %p140
    %p142 = scmp.ne.s32.totalorder %s128, %s129
    %p143 = scmp.eq.s32.totalorder %s16, 1
    %p144 = por %p142, %p143
    %p146 = scmp.ne.s32.totalorder %s129, %s145
    %p147 = scmp.eq.s32.totalorder %s16, 0
    %p148 = por %p146, %p147
    %p149 = scmp.le.s32.totalorder 1, %s10
    %p150 = scmp.lt.s32.totalorder %s10, 3
    %p151 = pnand %p149, %p150
    %p152 = pneg %p151
    // Predicated region
    $region9: #{up_forward.4} parent=5 // pred_check
      _
    $region10: #{up_forward.4} parent=5 // pred_check_branch
      %154 = sbr.rel (%p151) target = $region12
    $region11: #{up_forward.4} parent=5 // pred_region
      %s155 = ssub.s32 %s10, 1
      // Predicated region
      $region13: #{up_forward.4} parent=11 // pred_check
        %p156 = pneg %p85
      $region14: #{up_forward.4} parent=11 // pred_check_branch
        %158 = sbr.rel (%p156) target = $region16
      $region15: #{up_forward.4} parent=11 // pred_region
        %s159 = smul.u32 16, %s22
        %p160 = scmp.lt.s32.totalorder %s159, 15
        %s161 = scalar_select %p160, %s159, 15
        %p162 = scmp.lt.s32.totalorder %s21, 0
        %s163 = scalar_select %p162, %s21, 0
        %s164 = sadd.s32 %s163, %s161
        %s165 = smul.addr %s164, 4
        %s166 = scalar_lea.vmem %s1, %s165
        %s167 = smul.u32 16, %s22
      $region16: #{up_forward.4} parent=11 // pred_fallthru
        _
    $region12: #{up_forward.4} parent=5 // pred_fallthru
      _
    %p168 = scmp.lt.s32.totalorder %s10, 2
    // Predicated region
    $region17: #{up_forward.4} parent=5 // pred_check
      %p169 = pneg %p168
    $region18: #{up_forward.4} parent=5 // pred_check_branch
      %171 = sbr.rel (%p169) target = $region20
    $region19: #{up_forward.4} parent=5 // pred_region
      // Predicated region
      $region21: #{up_forward.4} parent=19 // pred_check
        %p172 = pneg %p51
      $region22: #{up_forward.4} parent=19 // pred_check_branch
        %174 = sbr.rel (%p172) target = $region24
      $region23: #{up_forward.4} parent=19 // pred_region
        %s175 = smul.u32 32, %s17
        %p176 = scmp.lt.s32.totalorder %s175, 63
        %s177 = scalar_select %p176, %s175, 63
        %p178 = scmp.lt.s32.totalorder %s19, 0
        %s179 = scalar_select %p178, %s19, 0
        %s180 = sadd.s32 %s179, %s177
        %s181 = smul.addr %s180, 4
        %s182 = scalar_lea.vmem %s0, %s181
        %s183 = smul.u32 32, %s17
      $region24: #{up_forward.4} parent=19 // pred_fallthru
        _
    $region20: #{up_forward.4} parent=5 // pred_fallthru
      _
    %p184 = scmp.le.s32.totalorder 1, %s10
    %p185 = scmp.lt.s32.totalorder %s10, 3
    %p186 = pnand %p184, %p185
    %p187 = pneg %p186
    // Predicated region
    $region25: #{up_forward.4} parent=5 // pred_check
      _
    $region26: #{up_forward.4} parent=5 // pred_check_branch
      %189 = sbr.rel (%p186) target = $region28
    $region27: #{up_forward.4} parent=5 // pred_region
      %s190 = ssub.s32 %s10, 1
      %s191 = smul.u32 32, %s20
      %p192 = scmp.lt.s32.totalorder %s191, 63
      %s193 = scalar_select %p192, %s191, 63
      %p194 = scmp.lt.s32.totalorder %s22, 0
      %s195 = scalar_select %p194, %s22, 0
      %s196 = sadd.s32 %s195, %s193
      %s197 = smul.addr %s196, 4
      %s198 = scalar_lea.vmem %s0, %s197
      %p199 = pneg %p57
      %p200 = pneg %p54
      %s201 = smul.u32 16, %s22
      %p202 = scmp.lt.s32.totalorder %s201, 15
      %s203 = scalar_select %p202, %s201, 15
      %p204 = scmp.lt.s32.totalorder %s21, 0
      %s205 = scalar_select %p204, %s21, 0
      %s206 = sadd.s32 %s205, %s203
      %s207 = smul.addr %s206, 4
      %s208 = scalar_lea.vmem %s1, %s207
      %p209 = pneg %p85
      %p210 = pneg %p82
      %p211 = pneg %p113
      %p212 = pneg %p110
      %s213 = smul.u32 32, %s20
      %p214 = scmp.lt.s32.totalorder %s213, 63
      %s215 = scalar_select %p214, %s213, 63
      %p216 = scmp.lt.s32.totalorder %s21, 0
      %s217 = scalar_select %p216, %s21, 0
      %s218 = sadd.s32 %s217, %s215
      %s219 = smul.addr %s218, 8
      %s220 = scalar_lea.vmem %s2, %s219
      %p221 = pneg %p141
      %p222 = pneg %p138
      %p223 = scmp.lt.s32.totalorder %s20, 1
      %s224 = scalar_select %p223, %s20, 1
      %p225 = scmp.lt.s32.totalorder %s21, 0
      %s226 = scalar_select %p225, %s21, 0
      %s227 = sadd.s32 %s226, %s224
      %s228 = smul.addr %s227, 2
      %s229 = scalar_lea.vmem %s3, %s228
      %s230 = smul.u32 32, %s20
      %p231 = scmp.lt.s32.totalorder %s230, 63
      %s232 = scalar_select %p231, %s230, 63
      %p233 = scmp.lt.s32.totalorder %s22, 0
      %s234 = scalar_select %p233, %s22, 0
      %s235 = sadd.s32 %s234, %s232
      %s236 = smul.addr %s235, 4
      %s237 = scalar_lea.vmem %s0, %s236
      %s238 = smul.u32 32, %s20
      %s239 = smul.u32 16, %s22
      %p240 = scmp.lt.s32.totalorder %s239, 15
      %s241 = scalar_select %p240, %s239, 15
      %p242 = scmp.lt.s32.totalorder %s21, 0
      %s243 = scalar_select %p242, %s21, 0
      %s244 = sadd.s32 %s243, %s241
      %s245 = smul.addr %s244, 4
      %s246 = scalar_lea.vmem %s1, %s245
      %s247 = smul.u32 16, %s22
      %s248 = smul.u32 32, %s20
      %p249 = scmp.lt.s32.totalorder %s248, 63
      %s250 = scalar_select %p249, %s248, 63
      %p251 = scmp.lt.s32.totalorder %s21, 0
      %s252 = scalar_select %p251, %s21, 0
      %s253 = sadd.s32 %s252, %s250
      %s254 = smul.addr %s253, 8
      %s255 = scalar_lea.vmem %s2, %s254
      %s256 = smul.u32 32, %s20
      %p257 = scmp.lt.s32.totalorder %s20, 1
      %s258 = scalar_select %p257, %s20, 1
      %p259 = scmp.lt.s32.totalorder %s21, 0
      %s260 = scalar_select %p259, %s21, 0
      %s261 = sadd.s32 %s260, %s258
      %s262 = smul.addr %s261, 2
      %s263 = scalar_lea.vmem %s3, %s262
      %p264 = scmp.eq.s32.totalorder %s22, 0
      // Predicated region
      $region29: #{up_forward.4} parent=27 // pred_check
        %p265 = pneg %p264
      $region30: #{up_forward.4} parent=27 // pred_check_branch
        %267 = sbr.rel (%p265) target = $region32
      $region31: #{up_forward.4} parent=27 // pred_region
        %268 = vst [vmem:[#allocation2] sm:$0xff] 0.0
        %269 = vst [vmem:[#allocation2 + $0x8] sm:$0xff] 0.0
        %270 = vst [vmem:[#allocation2 + $0x10] sm:$0xff] 0.0
        %271 = vst [vmem:[#allocation2 + $0x18] sm:$0xff] 0.0
        %272 = vst [vmem:[#allocation2 + $0x20] sm:$0xff] 0.0
        %273 = vst [vmem:[#allocation2 + $0x28] sm:$0xff] 0.0
        %274 = vst [vmem:[#allocation2 + $0x30] sm:$0xff] 0.0
        %275 = vst [vmem:[#allocation2 + $0x38] sm:$0xff] 0.0
        %276 = vst [vmem:[#allocation2 + $0x40] sm:$0xff] 0.0
        %277 = vst [vmem:[#allocation2 + $0x48] sm:$0xff] 0.0
        %278 = vst [vmem:[#allocation2 + $0x50] sm:$0xff] 0.0
        %279 = vst [vmem:[#allocation2 + $0x58] sm:$0xff] 0.0
        %280 = vst [vmem:[#allocation2 + $0x60] sm:$0xff] 0.0
        %281 = vst [vmem:[#allocation2 + $0x68] sm:$0xff] 0.0
        %282 = vst [vmem:[#allocation2 + $0x70] sm:$0xff] 0.0
        %283 = vst [vmem:[#allocation2 + $0x78] sm:$0xff] 0.0
        %284 = vst [vmem:[#allocation2 + $0x80] sm:$0xff] 0.0
        %285 = vst [vmem:[#allocation2 + $0x88] sm:$0xff] 0.0
        %286 = vst [vmem:[#allocation2 + $0x90] sm:$0xff] 0.0
        %287 = vst [vmem:[#allocation2 + $0x98] sm:$0xff] 0.0
        %288 = vst [vmem:[#allocation2 + $0xa0] sm:$0xff] 0.0
        %289 = vst [vmem:[#allocation2 + $0xa8] sm:$0xff] 0.0
        %290 = vst [vmem:[#allocation2 + $0xb0] sm:$0xff] 0.0
        %291 = vst [vmem:[#allocation2 + $0xb8] sm:$0xff] 0.0
        %292 = vst [vmem:[#allocation2 + $0xc0] sm:$0xff] 0.0
        %293 = vst [vmem:[#allocation2 + $0xc8] sm:$0xff] 0.0
        %294 = vst [vmem:[#allocation2 + $0xd0] sm:$0xff] 0.0
        %295 = vst [vmem:[#allocation2 + $0xd8] sm:$0xff] 0.0
        %296 = vst [vmem:[#allocation2 + $0xe0] sm:$0xff] 0.0
        %297 = vst [vmem:[#allocation2 + $0xe8] sm:$0xff] 0.0
        %298 = vst [vmem:[#allocation2 + $0xf0] sm:$0xff] 0.0
        %299 = vst [vmem:[#allocation2 + $0xf8] sm:$0xff] 0.0
      $region32: #{up_forward.4} parent=27 // pred_fallthru
        _
      %v300 = vld [vmem:[#allocation2] sm:$0xff]
      %v301 = vld [vmem:[#allocation2 + $0x8] sm:$0xff]
      %v302 = vld [vmem:[#allocation2 + $0x10] sm:$0xff]
      %v303 = vld [vmem:[#allocation2 + $0x18] sm:$0xff]
      %v304 = vld [vmem:[#allocation2 + $0x20] sm:$0xff]
      %v305 = vld [vmem:[#allocation2 + $0x28] sm:$0xff]
      %v306 = vld [vmem:[#allocation2 + $0x30] sm:$0xff]
      %v307 = vld [vmem:[#allocation2 + $0x38] sm:$0xff]
      %v308 = vld [vmem:[#allocation2 + $0x40] sm:$0xff]
      %v309 = vld [vmem:[#allocation2 + $0x48] sm:$0xff]
      %v310 = vld [vmem:[#allocation2 + $0x50] sm:$0xff]
      %v311 = vld [vmem:[#allocation2 + $0x58] sm:$0xff]
      %v312 = vld [vmem:[#allocation2 + $0x60] sm:$0xff]
      %v313 = vld [vmem:[#allocation2 + $0x68] sm:$0xff]
      %v314 = vld [vmem:[#allocation2 + $0x70] sm:$0xff]
      %v315 = vld [vmem:[#allocation2 + $0x78] sm:$0xff]
      %v316 = vld [vmem:[#allocation2 + $0x80] sm:$0xff]
      %v317 = vld [vmem:[#allocation2 + $0x88] sm:$0xff]
      %v318 = vld [vmem:[#allocation2 + $0x90] sm:$0xff]
      %v319 = vld [vmem:[#allocation2 + $0x98] sm:$0xff]
      %v320 = vld [vmem:[#allocation2 + $0xa0] sm:$0xff]
      %v321 = vld [vmem:[#allocation2 + $0xa8] sm:$0xff]
      %v322 = vld [vmem:[#allocation2 + $0xb0] sm:$0xff]
      %v323 = vld [vmem:[#allocation2 + $0xb8] sm:$0xff]
      %v324 = vld [vmem:[#allocation2 + $0xc0] sm:$0xff]
      %v325 = vld [vmem:[#allocation2 + $0xc8] sm:$0xff]
      %v326 = vld [vmem:[#allocation2 + $0xd0] sm:$0xff]
      %v327 = vld [vmem:[#allocation2 + $0xd8] sm:$0xff]
      %v328 = vld [vmem:[#allocation2 + $0xe0] sm:$0xff]
      %v329 = vld [vmem:[#allocation2 + $0xe8] sm:$0xff]
      %v330 = vld [vmem:[#allocation2 + $0xf0] sm:$0xff]
      %v331 = vld [vmem:[#allocation2 + $0xf8] sm:$0xff]
      %v332 = vld [vmem:[%s237] sm:$0xf]
      %v333 = vld [vmem:[%s237 + $0x4] sm:$0xf]
      %v334 = vld [vmem:[%s237 + $0x8] sm:$0xf]
      %v335 = vld [vmem:[%s237 + $0xc] sm:$0xf]
      %v336 = vld [vmem:[%s237 + $0x10] sm:$0xf]
      %v337 = vld [vmem:[%s237 + $0x14] sm:$0xf]
      %v338 = vld [vmem:[%s237 + $0x18] sm:$0xf]
      %v339 = vld [vmem:[%s237 + $0x1c] sm:$0xf]
      %v340 = vld [vmem:[%s237 + $0x20] sm:$0xf]
      %v341 = vld [vmem:[%s237 + $0x24] sm:$0xf]
      %v342 = vld [vmem:[%s237 + $0x28] sm:$0xf]
      %v343 = vld [vmem:[%s237 + $0x2c] sm:$0xf]
      %v344 = vld [vmem:[%s237 + $0x30] sm:$0xf]
      %v345 = vld [vmem:[%s237 + $0x34] sm:$0xf]
      %v346 = vld [vmem:[%s237 + $0x38] sm:$0xf]
      %v347 = vld [vmem:[%s237 + $0x3c] sm:$0xf]
      %v348 = vld [vmem:[%s237 + $0x40] sm:$0xf]
      %v349 = vld [vmem:[%s237 + $0x44] sm:$0xf]
      %v350 = vld [vmem:[%s237 + $0x48] sm:$0xf]
      %v351 = vld [vmem:[%s237 + $0x4c] sm:$0xf]
      %v352 = vld [vmem:[%s237 + $0x50] sm:$0xf]
      %v353 = vld [vmem:[%s237 + $0x54] sm:$0xf]
      %v354 = vld [vmem:[%s237 + $0x58] sm:$0xf]
      %v355 = vld [vmem:[%s237 + $0x5c] sm:$0xf]
      %v356 = vld [vmem:[%s237 + $0x60] sm:$0xf]
      %v357 = vld [vmem:[%s237 + $0x64] sm:$0xf]
      %v358 = vld [vmem:[%s237 + $0x68] sm:$0xf]
      %v359 = vld [vmem:[%s237 + $0x6c] sm:$0xf]
      %v360 = vld [vmem:[%s237 + $0x70] sm:$0xf]
      %v361 = vld [vmem:[%s237 + $0x74] sm:$0xf]
      %v362 = vld [vmem:[%s237 + $0x78] sm:$0xf]
      %v363 = vld [vmem:[%s237 + $0x7c] sm:$0xf]
      %v364 = vld [vmem:[%s246] sm:$0xf]
      %v365 = vld [vmem:[%s246 + $0x4] sm:$0xf]
      %v366 = vld [vmem:[%s246 + $0x8] sm:$0xf]
      %v367 = vld [vmem:[%s246 + $0xc] sm:$0xf]
      %v368 = vld [vmem:[%s246 + $0x10] sm:$0xf]
      %v369 = vld [vmem:[%s246 + $0x14] sm:$0xf]
      %v370 = vld [vmem:[%s246 + $0x18] sm:$0xf]
      %v371 = vld [vmem:[%s246 + $0x1c] sm:$0xf]
      %v372 = vld [vmem:[%s246 + $0x20] sm:$0xf]
      %v373 = vld [vmem:[%s246 + $0x24] sm:$0xf]
      %v374 = vld [vmem:[%s246 + $0x28] sm:$0xf]
      %v375 = vld [vmem:[%s246 + $0x2c] sm:$0xf]
      %v376 = vld [vmem:[%s246 + $0x30] sm:$0xf]
      %v377 = vld [vmem:[%s246 + $0x34] sm:$0xf]
      %v378 = vld [vmem:[%s246 + $0x38] sm:$0xf]
      %v379 = vld [vmem:[%s246 + $0x3c] sm:$0xf]
      %v412 = vunpack.c.l.b16 %v332
      %v413 = vunpack.c.l.b16 %v333
      %v414 = vunpack.c.l.b16 %v334
      %v415 = vunpack.c.l.b16 %v335
      %v416 = vunpack.c.l.b16 %v336
      %v417 = vunpack.c.l.b16 %v337
      %v418 = vunpack.c.l.b16 %v338
      %v419 = vunpack.c.l.b16 %v339
      %v420 = vunpack.c.l.b16 %v340
      %v421 = vunpack.c.l.b16 %v341
      %v422 = vunpack.c.l.b16 %v342
      %v423 = vunpack.c.l.b16 %v343
      %v424 = vunpack.c.l.b16 %v344
      %v425 = vunpack.c.l.b16 %v345
      %v426 = vunpack.c.l.b16 %v346
      %v427 = vunpack.c.l.b16 %v347
      %v428 = vunpack.c.l.b16 %v348
      %v429 = vunpack.c.l.b16 %v349
      %v430 = vunpack.c.l.b16 %v350
      %v431 = vunpack.c.l.b16 %v351
      %v432 = vunpack.c.l.b16 %v352
      %v433 = vunpack.c.l.b16 %v353
      %v434 = vunpack.c.l.b16 %v354
      %v435 = vunpack.c.l.b16 %v355
      %v436 = vunpack.c.l.b16 %v356
      %v437 = vunpack.c.l.b16 %v357
      %v438 = vunpack.c.l.b16 %v358
      %v439 = vunpack.c.l.b16 %v359
      %v440 = vunpack.c.l.b16 %v360
      %v441 = vunpack.c.l.b16 %v361
      %v442 = vunpack.c.l.b16 %v362
      %v443 = vunpack.c.l.b16 %v363
      %v444 = vpack.c.b16 %v413, %v412
      %v445 = vpack.c.b16 %v415, %v414
      %v446 = vpack.c.b16 %v417, %v416
      %v447 = vpack.c.b16 %v419, %v418
      %v448 = vpack.c.b16 %v421, %v420
      %v449 = vpack.c.b16 %v423, %v422
      %v450 = vpack.c.b16 %v425, %v424
      %v451 = vpack.c.b16 %v427, %v426
      %v452 = vpack.c.b16 %v429, %v428
      %v453 = vpack.c.b16 %v431, %v430
      %v454 = vpack.c.b16 %v433, %v432
      %v455 = vpack.c.b16 %v435, %v434
      %v456 = vpack.c.b16 %v437, %v436
      %v457 = vpack.c.b16 %v439, %v438
      %v458 = vpack.c.b16 %v441, %v440
      %v459 = vpack.c.b16 %v443, %v442
      %v492 = vunpack.c.l.b16 %v364
      %v493 = vunpack.c.l.b16 %v365
      %v494 = vunpack.c.l.b16 %v366
      %v495 = vunpack.c.l.b16 %v367
      %v496 = vunpack.c.l.b16 %v368
      %v497 = vunpack.c.l.b16 %v369
      %v498 = vunpack.c.l.b16 %v370
      %v499 = vunpack.c.l.b16 %v371
      %v500 = vunpack.c.l.b16 %v372
      %v501 = vunpack.c.l.b16 %v373
      %v502 = vunpack.c.l.b16 %v374
      %v503 = vunpack.c.l.b16 %v375
      %v504 = vunpack.c.l.b16 %v376
      %v505 = vunpack.c.l.b16 %v377
      %v506 = vunpack.c.l.b16 %v378
      %v507 = vunpack.c.l.b16 %v379
      %v508 = vpack.c.b16 %v493, %v492
      %v509 = vpack.c.b16 %v495, %v494
      %v510 = vpack.c.b16 %v497, %v496
      %v511 = vpack.c.b16 %v499, %v498
      %v512 = vpack.c.b16 %v501, %v500
      %v513 = vpack.c.b16 %v503, %v502
      %v514 = vpack.c.b16 %v505, %v504
      %v515 = vpack.c.b16 %v507, %v506
      %524 = vmatpush.bf16.msra.mxu0 %v515
      %525 = vmatpush.bf16.msra.mxu0 %v514
      %526 = vmatpush.bf16.msra.mxu0 %v513
      %527 = vmatpush.bf16.msra.mxu0 %v512
      %528 = vmatpush.bf16.msra.mxu0 %v511
      %529 = vmatpush.bf16.msra.mxu0 %v510
      %530 = vmatpush.bf16.msra.mxu0 %v509
      %531 = vmatpush.bf16.msra.mxu0 %v508
      %532 = vmatmul.bf16.gmra.mxu0 %v444
      %v533 = vpop.f32.mrf.mxu0
      %v534 = vadd.f32 0.0, %v533
      %v535 = vpop.f32.mrf.mxu0
      %v536 = vadd.f32 0.0, %v535
      %537 = vmatmul.bf16.gmra.mxu0 %v445
      %v538 = vpop.f32.mrf.mxu0
      %v539 = vadd.f32 0.0, %v538
      %v540 = vpop.f32.mrf.mxu0
      %v541 = vadd.f32 0.0, %v540
      %542 = vmatmul.bf16.gmra.mxu0 %v446
      %v543 = vpop.f32.mrf.mxu0
      %v544 = vadd.f32 0.0, %v543
      %v545 = vpop.f32.mrf.mxu0
      %v546 = vadd.f32 0.0, %v545
      %547 = vmatmul.bf16.gmra.mxu0 %v447
      %v548 = vpop.f32.mrf.mxu0
      %v549 = vadd.f32 0.0, %v548
      %v550 = vpop.f32.mrf.mxu0
      %v551 = vadd.f32 0.0, %v550
      %552 = vmatmul.bf16.gmra.mxu0 %v448
      %v553 = vpop.f32.mrf.mxu0
      %v554 = vadd.f32 0.0, %v553
      %v555 = vpop.f32.mrf.mxu0
      %v556 = vadd.f32 0.0, %v555
      %557 = vmatmul.bf16.gmra.mxu0 %v449
      %v558 = vpop.f32.mrf.mxu0
      %v559 = vadd.f32 0.0, %v558
      %v560 = vpop.f32.mrf.mxu0
      %v561 = vadd.f32 0.0, %v560
      %562 = vmatmul.bf16.gmra.mxu0 %v450
      %v563 = vpop.f32.mrf.mxu0
      %v564 = vadd.f32 0.0, %v563
      %v565 = vpop.f32.mrf.mxu0
      %v566 = vadd.f32 0.0, %v565
      %567 = vmatmul.bf16.gmra.mxu0 %v451
      %v568 = vpop.f32.mrf.mxu0
      %v569 = vadd.f32 0.0, %v568
      %v570 = vpop.f32.mrf.mxu0
      %v571 = vadd.f32 0.0, %v570
      %572 = vmatmul.bf16.gmra.mxu0 %v452
      %v573 = vpop.f32.mrf.mxu0
      %v574 = vadd.f32 0.0, %v573
      %v575 = vpop.f32.mrf.mxu0
      %v576 = vadd.f32 0.0, %v575
      %577 = vmatmul.bf16.gmra.mxu0 %v453
      %v578 = vpop.f32.mrf.mxu0
      %v579 = vadd.f32 0.0, %v578
      %v580 = vpop.f32.mrf.mxu0
      %v581 = vadd.f32 0.0, %v580
      %582 = vmatmul.bf16.gmra.mxu0 %v454
      %v583 = vpop.f32.mrf.mxu0
      %v584 = vadd.f32 0.0, %v583
      %v585 = vpop.f32.mrf.mxu0
      %v586 = vadd.f32 0.0, %v585
      %587 = vmatmul.bf16.gmra.mxu0 %v455
      %v588 = vpop.f32.mrf.mxu0
      %v589 = vadd.f32 0.0, %v588
      %v590 = vpop.f32.mrf.mxu0
      %v591 = vadd.f32 0.0, %v590
      %592 = vmatmul.bf16.gmra.mxu0 %v456
      %v593 = vpop.f32.mrf.mxu0
      %v594 = vadd.f32 0.0, %v593
      %v595 = vpop.f32.mrf.mxu0
      %v596 = vadd.f32 0.0, %v595
      %597 = vmatmul.bf16.gmra.mxu0 %v457
      %v598 = vpop.f32.mrf.mxu0
      %v599 = vadd.f32 0.0, %v598
      %v600 = vpop.f32.mrf.mxu0
      %v601 = vadd.f32 0.0, %v600
      %602 = vmatmul.bf16.gmra.mxu0 %v458
      %v603 = vpop.f32.mrf.mxu0
      %v604 = vadd.f32 0.0, %v603
      %v605 = vpop.f32.mrf.mxu0
      %v606 = vadd.f32 0.0, %v605
      %607 = vmatmul.bf16.gmra.mxu0 %v459
      %v608 = vpop.f32.mrf.mxu0
      %v609 = vadd.f32 0.0, %v608
      %v610 = vpop.f32.mrf.mxu0
      %v611 = vadd.f32 0.0, %v610
      %612 = vdwg.mxu0
      %v613 = vadd.f32 %v300, %v534
      %v614 = vadd.f32 %v301, %v536
      %v615 = vadd.f32 %v302, %v539
      %v616 = vadd.f32 %v303, %v541
      %v617 = vadd.f32 %v304, %v544
      %v618 = vadd.f32 %v305, %v546
      %v619 = vadd.f32 %v306, %v549
      %v620 = vadd.f32 %v307, %v551
      %v621 = vadd.f32 %v308, %v554
      %v622 = vadd.f32 %v309, %v556
      %v623 = vadd.f32 %v310, %v559
      %v624 = vadd.f32 %v311, %v561
      %v625 = vadd.f32 %v312, %v564
      %v626 = vadd.f32 %v313, %v566
      %v627 = vadd.f32 %v314, %v569
      %v628 = vadd.f32 %v315, %v571
      %v629 = vadd.f32 %v316, %v574
      %v630 = vadd.f32 %v317, %v576
      %v631 = vadd.f32 %v318, %v579
      %v632 = vadd.f32 %v319, %v581
      %v633 = vadd.f32 %v320, %v584
      %v634 = vadd.f32 %v321, %v586
      %v635 = vadd.f32 %v322, %v589
      %v636 = vadd.f32 %v323, %v591
      %v637 = vadd.f32 %v324, %v594
      %v638 = vadd.f32 %v325, %v596
      %v639 = vadd.f32 %v326, %v599
      %v640 = vadd.f32 %v327, %v601
      %v641 = vadd.f32 %v328, %v604
      %v642 = vadd.f32 %v329, %v606
      %v643 = vadd.f32 %v330, %v609
      %v644 = vadd.f32 %v331, %v611
      %645 = vst [vmem:[#allocation2] sm:$0xff] %v613
      %646 = vst [vmem:[#allocation2 + $0x8] sm:$0xff] %v614
      %647 = vst [vmem:[#allocation2 + $0x10] sm:$0xff] %v615
      %648 = vst [vmem:[#allocation2 + $0x18] sm:$0xff] %v616
      %649 = vst [vmem:[#allocation2 + $0x20] sm:$0xff] %v617
      %650 = vst [vmem:[#allocation2 + $0x28] sm:$0xff] %v618
      %651 = vst [vmem:[#allocation2 + $0x30] sm:$0xff] %v619
      %652 = vst [vmem:[#allocation2 + $0x38] sm:$0xff] %v620
      %653 = vst [vmem:[#allocation2 + $0x40] sm:$0xff] %v621
      %654 = vst [vmem:[#allocation2 + $0x48] sm:$0xff] %v622
      %655 = vst [vmem:[#allocation2 + $0x50] sm:$0xff] %v623
      %656 = vst [vmem:[#allocation2 + $0x58] sm:$0xff] %v624
      %657 = vst [vmem:[#allocation2 + $0x60] sm:$0xff] %v625
      %658 = vst [vmem:[#allocation2 + $0x68] sm:$0xff] %v626
      %659 = vst [vmem:[#allocation2 + $0x70] sm:$0xff] %v627
      %660 = vst [vmem:[#allocation2 + $0x78] sm:$0xff] %v628
      %661 = vst [vmem:[#allocation2 + $0x80] sm:$0xff] %v629
      %662 = vst [vmem:[#allocation2 + $0x88] sm:$0xff] %v630
      %663 = vst [vmem:[#allocation2 + $0x90] sm:$0xff] %v631
      %664 = vst [vmem:[#allocation2 + $0x98] sm:$0xff] %v632
      %665 = vst [vmem:[#allocation2 + $0xa0] sm:$0xff] %v633
      %666 = vst [vmem:[#allocation2 + $0xa8] sm:$0xff] %v634
      %667 = vst [vmem:[#allocation2 + $0xb0] sm:$0xff] %v635
      %668 = vst [vmem:[#allocation2 + $0xb8] sm:$0xff] %v636
      %669 = vst [vmem:[#allocation2 + $0xc0] sm:$0xff] %v637
      %670 = vst [vmem:[#allocation2 + $0xc8] sm:$0xff] %v638
      %671 = vst [vmem:[#allocation2 + $0xd0] sm:$0xff] %v639
      %672 = vst [vmem:[#allocation2 + $0xd8] sm:$0xff] %v640
      %673 = vst [vmem:[#allocation2 + $0xe0] sm:$0xff] %v641
      %674 = vst [vmem:[#allocation2 + $0xe8] sm:$0xff] %v642
      %675 = vst [vmem:[#allocation2 + $0xf0] sm:$0xff] %v643
      %676 = vst [vmem:[#allocation2 + $0xf8] sm:$0xff] %v644
      // Predicated region
      $region33: #{up_forward.4} parent=27 // pred_check
        %p677 = pneg %p264
      $region34: #{up_forward.4} parent=27 // pred_check_branch
        %679 = sbr.rel (%p677) target = $region36
      $region35: #{up_forward.4} parent=27 // pred_region
        %v680 = vld [vmem:[#allocation2] sm:$0xff]
        %v681 = vld [vmem:[#allocation2 + $0x8] sm:$0xff]
        %v682 = vld [vmem:[#allocation2 + $0x10] sm:$0xff]
        %v683 = vld [vmem:[#allocation2 + $0x18] sm:$0xff]
        %v684 = vld [vmem:[#allocation2 + $0x20] sm:$0xff]
        %v685 = vld [vmem:[#allocation2 + $0x28] sm:$0xff]
        %v686 = vld [vmem:[#allocation2 + $0x30] sm:$0xff]
        %v687 = vld [vmem:[#allocation2 + $0x38] sm:$0xff]
        %v688 = vld [vmem:[#allocation2 + $0x40] sm:$0xff]
        %v689 = vld [vmem:[#allocation2 + $0x48] sm:$0xff]
        %v690 = vld [vmem:[#allocation2 + $0x50] sm:$0xff]
        %v691 = vld [vmem:[#allocation2 + $0x58] sm:$0xff]
        %v692 = vld [vmem:[#allocation2 + $0x60] sm:$0xff]
        %v693 = vld [vmem:[#allocation2 + $0x68] sm:$0xff]
        %v694 = vld [vmem:[#allocation2 + $0x70] sm:$0xff]
        %v695 = vld [vmem:[#allocation2 + $0x78] sm:$0xff]
        %v696 = vld [vmem:[#allocation2 + $0x80] sm:$0xff]
        %v697 = vld [vmem:[#allocation2 + $0x88] sm:$0xff]
        %v698 = vld [vmem:[#allocation2 + $0x90] sm:$0xff]
        %v699 = vld [vmem:[#allocation2 + $0x98] sm:$0xff]
        %v700 = vld [vmem:[#allocation2 + $0xa0] sm:$0xff]
        %v701 = vld [vmem:[#allocation2 + $0xa8] sm:$0xff]
        %v702 = vld [vmem:[#allocation2 + $0xb0] sm:$0xff]
        %v703 = vld [vmem:[#allocation2 + $0xb8] sm:$0xff]
        %v704 = vld [vmem:[#allocation2 + $0xc0] sm:$0xff]
        %v705 = vld [vmem:[#allocation2 + $0xc8] sm:$0xff]
        %v706 = vld [vmem:[#allocation2 + $0xd0] sm:$0xff]
        %v707 = vld [vmem:[#allocation2 + $0xd8] sm:$0xff]
        %v708 = vld [vmem:[#allocation2 + $0xe0] sm:$0xff]
        %v709 = vld [vmem:[#allocation2 + $0xe8] sm:$0xff]
        %v710 = vld [vmem:[#allocation2 + $0xf0] sm:$0xff]
        %v711 = vld [vmem:[#allocation2 + $0xf8] sm:$0xff]
        %712 = vst [vmem:[%s255] sm:$0xff] %v680
        %713 = vst [vmem:[%s255 + $0x8] sm:$0xff] %v681
        %714 = vst [vmem:[%s255 + $0x10] sm:$0xff] %v682
        %715 = vst [vmem:[%s255 + $0x18] sm:$0xff] %v683
        %716 = vst [vmem:[%s255 + $0x20] sm:$0xff] %v684
        %717 = vst [vmem:[%s255 + $0x28] sm:$0xff] %v685
        %718 = vst [vmem:[%s255 + $0x30] sm:$0xff] %v686
        %719 = vst [vmem:[%s255 + $0x38] sm:$0xff] %v687
        %720 = vst [vmem:[%s255 + $0x40] sm:$0xff] %v688
        %721 = vst [vmem:[%s255 + $0x48] sm:$0xff] %v689
        %722 = vst [vmem:[%s255 + $0x50] sm:$0xff] %v690
        %723 = vst [vmem:[%s255 + $0x58] sm:$0xff] %v691
        %724 = vst [vmem:[%s255 + $0x60] sm:$0xff] %v692
        %725 = vst [vmem:[%s255 + $0x68] sm:$0xff] %v693
        %726 = vst [vmem:[%s255 + $0x70] sm:$0xff] %v694
        %727 = vst [vmem:[%s255 + $0x78] sm:$0xff] %v695
        %728 = vst [vmem:[%s255 + $0x80] sm:$0xff] %v696
        %729 = vst [vmem:[%s255 + $0x88] sm:$0xff] %v697
        %730 = vst [vmem:[%s255 + $0x90] sm:$0xff] %v698
        %731 = vst [vmem:[%s255 + $0x98] sm:$0xff] %v699
        %732 = vst [vmem:[%s255 + $0xa0] sm:$0xff] %v700
        %733 = vst [vmem:[%s255 + $0xa8] sm:$0xff] %v701
        %734 = vst [vmem:[%s255 + $0xb0] sm:$0xff] %v702
        %735 = vst [vmem:[%s255 + $0xb8] sm:$0xff] %v703
        %736 = vst [vmem:[%s255 + $0xc0] sm:$0xff] %v704
        %737 = vst [vmem:[%s255 + $0xc8] sm:$0xff] %v705
        %738 = vst [vmem:[%s255 + $0xd0] sm:$0xff] %v706
        %739 = vst [vmem:[%s255 + $0xd8] sm:$0xff] %v707
        %740 = vst [vmem:[%s255 + $0xe0] sm:$0xff] %v708
        %741 = vst [vmem:[%s255 + $0xe8] sm:$0xff] %v709
        %742 = vst [vmem:[%s255 + $0xf0] sm:$0xff] %v710
        %743 = vst [vmem:[%s255 + $0xf8] sm:$0xff] %v711
        %v744 = vadd.f32 %v680, %v681
        %v745 = vadd.f32 %v744, %v682
        %v746 = vadd.f32 %v745, %v683
        %v747 = vadd.f32 %v746, %v684
        %v748 = vadd.f32 %v747, %v685
        %v749 = vadd.f32 %v748, %v686
        %v750 = vadd.f32 %v749, %v687
        %v751 = vadd.f32 %v750, %v688
        %v752 = vadd.f32 %v751, %v689
        %v753 = vadd.f32 %v752, %v690
        %v754 = vadd.f32 %v753, %v691
        %v755 = vadd.f32 %v754, %v692
        %v756 = vadd.f32 %v755, %v693
        %v757 = vadd.f32 %v756, %v694
        %v758 = vadd.f32 %v757, %v695
        %v759 = vadd.f32 %v758, %v696
        %v760 = vadd.f32 %v759, %v697
        %v761 = vadd.f32 %v760, %v698
        %v762 = vadd.f32 %v761, %v699
        %v763 = vadd.f32 %v762, %v700
        %v764 = vadd.f32 %v763, %v701
        %v765 = vadd.f32 %v764, %v702
        %v766 = vadd.f32 %v765, %v703
        %v767 = vadd.f32 %v766, %v704
        %v768 = vadd.f32 %v767, %v705
        %v769 = vadd.f32 %v768, %v706
        %v770 = vadd.f32 %v769, %v707
        %v771 = vadd.f32 %v770, %v708
        %v772 = vadd.f32 %v771, %v709
        %v773 = vadd.f32 %v772, %v710
        %v774 = vadd.f32 %v773, %v711
        %v775 = vrot.slane %v774, 4
        %v776 = vadd.f32 %v774, %v775
        %v777 = vrot.slane %v776, 2
        %v778 = vadd.f32 %v776, %v777
        %v779 = vrot.slane %v778, 1
        %v780 = vadd.f32 %v778, %v779
        %781 = vst [vmem:[%s263] sm:$0x1] %v780
        %v782 = vmul.f32 %v680, %v680
        %v783 = vmul.f32 %v681, %v681
        %v784 = vmul.f32 %v682, %v682
        %v785 = vmul.f32 %v683, %v683
        %v786 = vmul.f32 %v684, %v684
        %v787 = vmul.f32 %v685, %v685
        %v788 = vmul.f32 %v686, %v686
        %v789 = vmul.f32 %v687, %v687
        %v790 = vmul.f32 %v688, %v688
        %v791 = vmul.f32 %v689, %v689
        %v792 = vmul.f32 %v690, %v690
        %v793 = vmul.f32 %v691, %v691
        %v794 = vmul.f32 %v692, %v692
        %v795 = vmul.f32 %v693, %v693
        %v796 = vmul.f32 %v694, %v694
        %v797 = vmul.f32 %v695, %v695
        %v798 = vmul.f32 %v696, %v696
        %v799 = vmul.f32 %v697, %v697
        %v800 = vmul.f32 %v698, %v698
        %v801 = vmul.f32 %v699, %v699
        %v802 = vmul.f32 %v700, %v700
        %v803 = vmul.f32 %v701, %v701
        %v804 = vmul.f32 %v702, %v702
        %v805 = vmul.f32 %v703, %v703
        %v806 = vmul.f32 %v704, %v704
        %v807 = vmul.f32 %v705, %v705
        %v808 = vmul.f32 %v706, %v706
        %v809 = vmul.f32 %v707, %v707
        %v810 = vmul.f32 %v708, %v708
        %v811 = vmul.f32 %v709, %v709
        %v812 = vmul.f32 %v710, %v710
        %v813 = vmul.f32 %v711, %v711
        %v814 = vadd.f32 %v782, %v783
        %v815 = vadd.f32 %v814, %v784
        %v816 = vadd.f32 %v815, %v785
        %v817 = vadd.f32 %v816, %v786
        %v818 = vadd.f32 %v817, %v787
        %v819 = vadd.f32 %v818, %v788
        %v820 = vadd.f32 %v819, %v789
        %v821 = vadd.f32 %v820, %v790
        %v822 = vadd.f32 %v821, %v791
        %v823 = vadd.f32 %v822, %v792
        %v824 = vadd.f32 %v823, %v793
        %v825 = vadd.f32 %v824, %v794
        %v826 = vadd.f32 %v825, %v795
        %v827 = vadd.f32 %v826, %v796
        %v828 = vadd.f32 %v827, %v797
        %v829 = vadd.f32 %v828, %v798
        %v830 = vadd.f32 %v829, %v799
        %v831 = vadd.f32 %v830, %v800
        %v832 = vadd.f32 %v831, %v801
        %v833 = vadd.f32 %v832, %v802
        %v834 = vadd.f32 %v833, %v803
        %v835 = vadd.f32 %v834, %v804
        %v836 = vadd.f32 %v835, %v805
        %v837 = vadd.f32 %v836, %v806
        %v838 = vadd.f32 %v837, %v807
        %v839 = vadd.f32 %v838, %v808
        %v840 = vadd.f32 %v839, %v809
        %v841 = vadd.f32 %v840, %v810
        %v842 = vadd.f32 %v841, %v811
        %v843 = vadd.f32 %v842, %v812
        %v844 = vadd.f32 %v843, %v813
        %v845 = vrot.slane %v844, 4
        %v846 = vadd.f32 %v844, %v845
        %v847 = vrot.slane %v846, 2
        %v848 = vadd.f32 %v846, %v847
        %v849 = vrot.slane %v848, 1
        %v850 = vadd.f32 %v848, %v849
        %851 = vst [vmem:[%s263 + $0x1] sm:$0x1] %v850
      $region36: #{up_forward.4} parent=27 // pred_fallthru
        _
      %s852 = smul.u32 32, %s20
      %p853 = scmp.lt.s32.totalorder %s852, 63
      %s854 = scalar_select %p853, %s852, 63
      %p855 = scmp.lt.s32.totalorder %s21, 0
      %s856 = scalar_select %p855, %s21, 0
      %s857 = sadd.s32 %s856, %s854
      %s858 = smul.addr %s857, 8
      %s859 = scalar_lea.vmem %s2, %s858
      %p860 = scmp.lt.s32.totalorder %s20, 1
      %s861 = scalar_select %p860, %s20, 1
      %p862 = scmp.lt.s32.totalorder %s21, 0
      %s863 = scalar_select %p862, %s21, 0
      %s864 = sadd.s32 %s863, %s861
      %s865 = smul.addr %s864, 2
      %s866 = scalar_lea.vmem %s3, %s865
      // Predicated region
      $region37: #{up_forward.4} parent=27 // pred_check
        %p867 = pneg %p110
      $region38: #{up_forward.4} parent=27 // pred_check_branch
        %869 = sbr.rel (%p867) target = $region40
      $region39: #{up_forward.4} parent=27 // pred_region
        %s870 = smul.u32 32, %s20
      $region40: #{up_forward.4} parent=27 // pred_fallthru
        _
      // Predicated region
      $region41: #{up_forward.4} parent=27 // pred_check
        %p871 = pneg %p138
      $region42: #{up_forward.4} parent=27 // pred_check_branch
        %873 = sbr.rel (%p871) target = $region44
      $region43: #{up_forward.4} parent=27 // pred_region
        _
      $region44: #{up_forward.4} parent=27 // pred_fallthru
        _
    $region28: #{up_forward.4} parent=5 // pred_fallthru
      _
    %p874 = scmp.le.s32.totalorder 2, %s10
    // Predicated region
    $region45: #{up_forward.4} parent=5 // pred_check
      %p875 = pneg %p874
    $region46: #{up_forward.4} parent=5 // pred_check_branch
      %877 = sbr.rel (%p875) target = $region48
    $region47: #{up_forward.4} parent=5 // pred_region
      %s878 = ssub.s32 %s10, 2
      // Predicated region
      $region49: #{up_forward.4} parent=47 // pred_check
        %p879 = pneg %p116
      $region50: #{up_forward.4} parent=47 // pred_check_branch
        %881 = sbr.rel (%p879) target = $region52
      $region51: #{up_forward.4} parent=47 // pred_region
        %s882 = smul.u32 32, %s23
        %p883 = scmp.lt.s32.totalorder %s882, 63
        %s884 = scalar_select %p883, %s882, 63
        %p885 = scmp.lt.s32.totalorder %s24, 0
        %s886 = scalar_select %p885, %s24, 0
        %s887 = sadd.s32 %s886, %s884
        %s888 = smul.addr %s887, 8
        %s889 = scalar_lea.vmem %s2, %s888
      $region52: #{up_forward.4} parent=47 // pred_fallthru
        _
      // Predicated region
      $region53: #{up_forward.4} parent=47 // pred_check
        %p890 = pneg %p144
      $region54: #{up_forward.4} parent=47 // pred_check_branch
        %892 = sbr.rel (%p890) target = $region56
      $region55: #{up_forward.4} parent=47 // pred_region
        %p893 = scmp.lt.s32.totalorder %s23, 1
        %s894 = scalar_select %p893, %s23, 1
        %p895 = scmp.lt.s32.totalorder %s24, 0
        %s896 = scalar_select %p895, %s24, 0
        %s897 = sadd.s32 %s896, %s894
        %s898 = smul.addr %s897, 2
        %s899 = scalar_lea.vmem %s3, %s898
      $region56: #{up_forward.4} parent=47 // pred_fallthru
        _
    $region48: #{up_forward.4} parent=5 // pred_fallthru
      _
  $region6: #{up_forward.4} parent=0 // loop_footer
    %s14 = sadd.s32 1, %s10
  $region7: #{up_forward.4} parent=0 // loop_footer_branch
    %9 = sbr.rel target = $region3
  $region8: #{up_forward.4} parent=0 // loop_exit
    _

// kernel: up_forward.7
$region0: #{up_forward.7}
  #allocation0 [shape = 'u32[]', space=smem, size = 0x4, offset = 0x4, fixed_abs, tag = 'smem constant byte address 0x4 - core index']
  #allocation1 [shape = 'u32[72,128]{1,0:T(1,128)}', space=vmem, size = 0x9000, scoped, tag = 'internal scratch']
  %s0 = inlined_call_operand.vmem [shape: f32[512,128], index: 0, kind: input, shape index: {}]
  %s1 = inlined_call_operand.vmem [shape: f32[2,128], index: 1, kind: input, shape index: {}]
  %s2 = inlined_call_operand.vmem [shape: f32[512,128], index: 2, kind: output, shape index: {}]
  %s3 = sld [smem:[#allocation0]]
  $region41: #{up_forward.7} parent=0
    _
  %s5 = ssub.s32 1, %s3
  %s6 = scalar_select 0, %s5, %s3
  loop: start=0, step=1, limit=4
  $region2: #{up_forward.7} parent=0 // loop_pre_header
    _
  $region3: #{up_forward.7} parent=0 // loop_header
    %s8 = sphi 0, %s12
    %p9 = scmp.ge.s32.totalorder %s8, 4
    %s18 = sphi 0, %s20
    %s21 = sphi 0, %s18
    %s22 = sphi 0, %s21
    %s38 = sphi 0, %s22
    %s42 = sphi 0, %s42
    %s44 = sphi 0, %s42
    %s45 = sphi 0, %s44
    %s59 = sphi 0, %s45
    %s65 = sphi 0, %s67
    %s68 = sphi 0, %s65
    %s69 = sphi 0, %s68
    %s85 = sphi 0, %s69
  $region4: #{up_forward.7} parent=0 // loop_header_branch
    %11 = sbr.rel (%p9) target = $region8
  $region5: #{up_forward.7} parent=0 // loop_body
    %s13 = ssub.s32 %s8, 1
    %s14 = ssub.s32 %s8, 2
    %s15 = sadd.s32 %s8, 1
    %s16 = ssub.s32 %s8, %s15
    %p17 = scmp.eq.s32.totalorder %s16, 0
    %s19 = sadd.s32 %s18, 1
    %s20 = scalar_select %p17, %s18, %s19
    %p23 = pneg %p17
    %p24 = scmp.eq.s32.totalorder %s8, 1
    %p25 = por %p23, %p24
    %p26 = scmp.ne.s32.totalorder %s18, %s21
    %p27 = scmp.eq.s32.totalorder %s8, 0
    %p28 = por %p26, %p27
    %p29 = scmp.ne.s32.totalorder %s18, %s21
    %p30 = scmp.eq.s32.totalorder %s13, 1
    %p31 = por %p29, %p30
    %p32 = scmp.ne.s32.totalorder %s21, %s22
    %p33 = scmp.eq.s32.totalorder %s13, 0
    %p34 = por %p32, %p33
    %p35 = scmp.ne.s32.totalorder %s21, %s22
    %p36 = scmp.eq.s32.totalorder %s14, 1
    %p37 = por %p35, %p36
    %p39 = scmp.ne.s32.totalorder %s22, %s38
    %p40 = scmp.eq.s32.totalorder %s14, 0
    %p41 = por %p39, %p40
    %s43 = sadd.s32 %s42, 1
    %p46 = scmp.eq.s32.totalorder %s8, 1
    %p47 = scmp.ne.s32.totalorder %s42, %s44
    %p48 = scmp.eq.s32.totalorder %s8, 0
    %p49 = por %p47, %p48
    %p50 = scmp.ne.s32.totalorder %s42, %s44
    %p51 = scmp.eq.s32.totalorder %s13, 1
    %p52 = por %p50, %p51
    %p53 = scmp.ne.s32.totalorder %s44, %s45
    %p54 = scmp.eq.s32.totalorder %s13, 0
    %p55 = por %p53, %p54
    %p56 = scmp.ne.s32.totalorder %s44, %s45
    %p57 = scmp.eq.s32.totalorder %s14, 1
    %p58 = por %p56, %p57
    %p60 = scmp.ne.s32.totalorder %s45, %s59
    %p61 = scmp.eq.s32.totalorder %s14, 0
    %p62 = por %p60, %p61
    %s63 = ssub.s32 %s8, %s15
    %p64 = scmp.eq.s32.totalorder %s63, 0
    %s66 = sadd.s32 %s65, 1
    %s67 = scalar_select %p64, %s65, %s66
    %p70 = pneg %p64
    %p71 = scmp.eq.s32.totalorder %s8, 1
    %p72 = por %p70, %p71
    %p73 = scmp.ne.s32.totalorder %s65, %s68
    %p74 = scmp.eq.s32.totalorder %s8, 0
    %p75 = por %p73, %p74
    %p76 = scmp.ne.s32.totalorder %s65, %s68
    %p77 = scmp.eq.s32.totalorder %s13, 1
    %p78 = por %p76, %p77
    %p79 = scmp.ne.s32.totalorder %s68, %s69
    %p80 = scmp.eq.s32.totalorder %s13, 0
    %p81 = por %p79, %p80
    %p82 = scmp.ne.s32.totalorder %s68, %s69
    %p83 = scmp.eq.s32.totalorder %s14, 1
    %p84 = por %p82, %p83
    %p86 = scmp.ne.s32.totalorder %s69, %s85
    %p87 = scmp.eq.s32.totalorder %s14, 0
    %p88 = por %p86, %p87
    %p89 = scmp.le.s32.totalorder 1, %s8
    %p90 = scmp.lt.s32.totalorder %s8, 3
    %p91 = pnand %p89, %p90
    %p92 = pneg %p91
    // Predicated region
    $region9: #{up_forward.7} parent=5 // pred_check
      _
    $region10: #{up_forward.7} parent=5 // pred_check_branch
      %94 = sbr.rel (%p91) target = $region12
    $region11: #{up_forward.7} parent=5 // pred_region
      %s95 = ssub.s32 %s8, 1
      // Predicated region
      $region13: #{up_forward.7} parent=11 // pred_check
        %p96 = pneg %p55
      $region14: #{up_forward.7} parent=11 // pred_check_branch
        %98 = sbr.rel (%p96) target = $region16
      $region15: #{up_forward.7} parent=11 // pred_region
        _
      $region16: #{up_forward.7} parent=11 // pred_fallthru
        _
    $region12: #{up_forward.7} parent=5 // pred_fallthru
      _
    %p99 = scmp.lt.s32.totalorder %s8, 2
    // Predicated region
    $region17: #{up_forward.7} parent=5 // pred_check
      %p100 = pneg %p99
    $region18: #{up_forward.7} parent=5 // pred_check_branch
      %102 = sbr.rel (%p100) target = $region20
    $region19: #{up_forward.7} parent=5 // pred_region
      // Predicated region
      $region21: #{up_forward.7} parent=19 // pred_check
        %p103 = pneg %p28
      $region22: #{up_forward.7} parent=19 // pred_check_branch
        %105 = sbr.rel (%p103) target = $region24
      $region23: #{up_forward.7} parent=19 // pred_region
        %s106 = smul.u32 32, %s8
        %p107 = scmp.lt.s32.totalorder %s106, 63
        %s108 = scalar_select %p107, %s106, 63
        %s109 = smul.addr %s108, 8
        %s110 = scalar_lea.vmem %s0, %s109
        %s111 = smul.u32 32, %s8
      $region24: #{up_forward.7} parent=19 // pred_fallthru
        _
    $region20: #{up_forward.7} parent=5 // pred_fallthru
      _
    %p112 = scmp.le.s32.totalorder 1, %s8
    %p113 = scmp.lt.s32.totalorder %s8, 3
    %p114 = pnand %p112, %p113
    %p115 = pneg %p114
    // Predicated region
    $region25: #{up_forward.7} parent=5 // pred_check
      _
    $region26: #{up_forward.7} parent=5 // pred_check_branch
      %117 = sbr.rel (%p114) target = $region28
    $region27: #{up_forward.7} parent=5 // pred_region
      %s118 = ssub.s32 %s8, 1
      %s119 = smul.u32 32, %s13
      %p120 = scmp.lt.s32.totalorder %s119, 63
      %s121 = scalar_select %p120, %s119, 63
      %s122 = smul.addr %s121, 8
      %s123 = scalar_lea.vmem %s0, %s122
      %p124 = pneg %p34
      %p125 = pneg %p31
      %p126 = pneg %p55
      %p127 = pneg %p52
      %p128 = pneg %p81
      %p129 = pneg %p78
      %s130 = smul.u32 32, %s13
      %p131 = scmp.lt.s32.totalorder %s130, 63
      %s132 = scalar_select %p131, %s130, 63
      %s133 = smul.addr %s132, 8
      %s134 = scalar_lea.vmem %s2, %s133
      %s135 = smul.u32 32, %s13
      %p136 = scmp.lt.s32.totalorder %s135, 63
      %s137 = scalar_select %p136, %s135, 63
      %s138 = smul.addr %s137, 8
      %s139 = scalar_lea.vmem %s0, %s138
      %s140 = smul.u32 32, %s13
      %s141 = smul.u32 32, %s13
      %p142 = scmp.lt.s32.totalorder %s141, 63
      %s143 = scalar_select %p142, %s141, 63
      %s144 = smul.addr %s143, 8
      %s145 = scalar_lea.vmem %s2, %s144
      %s146 = smul.u32 32, %s13
      %v147 = vld [vmem:[%s139] sm:$0xff]
      %v148 = vld [vmem:[%s139 + $0x8] sm:$0xff]
      %v149 = vld [vmem:[%s139 + $0x10] sm:$0xff]
      %v150 = vld [vmem:[%s139 + $0x18] sm:$0xff]
      %v151 = vld [vmem:[%s139 + $0x20] sm:$0xff]
      %v152 = vld [vmem:[%s139 + $0x28] sm:$0xff]
      %v153 = vld [vmem:[%s139 + $0x30] sm:$0xff]
      %v154 = vld [vmem:[%s139 + $0x38] sm:$0xff]
      %v155 = vld [vmem:[%s139 + $0x40] sm:$0xff]
      %v156 = vld [vmem:[%s139 + $0x48] sm:$0xff]
      %v157 = vld [vmem:[%s139 + $0x50] sm:$0xff]
      %v158 = vld [vmem:[%s139 + $0x58] sm:$0xff]
      %v159 = vld [vmem:[%s139 + $0x60] sm:$0xff]
      %v160 = vld [vmem:[%s139 + $0x68] sm:$0xff]
      %v161 = vld [vmem:[%s139 + $0x70] sm:$0xff]
      %v162 = vld [vmem:[%s139 + $0x78] sm:$0xff]
      %v163 = vld [vmem:[%s139 + $0x80] sm:$0xff]
      %v164 = vld [vmem:[%s139 + $0x88] sm:$0xff]
      %v165 = vld [vmem:[%s139 + $0x90] sm:$0xff]
      %v166 = vld [vmem:[%s139 + $0x98] sm:$0xff]
      %v167 = vld [vmem:[%s139 + $0xa0] sm:$0xff]
      %v168 = vld [vmem:[%s139 + $0xa8] sm:$0xff]
      %v169 = vld [vmem:[%s139 + $0xb0] sm:$0xff]
      %v170 = vld [vmem:[%s139 + $0xb8] sm:$0xff]
      %v171 = vld [vmem:[%s139 + $0xc0] sm:$0xff]
      %v172 = vld [vmem:[%s139 + $0xc8] sm:$0xff]
      %v173 = vld [vmem:[%s139 + $0xd0] sm:$0xff]
      %v174 = vld [vmem:[%s139 + $0xd8] sm:$0xff]
      %v175 = vld [vmem:[%s139 + $0xe0] sm:$0xff]
      %v176 = vld [vmem:[%s139 + $0xe8] sm:$0xff]
      %v177 = vld [vmem:[%s139 + $0xf0] sm:$0xff]
      %v178 = vld [vmem:[%s139 + $0xf8] sm:$0xff]
      %v179 = vld [vmem:[%s1] sm:$0x1]
      %v180 = vld [vmem:[%s1 + $0x1] sm:$0x1]
      %v181 = vperm.slane %v179, 0
      %v182 = vmul.f32 %v147, %v181
      %v183 = vmul.f32 %v148, %v181
      %v184 = vmul.f32 %v149, %v181
      %v185 = vmul.f32 %v150, %v181
      %v186 = vmul.f32 %v151, %v181
      %v187 = vmul.f32 %v152, %v181
      %v188 = vmul.f32 %v153, %v181
      %v189 = vmul.f32 %v154, %v181
      %v190 = vmul.f32 %v155, %v181
      %v191 = vmul.f32 %v156, %v181
      %v192 = vmul.f32 %v157, %v181
      %v193 = vmul.f32 %v158, %v181
      %v194 = vmul.f32 %v159, %v181
      %v195 = vmul.f32 %v160, %v181
      %v196 = vmul.f32 %v161, %v181
      %v197 = vmul.f32 %v162, %v181
      %v198 = vmul.f32 %v163, %v181
      %v199 = vmul.f32 %v164, %v181
      %v200 = vmul.f32 %v165, %v181
      %v201 = vmul.f32 %v166, %v181
      %v202 = vmul.f32 %v167, %v181
      %v203 = vmul.f32 %v168, %v181
      %v204 = vmul.f32 %v169, %v181
      %v205 = vmul.f32 %v170, %v181
      %v206 = vmul.f32 %v171, %v181
      %v207 = vmul.f32 %v172, %v181
      %v208 = vmul.f32 %v173, %v181
      %v209 = vmul.f32 %v174, %v181
      %v210 = vmul.f32 %v175, %v181
      %v211 = vmul.f32 %v176, %v181
      %v212 = vmul.f32 %v177, %v181
      %v213 = vmul.f32 %v178, %v181
      %v214 = vperm.slane %v180, 0
      %v215 = vadd.f32 %v182, %v214
      %v216 = vadd.f32 %v183, %v214
      %v217 = vadd.f32 %v184, %v214
      %v218 = vadd.f32 %v185, %v214
      %v219 = vadd.f32 %v186, %v214
      %v220 = vadd.f32 %v187, %v214
      %v221 = vadd.f32 %v188, %v214
      %v222 = vadd.f32 %v189, %v214
      %v223 = vadd.f32 %v190, %v214
      %v224 = vadd.f32 %v191, %v214
      %v225 = vadd.f32 %v192, %v214
      %v226 = vadd.f32 %v193, %v214
      %v227 = vadd.f32 %v194, %v214
      %v228 = vadd.f32 %v195, %v214
      %v229 = vadd.f32 %v196, %v214
      %v230 = vadd.f32 %v197, %v214
      %v231 = vadd.f32 %v198, %v214
      %v232 = vadd.f32 %v199, %v214
      %v233 = vadd.f32 %v200, %v214
      %v234 = vadd.f32 %v201, %v214
      %v235 = vadd.f32 %v202, %v214
      %v236 = vadd.f32 %v203, %v214
      %v237 = vadd.f32 %v204, %v214
      %v238 = vadd.f32 %v205, %v214
      %v239 = vadd.f32 %v206, %v214
      %v240 = vadd.f32 %v207, %v214
      %v241 = vadd.f32 %v208, %v214
      %v242 = vadd.f32 %v209, %v214
      %v243 = vadd.f32 %v210, %v214
      %v244 = vadd.f32 %v211, %v214
      %v245 = vadd.f32 %v212, %v214
      %v246 = vadd.f32 %v213, %v214
      %v247 = vmax.f32 %v215, 0.0
      %v248 = vmax.f32 %v216, 0.0
      %v249 = vmax.f32 %v217, 0.0
      %v250 = vmax.f32 %v218, 0.0
      %v251 = vmax.f32 %v219, 0.0
      %v252 = vmax.f32 %v220, 0.0
      %v253 = vmax.f32 %v221, 0.0
      %v254 = vmax.f32 %v222, 0.0
      %v255 = vmax.f32 %v223, 0.0
      %v256 = vmax.f32 %v224, 0.0
      %v257 = vmax.f32 %v225, 0.0
      %v258 = vmax.f32 %v226, 0.0
      %v259 = vmax.f32 %v227, 0.0
      %v260 = vmax.f32 %v228, 0.0
      %v261 = vmax.f32 %v229, 0.0
      %v262 = vmax.f32 %v230, 0.0
      %v263 = vmax.f32 %v231, 0.0
      %v264 = vmax.f32 %v232, 0.0
      %v265 = vmax.f32 %v233, 0.0
      %v266 = vmax.f32 %v234, 0.0
      %v267 = vmax.f32 %v235, 0.0
      %v268 = vmax.f32 %v236, 0.0
      %v269 = vmax.f32 %v237, 0.0
      %v270 = vmax.f32 %v238, 0.0
      %v271 = vmax.f32 %v239, 0.0
      %v272 = vmax.f32 %v240, 0.0
      %v273 = vmax.f32 %v241, 0.0
      %v274 = vmax.f32 %v242, 0.0
      %v275 = vmax.f32 %v243, 0.0
      %v276 = vmax.f32 %v244, 0.0
      %v277 = vmax.f32 %v245, 0.0
      %v278 = vmax.f32 %v246, 0.0
      %279 = vst [vmem:[%s145] sm:$0xff] %v247
      %280 = vst [vmem:[%s145 + $0x8] sm:$0xff] %v248
      %281 = vst [vmem:[%s145 + $0x10] sm:$0xff] %v249
      %282 = vst [vmem:[%s145 + $0x18] sm:$0xff] %v250
      %283 = vst [vmem:[%s145 + $0x20] sm:$0xff] %v251
      %284 = vst [vmem:[%s145 + $0x28] sm:$0xff] %v252
      %285 = vst [vmem:[%s145 + $0x30] sm:$0xff] %v253
      %286 = vst [vmem:[%s145 + $0x38] sm:$0xff] %v254
      %287 = vst [vmem:[%s145 + $0x40] sm:$0xff] %v255
      %288 = vst [vmem:[%s145 + $0x48] sm:$0xff] %v256
      %289 = vst [vmem:[%s145 + $0x50] sm:$0xff] %v257
      %290 = vst [vmem:[%s145 + $0x58] sm:$0xff] %v258
      %291 = vst [vmem:[%s145 + $0x60] sm:$0xff] %v259
      %292 = vst [vmem:[%s145 + $0x68] sm:$0xff] %v260
      %293 = vst [vmem:[%s145 + $0x70] sm:$0xff] %v261
      %294 = vst [vmem:[%s145 + $0x78] sm:$0xff] %v262
      %295 = vst [vmem:[%s145 + $0x80] sm:$0xff] %v263
      %296 = vst [vmem:[%s145 + $0x88] sm:$0xff] %v264
      %297 = vst [vmem:[%s145 + $0x90] sm:$0xff] %v265
      %298 = vst [vmem:[%s145 + $0x98] sm:$0xff] %v266
      %299 = vst [vmem:[%s145 + $0xa0] sm:$0xff] %v267
      %300 = vst [vmem:[%s145 + $0xa8] sm:$0xff] %v268
      %301 = vst [vmem:[%s145 + $0xb0] sm:$0xff] %v269
      %302 = vst [vmem:[%s145 + $0xb8] sm:$0xff] %v270
      %303 = vst [vmem:[%s145 + $0xc0] sm:$0xff] %v271
      %304 = vst [vmem:[%s145 + $0xc8] sm:$0xff] %v272
      %305 = vst [vmem:[%s145 + $0xd0] sm:$0xff] %v273
      %306 = vst [vmem:[%s145 + $0xd8] sm:$0xff] %v274
      %307 = vst [vmem:[%s145 + $0xe0] sm:$0xff] %v275
      %308 = vst [vmem:[%s145 + $0xe8] sm:$0xff] %v276
      %309 = vst [vmem:[%s145 + $0xf0] sm:$0xff] %v277
      %310 = vst [vmem:[%s145 + $0xf8] sm:$0xff] %v278
      %s311 = smul.u32 32, %s13
      %p312 = scmp.lt.s32.totalorder %s311, 63
      %s313 = scalar_select %p312, %s311, 63
      %s314 = smul.addr %s313, 8
      %s315 = scalar_lea.vmem %s2, %s314
      // Predicated region
      $region29: #{up_forward.7} parent=27 // pred_check
        %p316 = pneg %p78
      $region30: #{up_forward.7} parent=27 // pred_check_branch
        %318 = sbr.rel (%p316) target = $region32
      $region31: #{up_forward.7} parent=27 // pred_region
        %s319 = smul.u32 32, %s13
      $region32: #{up_forward.7} parent=27 // pred_fallthru
        _
    $region28: #{up_forward.7} parent=5 // pred_fallthru
      _
    %p320 = scmp.le.s32.totalorder 2, %s8
    // Predicated region
    $region33: #{up_forward.7} parent=5 // pred_check
      %p321 = pneg %p320
    $region34: #{up_forward.7} parent=5 // pred_check_branch
      %323 = sbr.rel (%p321) target = $region36
    $region35: #{up_forward.7} parent=5 // pred_region
      %s324 = ssub.s32 %s8, 2
      // Predicated region
      $region37: #{up_forward.7} parent=35 // pred_check
        %p325 = pneg %p84
      $region38: #{up_forward.7} parent=35 // pred_check_branch
        %327 = sbr.rel (%p325) target = $region40
      $region39: #{up_forward.7} parent=35 // pred_region
        %s328 = smul.u32 32, %s14
        %p329 = scmp.lt.s32.totalorder %s328, 63
        %s330 = scalar_select %p329, %s328, 63
        %s331 = smul.addr %s330, 8
        %s332 = scalar_lea.vmem %s2, %s331
      $region40: #{up_forward.7} parent=35 // pred_fallthru
        _
    $region36: #{up_forward.7} parent=5 // pred_fallthru
      _
  $region6: #{up_forward.7} parent=0 // loop_footer
    %s12 = sadd.s32 1, %s8
  $region7: #{up_forward.7} parent=0 // loop_footer_branch
    %7 = sbr.rel target = $region3
  $region8: #{up_forward.7} parent=0 // loop_exit
    _

// kernel: up_forward.6
$region0: #{up_forward.6}
  #allocation0 [shape = 'u32[]', space=smem, size = 0x4, offset = 0x4, fixed_abs, tag = 'smem constant byte address 0x4 - core index']
  #allocation1 [shape = 'u32[72,128]{1,0:T(1,128)}', space=vmem, size = 0x9000, scoped, tag = 'internal scratch']
  #allocation2 [shape = 'f32[256,128]{1,0:T(8,128)}', space=vmem, size = 0x20000, scoped, tag = 'scratch operand']
  %s0 = inlined_call_operand.vmem [shape: bf16[512,1152], index: 0, kind: input, shape index: {}]
  %s1 = inlined_call_operand.vmem [shape: bf16[1152,128], index: 1, kind: input, shape index: {}]
  %s2 = inlined_call_operand.vmem [shape: f32[512,128], index: 2, kind: output, shape index: {0}]
  %s3 = inlined_call_operand.vmem [shape: f32[2,2,128], index: 3, kind: output, shape index: {1}]
  %4 = xla_tuple %s2, %s3
  %s5 = sld [smem:[#allocation0]]
  $region83: #{up_forward.6} parent=0
    _
  %s7 = ssub.s32 1, %s5
  %s8 = scalar_select 0, %s7, %s5
  $region1: #{up_forward.6} parent=0
    #allocation3 [shape = 'u8[393216]{0}', space=vmem, size = 0x60000, scoped, tag = 'input window, operand 0']
    loop: start=0, step=1, limit=8
    $region2: #{up_forward.6} parent=1 // loop_pre_header
      _
    $region3: #{up_forward.6} parent=1 // loop_header
      %s10 = sphi 0, %s14
      %p11 = scmp.ge.s32.totalorder %s10, 8
      %s17 = sphi 0, %s36
      %s18 = sphi 0, %s32
      %s19 = sphi 0, %s28
      %s20 = sphi 0, %s17
      %s21 = sphi 0, %s18
      %s22 = sphi 0, %s19
      %s23 = sphi 0, %s20
      %s24 = sphi 0, %s21
      %s25 = sphi 0, %s22
      %s41 = sphi 0, %s43
      %s44 = sphi 0, %s41
      %s45 = sphi 0, %s44
      %s61 = sphi 0, %s45
      %s69 = sphi 0, %s71
      %s72 = sphi 0, %s69
      %s73 = sphi 0, %s72
      %s89 = sphi 0, %s73
      %s97 = sphi 0, %s99
      %s100 = sphi 0, %s97
      %s101 = sphi 0, %s100
      %s117 = sphi 0, %s101
      %s125 = sphi 0, %s127
      %s128 = sphi 0, %s125
      %s129 = sphi 0, %s128
      %s145 = sphi 0, %s129
    $region4: #{up_forward.6} parent=1 // loop_header_branch
      %13 = sbr.rel (%p11) target = $region8
    $region5: #{up_forward.6} parent=1 // loop_body
      %s15 = ssub.s32 %s10, 1
      %s16 = ssub.s32 %s10, 2
      %s26 = sadd.s32 1, %s19
      %p27 = scmp.ge.s32.totalorder %s26, 3
      %s28 = scalar_select %p27, 0, %s26
      %s29 = sadd.s32 1, %s18
      %s30 = scalar_select %p27, %s29, %s18
      %p31 = scmp.ge.s32.totalorder %s30, 1
      %s32 = scalar_select %p31, 0, %s30
      %s33 = sadd.s32 1, %s17
      %s34 = scalar_select %p31, %s33, %s17
      %p35 = scmp.ge.s32.totalorder %s34, 2
      %s36 = scalar_select %p35, 0, %s34
      %s37 = ssub.s32 %s17, %s36
      %s38 = ssub.s32 %s19, %s28
      %s39 = sor.u32 %s37, %s38
      %p40 = scmp.eq.s32.totalorder %s39, 0
      %s42 = sadd.s32 %s41, 1
      %s43 = scalar_select %p40, %s41, %s42
      %p46 = pneg %p40
      %p47 = scmp.eq.s32.totalorder %s10, 5
      %p48 = por %p46, %p47
      %p49 = scmp.ne.s32.totalorder %s41, %s44
      %p50 = scmp.eq.s32.totalorder %s10, 0
      %p51 = por %p49, %p50
      %p52 = scmp.ne.s32.totalorder %s41, %s44
      %p53 = scmp.eq.s32.totalorder %s15, 5
      %p54 = por %p52, %p53
      %p55 = scmp.ne.s32.totalorder %s44, %s45
      %p56 = scmp.eq.s32.totalorder %s15, 0
      %p57 = por %p55, %p56
      %p58 = scmp.ne.s32.totalorder %s44, %s45
      %p59 = scmp.eq.s32.totalorder %s16, 5
      %p60 = por %p58, %p59
      %p62 = scmp.ne.s32.totalorder %s45, %s61
      %p63 = scmp.eq.s32.totalorder %s16, 0
      %p64 = por %p62, %p63
      %s65 = ssub.s32 %s19, %s28
      %s66 = ssub.s32 %s18, %s32
      %s67 = sor.u32 %s65, %s66
      %p68 = scmp.eq.s32.totalorder %s67, 0
      %s70 = sadd.s32 %s69, 1
      %s71 = scalar_select %p68, %s69, %s70
      %p74 = pneg %p68
      %p75 = scmp.eq.s32.totalorder %s10, 5
      %p76 = por %p74, %p75
      %p77 = scmp.ne.s32.totalorder %s69, %s72
      %p78 = scmp.eq.s32.totalorder %s10, 0
      %p79 = por %p77, %p78
      %p80 = scmp.ne.s32.totalorder %s69, %s72
      %p81 = scmp.eq.s32.totalorder %s15, 5
      %p82 = por %p80, %p81
      %p83 = scmp.ne.s32.totalorder %s72, %s73
      %p84 = scmp.eq.s32.totalorder %s15, 0
      %p85 = por %p83, %p84
      %p86 = scmp.ne.s32.totalorder %s72, %s73
      %p87 = scmp.eq.s32.totalorder %s16, 5
      %p88 = por %p86, %p87
      %p90 = scmp.ne.s32.totalorder %s73, %s89
      %p91 = scmp.eq.s32.totalorder %s16, 0
      %p92 = por %p90, %p91
      %s93 = ssub.s32 %s17, %s36
      %s94 = ssub.s32 %s18, %s32
      %s95 = sor.u32 %s93, %s94
      %p96 = scmp.eq.s32.totalorder %s95, 0
      %s98 = sadd.s32 %s97, 1
      %s99 = scalar_select %p96, %s97, %s98
      %p102 = pneg %p96
      %p103 = scmp.eq.s32.totalorder %s10, 5
      %p104 = por %p102, %p103
      %p105 = scmp.ne.s32.totalorder %s97, %s100
      %p106 = scmp.eq.s32.totalorder %s10, 0
      %p107 = por %p105, %p106
      %p108 = scmp.ne.s32.totalorder %s97, %s100
      %p109 = scmp.eq.s32.totalorder %s15, 5
      %p110 = por %p108, %p109
      %p111 = scmp.ne.s32.totalorder %s100, %s101
      %p112 = scmp.eq.s32.totalorder %s15, 0
      %p113 = por %p111, %p112
      %p114 = scmp.ne.s32.totalorder %s100, %s101
      %p115 = scmp.eq.s32.totalorder %s16, 5
      %p116 = por %p114, %p115
      %p118 = scmp.ne.s32.totalorder %s101, %s117
      %p119 = scmp.eq.s32.totalorder %s16, 0
      %p120 = por %p118, %p119
      %s121 = ssub.s32 %s17, %s36
      %s122 = ssub.s32 %s18, %s32
      %s123 = sor.u32 %s121, %s122
      %p124 = scmp.eq.s32.totalorder %s123, 0
      %s126 = sadd.s32 %s125, 1
      %s127 = scalar_select %p124, %s125, %s126
      %p130 = pneg %p124
      %p131 = scmp.eq.s32.totalorder %s10, 5
      %p132 = por %p130, %p131
      %p133 = scmp.ne.s32.totalorder %s125, %s128
      %p134 = scmp.eq.s32.totalorder %s10, 0
      %p135 = por %p133, %p134
      %p136 = scmp.ne.s32.totalorder %s125, %s128
      %p137 = scmp.eq.s32.totalorder %s15, 5
      %p138 = por %p136, %p137
      %p139 = scmp.ne.s32.totalorder %s128, %s129
      %p140 = scmp.eq.s32.totalorder %s15, 0
      %p141 = por %p139, %p140
      %p142 = scmp.ne.s32.totalorder %s128, %s129
      %p143 = scmp.eq.s32.totalorder %s16, 5
      %p144 = por %p142, %p143
      %p146 = scmp.ne.s32.totalorder %s129, %s145
      %p147 = scmp.eq.s32.totalorder %s16, 0
      %p148 = por %p146, %p147
      %p149 = scmp.le.s32.totalorder 1, %s10
      %p150 = scmp.lt.s32.totalorder %s10, 7
      %p151 = pnand %p149, %p150
      %p152 = pneg %p151
      // Predicated region
      $region9: #{up_forward.6} parent=5 // pred_check
        _
      $region10: #{up_forward.6} parent=5 // pred_check_branch
        %154 = sbr.rel (%p151) target = $region12
      $region11: #{up_forward.6} parent=5 // pred_region
        %s155 = ssub.s32 %s10, 1
      $region12: #{up_forward.6} parent=5 // pred_fallthru
        _
      %p156 = scmp.lt.s32.totalorder %s10, 6
      // Predicated region
      $region13: #{up_forward.6} parent=5 // pred_check
        %p157 = pneg %p156
      $region14: #{up_forward.6} parent=5 // pred_check_branch
        %159 = sbr.rel (%p157) target = $region16
      $region15: #{up_forward.6} parent=5 // pred_region
        // Predicated region
        $region17: #{up_forward.6} parent=15 // pred_check
          %p160 = pneg %p51
        $region18: #{up_forward.6} parent=15 // pred_check_branch
          %162 = sbr.rel (%p160) target = $region20
        $region19: #{up_forward.6} parent=15 // pred_region
          %s163 = sand.u32 %s41, 1
          %s164 = sand.u32 %s41, 1
          %s165 = smul.addr %s164, 384
          %s166 = scalar_lea.vmem [#allocation3], %s165
          %s167 = smul.u32 32, %s17
          %s168 = smul.u32 3, %s19
          %s169 = smul.addr %s167, 9
          %s170 = sadd.s32 %s168, %s169
          %s171 = smul.addr %s170, 4
          %s172 = scalar_lea.vmem %s0, %s171
          // Predicated region
          $region21: #{up_forward.6} parent=19 // pred_check
            _
          $region22: #{up_forward.6} parent=19 // pred_check_branch
            %174 = sbr.rel (0) target = $region24
          $region23: #{up_forward.6} parent=19 // pred_region
            // Predicated region
            $region25: #{up_forward.6} parent=23 // pred_check
              _
            $region26: #{up_forward.6} parent=23 // pred_check_branch
              %176 = sbr.rel (0) target = $region28
            $region27: #{up_forward.6} parent=23 // pred_region
              %s177 = scalar_lea.vmem %s172, 8
              %s178 = scalar_lea.vmem %s166, 8 [#allocation3]
              loop: start=0, step=1, limit=1
              $region29: #{up_forward.6} parent=27 // loop_pre_header
                _
              $region30: #{up_forward.6} parent=27 // loop_header
                %s180 = sphi 0, %s184
                %p181 = scmp.ge.s32.totalorder %s180, 1
                %s185 = sphi %s172, %s172
                %s186 = sphi %s166, %s166
              $region31: #{up_forward.6} parent=27 // loop_header_branch
                %183 = sbr.rel (%p181) target = $region35
              $region32: #{up_forward.6} parent=27 // loop_body
                %v187 = vld [vmem:[%s185] sm:$0xff]
                %188 = vst [vmem:[%s186] sm:$0xff] %v187
                %v189 = vld [vmem:[%s185 + $0x24] sm:$0xff]
                %190 = vst [vmem:[%s186 + $0xc] sm:$0xff] %v189
                %v191 = vld [vmem:[%s185 + $0x48] sm:$0xff]
                %192 = vst [vmem:[%s186 + $0x18] sm:$0xff] %v191
                %v193 = vld [vmem:[%s185 + $0x6c] sm:$0xff]
                %194 = vst [vmem:[%s186 + $0x24] sm:$0xff] %v193
                %v195 = vld [vmem:[%s185 + $0x90] sm:$0xff]
                %196 = vst [vmem:[%s186 + $0x30] sm:$0xff] %v195
                %v197 = vld [vmem:[%s185 + $0xb4] sm:$0xff]
                %198 = vst [vmem:[%s186 + $0x3c] sm:$0xff] %v197
                %v199 = vld [vmem:[%s185 + $0xd8] sm:$0xff]
                %200 = vst [vmem:[%s186 + $0x48] sm:$0xff] %v199
                %v201 = vld [vmem:[%s185 + $0xfc] sm:$0xff]
                %202 = vst [vmem:[%s186 + $0x54] sm:$0xff] %v201
                %v203 = vld [vmem:[%s185 + $0x120] sm:$0xff]
                %204 = vst [vmem:[%s186 + $0x60] sm:$0xff] %v203
                %v205 = vld [vmem:[%s185 + $0x144] sm:$0xff]
                %206 = vst [vmem:[%s186 + $0x6c] sm:$0xff] %v205
                %v207 = vld [vmem:[%s185 + $0x168] sm:$0xff]
                %208 = vst [vmem:[%s186 + $0x78] sm:$0xff] %v207
                %v209 = vld [vmem:[%s185 + $0x18c] sm:$0xff]
                %210 = vst [vmem:[%s186 + $0x84] sm:$0xff] %v209
                %v211 = vld [vmem:[%s185 + $0x1b0] sm:$0xff]
                %212 = vst [vmem:[%s186 + $0x90] sm:$0xff] %v211
                %v213 = vld [vmem:[%s185 + $0x1d4] sm:$0xff]
                %214 = vst [vmem:[%s186 + $0x9c] sm:$0xff] %v213
                %v215 = vld [vmem:[%s185 + $0x1f8] sm:$0xff]
                %216 = vst [vmem:[%s186 + $0xa8] sm:$0xff] %v215
                %v217 = vld [vmem:[%s185 + $0x21c] sm:$0xff]
                %218 = vst [vmem:[%s186 + $0xb4] sm:$0xff] %v217
                %v219 = vld [vmem:[%s185 + $0x240] sm:$0xff]
                %220 = vst [vmem:[%s186 + $0xc0] sm:$0xff] %v219
                %v221 = vld [vmem:[%s185 + $0x264] sm:$0xff]
                %222 = vst [vmem:[%s186 + $0xcc] sm:$0xff] %v221
                %v223 = vld [vmem:[%s185 + $0x288] sm:$0xff]
                %224 = vst [vmem:[%s186 + $0xd8] sm:$0xff] %v223
                %v225 = vld [vmem:[%s185 + $0x2ac] sm:$0xff]
                %226 = vst [vmem:[%s186 + $0xe4] sm:$0xff] %v225
                %v227 = vld [vmem:[%s185 + $0x2d0] sm:$0xff]
                %228 = vst [vmem:[%s186 + $0xf0] sm:$0xff] %v227
                %v229 = vld [vmem:[%s185 + $0x2f4] sm:$0xff]
                %230 = vst [vmem:[%s186 + $0xfc] sm:$0xff] %v229
                %v231 = vld [vmem:[%s185 + $0x318] sm:$0xff]
                %232 = vst [vmem:[%s186 + $0x108] sm:$0xff] %v231
                %v233 = vld [vmem:[%s185 + $0x33c] sm:$0xff]
                %234 = vst [vmem:[%s186 + $0x114] sm:$0xff] %v233
                %v235 = vld [vmem:[%s185 + $0x360] sm:$0xff]
                %236 = vst [vmem:[%s186 + $0x120] sm:$0xff] %v235
                %v237 = vld [vmem:[%s185 + $0x384] sm:$0xff]
                %238 = vst [vmem:[%s186 + $0x12c] sm:$0xff] %v237
                %v239 = vld [vmem:[%s185 + $0x3a8] sm:$0xff]
                %240 = vst [vmem:[%s186 + $0x138] sm:$0xff] %v239
                %v241 = vld [vmem:[%s185 + $0x3cc] sm:$0xff]
                %242 = vst [vmem:[%s186 + $0x144] sm:$0xff] %v241
                %v243 = vld [vmem:[%s185 + $0x3f0] sm:$0xff]
                %244 = vst [vmem:[%s186 + $0x150] sm:$0xff] %v243
                %v245 = vld [vmem:[%s185 + $0x414] sm:$0xff]
                %246 = vst [vmem:[%s186 + $0x15c] sm:$0xff] %v245
                %v247 = vld [vmem:[%s185 + $0x438] sm:$0xff]
                %248 = vst [vmem:[%s186 + $0x168] sm:$0xff] %v247
                %v249 = vld [vmem:[%s185 + $0x45c] sm:$0xff]
                %250 = vst [vmem:[%s186 + $0x174] sm:$0xff] %v249
              $region33: #{up_forward.6} parent=27 // loop_footer
                %s184 = sadd.s32 1, %s180
              $region34: #{up_forward.6} parent=27 // loop_footer_branch
                %179 = sbr.rel target = $region30
              $region35: #{up_forward.6} parent=27 // loop_exit
                _
              %s252 = ssub.s32 16, 1
              loop: start=0, step=1, limit=1
              $region36: #{up_forward.6} parent=27 // loop_pre_header
                _
              $region37: #{up_forward.6} parent=27 // loop_header
                %s254 = sphi 0, %s258
                %p255 = scmp.ge.s32.totalorder %s254, 1
                %s259 = sphi %s177, %s177
                %s260 = sphi %s178, %s178
              $region38: #{up_forward.6} parent=27 // loop_header_branch
                %257 = sbr.rel (%p255) target = $region42
              $region39: #{up_forward.6} parent=27 // loop_body
                %v261 = vld [vmem:[%s259] sm:%s252]
                %262 = vst [vmem:[%s260] sm:%s252] %v261
                %v263 = vld [vmem:[%s259 + $0x24] sm:%s252]
                %264 = vst [vmem:[%s260 + $0xc] sm:%s252] %v263
                %v265 = vld [vmem:[%s259 + $0x48] sm:%s252]
                %266 = vst [vmem:[%s260 + $0x18] sm:%s252] %v265
                %v267 = vld [vmem:[%s259 + $0x6c] sm:%s252]
                %268 = vst [vmem:[%s260 + $0x24] sm:%s252] %v267
                %v269 = vld [vmem:[%s259 + $0x90] sm:%s252]
                %270 = vst [vmem:[%s260 + $0x30] sm:%s252] %v269
                %v271 = vld [vmem:[%s259 + $0xb4] sm:%s252]
                %272 = vst [vmem:[%s260 + $0x3c] sm:%s252] %v271
                %v273 = vld [vmem:[%s259 + $0xd8] sm:%s252]
                %274 = vst [vmem:[%s260 + $0x48] sm:%s252] %v273
                %v275 = vld [vmem:[%s259 + $0xfc] sm:%s252]
                %276 = vst [vmem:[%s260 + $0x54] sm:%s252] %v275
                %v277 = vld [vmem:[%s259 + $0x120] sm:%s252]
                %278 = vst [vmem:[%s260 + $0x60] sm:%s252] %v277
                %v279 = vld [vmem:[%s259 + $0x144] sm:%s252]
                %280 = vst [vmem:[%s260 + $0x6c] sm:%s252] %v279
                %v281 = vld [vmem:[%s259 + $0x168] sm:%s252]
                %282 = vst [vmem:[%s260 + $0x78] sm:%s252] %v281
                %v283 = vld [vmem:[%s259 + $0x18c] sm:%s252]
                %284 = vst [vmem:[%s260 + $0x84] sm:%s252] %v283
                %v285 = vld [vmem:[%s259 + $0x1b0] sm:%s252]
                %286 = vst [vmem:[%s260 + $0x90] sm:%s252] %v285
                %v287 = vld [vmem:[%s259 + $0x1d4] sm:%s252]
                %288 = vst [vmem:[%s260 + $0x9c] sm:%s252] %v287
                %v289 = vld [vmem:[%s259 + $0x1f8] sm:%s252]
                %290 = vst [vmem:[%s260 + $0xa8] sm:%s252] %v289
                %v291 = vld [vmem:[%s259 + $0x21c] sm:%s252]
                %292 = vst [vmem:[%s260 + $0xb4] sm:%s252] %v291
                %v293 = vld [vmem:[%s259 + $0x240] sm:%s252]
                %294 = vst [vmem:[%s260 + $0xc0] sm:%s252] %v293
                %v295 = vld [vmem:[%s259 + $0x264] sm:%s252]
                %296 = vst [vmem:[%s260 + $0xcc] sm:%s252] %v295
                %v297 = vld [vmem:[%s259 + $0x288] sm:%s252]
                %298 = vst [vmem:[%s260 + $0xd8] sm:%s252] %v297
                %v299 = vld [vmem:[%s259 + $0x2ac] sm:%s252]
                %300 = vst [vmem:[%s260 + $0xe4] sm:%s252] %v299
                %v301 = vld [vmem:[%s259 + $0x2d0] sm:%s252]
                %302 = vst [vmem:[%s260 + $0xf0] sm:%s252] %v301
                %v303 = vld [vmem:[%s259 + $0x2f4] sm:%s252]
                %304 = vst [vmem:[%s260 + $0xfc] sm:%s252] %v303
                %v305 = vld [vmem:[%s259 + $0x318] sm:%s252]
                %306 = vst [vmem:[%s260 + $0x108] sm:%s252] %v305
                %v307 = vld [vmem:[%s259 + $0x33c] sm:%s252]
                %308 = vst [vmem:[%s260 + $0x114] sm:%s252] %v307
                %v309 = vld [vmem:[%s259 + $0x360] sm:%s252]
                %310 = vst [vmem:[%s260 + $0x120] sm:%s252] %v309
                %v311 = vld [vmem:[%s259 + $0x384] sm:%s252]
                %312 = vst [vmem:[%s260 + $0x12c] sm:%s252] %v311
                %v313 = vld [vmem:[%s259 + $0x3a8] sm:%s252]
                %314 = vst [vmem:[%s260 + $0x138] sm:%s252] %v313
                %v315 = vld [vmem:[%s259 + $0x3cc] sm:%s252]
                %316 = vst [vmem:[%s260 + $0x144] sm:%s252] %v315
                %v317 = vld [vmem:[%s259 + $0x3f0] sm:%s252]
                %318 = vst [vmem:[%s260 + $0x150] sm:%s252] %v317
                %v319 = vld [vmem:[%s259 + $0x414] sm:%s252]
                %320 = vst [vmem:[%s260 + $0x15c] sm:%s252] %v319
                %v321 = vld [vmem:[%s259 + $0x438] sm:%s252]
                %322 = vst [vmem:[%s260 + $0x168] sm:%s252] %v321
                %v323 = vld [vmem:[%s259 + $0x45c] sm:%s252]
                %324 = vst [vmem:[%s260 + $0x174] sm:%s252] %v323
              $region40: #{up_forward.6} parent=27 // loop_footer
                %s258 = sadd.s32 1, %s254
              $region41: #{up_forward.6} parent=27 // loop_footer_branch
                %253 = sbr.rel target = $region37
              $region42: #{up_forward.6} parent=27 // loop_exit
                _
            $region28: #{up_forward.6} parent=23 // pred_fallthru
              _
          $region24: #{up_forward.6} parent=19 // pred_fallthru
            _
          %325 = vnop
        $region20: #{up_forward.6} parent=15 // pred_fallthru
          _
        // Predicated region
        $region43: #{up_forward.6} parent=15 // pred_check
          %p326 = pneg %p79
        $region44: #{up_forward.6} parent=15 // pred_check_branch
          %328 = sbr.rel (%p326) target = $region46
        $region45: #{up_forward.6} parent=15 // pred_region
          %s329 = smul.u32 48, %s19
          %p330 = scmp.lt.s32.totalorder %s329, 143
          %s331 = scalar_select %p330, %s329, 143
          %p332 = scmp.lt.s32.totalorder %s18, 0
          %s333 = scalar_select %p332, %s18, 0
          %s334 = sadd.s32 %s333, %s331
          %s335 = smul.addr %s334, 4
          %s336 = scalar_lea.vmem %s1, %s335
          %s337 = smul.u32 48, %s19
        $region46: #{up_forward.6} parent=15 // pred_fallthru
          _
      $region16: #{up_forward.6} parent=5 // pred_fallthru
        _
      %p338 = scmp.le.s32.totalorder 1, %s10
      %p339 = scmp.lt.s32.totalorder %s10, 7
      %p340 = pnand %p338, %p339
      %p341 = pneg %p340
      // Predicated region
      $region47: #{up_forward.6} parent=5 // pred_check
        _
      $region48: #{up_forward.6} parent=5 // pred_check_branch
        %343 = sbr.rel (%p340) target = $region50
      $region49: #{up_forward.6} parent=5 // pred_region
        %s344 = ssub.s32 %s10, 1
        %s345 = sand.u32 %s44, 1
        %s346 = sand.u32 %s44, 1
        %s347 = smul.addr %s346, 384
        %s348 = scalar_lea.vmem [#allocation3], %s347
        // Predicated region
        $region51: #{up_forward.6} parent=49 // pred_check
          %p349 = pneg %p57
        $region52: #{up_forward.6} parent=49 // pred_check_branch
          %351 = sbr.rel (%p349) target = $region54
        $region53: #{up_forward.6} parent=49 // pred_region
          _
        $region54: #{up_forward.6} parent=49 // pred_fallthru
          _
        %s352 = sand.u32 %s44, 1
        %s353 = sand.u32 %s44, 1
        %s354 = smul.addr %s353, 384
        %s355 = scalar_lea.vmem [#allocation3], %s354
        %p356 = pneg %p57
        %p357 = pneg %p54
        %s358 = smul.u32 48, %s22
        %p359 = scmp.lt.s32.totalorder %s358, 143
        %s360 = scalar_select %p359, %s358, 143
        %p361 = scmp.lt.s32.totalorder %s21, 0
        %s362 = scalar_select %p361, %s21, 0
        %s363 = sadd.s32 %s362, %s360
        %s364 = smul.addr %s363, 4
        %s365 = scalar_lea.vmem %s1, %s364
        %p366 = pneg %p85
        %p367 = pneg %p82
        %p368 = pneg %p113
        %p369 = pneg %p110
        %s370 = smul.u32 32, %s20
        %p371 = scmp.lt.s32.totalorder %s370, 63
        %s372 = scalar_select %p371, %s370, 63
        %p373 = scmp.lt.s32.totalorder %s21, 0
        %s374 = scalar_select %p373, %s21, 0
        %s375 = sadd.s32 %s374, %s372
        %s376 = smul.addr %s375, 8
        %s377 = scalar_lea.vmem %s2, %s376
        %p378 = pneg %p141
        %p379 = pneg %p138
        %p380 = scmp.lt.s32.totalorder %s20, 1
        %s381 = scalar_select %p380, %s20, 1
        %p382 = scmp.lt.s32.totalorder %s21, 0
        %s383 = scalar_select %p382, %s21, 0
        %s384 = sadd.s32 %s383, %s381
        %s385 = smul.addr %s384, 2
        %s386 = scalar_lea.vmem %s3, %s385
        %s387 = smul.u32 32, %s20
        %s388 = smul.u32 3, %s22
        %s389 = smul.u32 48, %s22
        %p390 = scmp.lt.s32.totalorder %s389, 143
        %s391 = scalar_select %p390, %s389, 143
        %p392 = scmp.lt.s32.totalorder %s21, 0
        %s393 = scalar_select %p392, %s21, 0
        %s394 = sadd.s32 %s393, %s391
        %s395 = smul.addr %s394, 4
        %s396 = scalar_lea.vmem %s1, %s395
        %s397 = smul.u32 48, %s22
        %s398 = smul.u32 32, %s20
        %p399 = scmp.lt.s32.totalorder %s398, 63
        %s400 = scalar_select %p399, %s398, 63
        %p401 = scmp.lt.s32.totalorder %s21, 0
        %s402 = scalar_select %p401, %s21, 0
        %s403 = sadd.s32 %s402, %s400
        %s404 = smul.addr %s403, 8
        %s405 = scalar_lea.vmem %s2, %s404
        %s406 = smul.u32 32, %s20
        %p407 = scmp.lt.s32.totalorder %s20, 1
        %s408 = scalar_select %p407, %s20, 1
        %p409 = scmp.lt.s32.totalorder %s21, 0
        %s410 = scalar_select %p409, %s21, 0
        %s411 = sadd.s32 %s410, %s408
        %s412 = smul.addr %s411, 2
        %s413 = scalar_lea.vmem %s3, %s412
        %p414 = scmp.eq.s32.totalorder %s22, 0
        // Predicated region
        $region55: #{up_forward.6} parent=49 // pred_check
          %p415 = pneg %p414
        $region56: #{up_forward.6} parent=49 // pred_check_branch
          %417 = sbr.rel (%p415) target = $region58
        $region57: #{up_forward.6} parent=49 // pred_region
          %418 = vst [vmem:[#allocation2] sm:$0xff] 0.0
          %419 = vst [vmem:[#allocation2 + $0x8] sm:$0xff] 0.0
          %420 = vst [vmem:[#allocation2 + $0x10] sm:$0xff] 0.0
          %421 = vst [vmem:[#allocation2 + $0x18] sm:$0xff] 0.0
          %422 = vst [vmem:[#allocation2 + $0x20] sm:$0xff] 0.0
          %423 = vst [vmem:[#allocation2 + $0x28] sm:$0xff] 0.0
          %424 = vst [vmem:[#allocation2 + $0x30] sm:$0xff] 0.0
          %425 = vst [vmem:[#allocation2 + $0x38] sm:$0xff] 0.0
          %426 = vst [vmem:[#allocation2 + $0x40] sm:$0xff] 0.0
          %427 = vst [vmem:[#allocation2 + $0x48] sm:$0xff] 0.0
          %428 = vst [vmem:[#allocation2 + $0x50] sm:$0xff] 0.0
          %429 = vst [vmem:[#allocation2 + $0x58] sm:$0xff] 0.0
          %430 = vst [vmem:[#allocation2 + $0x60] sm:$0xff] 0.0
          %431 = vst [vmem:[#allocation2 + $0x68] sm:$0xff] 0.0
          %432 = vst [vmem:[#allocation2 + $0x70] sm:$0xff] 0.0
          %433 = vst [vmem:[#allocation2 + $0x78] sm:$0xff] 0.0
          %434 = vst [vmem:[#allocation2 + $0x80] sm:$0xff] 0.0
          %435 = vst [vmem:[#allocation2 + $0x88] sm:$0xff] 0.0
          %436 = vst [vmem:[#allocation2 + $0x90] sm:$0xff] 0.0
          %437 = vst [vmem:[#allocation2 + $0x98] sm:$0xff] 0.0
          %438 = vst [vmem:[#allocation2 + $0xa0] sm:$0xff] 0.0
          %439 = vst [vmem:[#allocation2 + $0xa8] sm:$0xff] 0.0
          %440 = vst [vmem:[#allocation2 + $0xb0] sm:$0xff] 0.0
          %441 = vst [vmem:[#allocation2 + $0xb8] sm:$0xff] 0.0
          %442 = vst [vmem:[#allocation2 + $0xc0] sm:$0xff] 0.0
          %443 = vst [vmem:[#allocation2 + $0xc8] sm:$0xff] 0.0
          %444 = vst [vmem:[#allocation2 + $0xd0] sm:$0xff] 0.0
          %445 = vst [vmem:[#allocation2 + $0xd8] sm:$0xff] 0.0
          %446 = vst [vmem:[#allocation2 + $0xe0] sm:$0xff] 0.0
          %447 = vst [vmem:[#allocation2 + $0xe8] sm:$0xff] 0.0
          %448 = vst [vmem:[#allocation2 + $0xf0] sm:$0xff] 0.0
          %449 = vst [vmem:[#allocation2 + $0xf8] sm:$0xff] 0.0
        $region58: #{up_forward.6} parent=49 // pred_fallthru
          _
        %v450 = vld [vmem:[#allocation2] sm:$0xff]
        %v451 = vld [vmem:[#allocation2 + $0x8] sm:$0xff]
        %v452 = vld [vmem:[#allocation2 + $0x10] sm:$0xff]
        %v453 = vld [vmem:[#allocation2 + $0x18] sm:$0xff]
        %v454 = vld [vmem:[#allocation2 + $0x20] sm:$0xff]
        %v455 = vld [vmem:[#allocation2 + $0x28] sm:$0xff]
        %v456 = vld [vmem:[#allocation2 + $0x30] sm:$0xff]
        %v457 = vld [vmem:[#allocation2 + $0x38] sm:$0xff]
        %v458 = vld [vmem:[#allocation2 + $0x40] sm:$0xff]
        %v459 = vld [vmem:[#allocation2 + $0x48] sm:$0xff]
        %v460 = vld [vmem:[#allocation2 + $0x50] sm:$0xff]
        %v461 = vld [vmem:[#allocation2 + $0x58] sm:$0xff]
        %v462 = vld [vmem:[#allocation2 + $0x60] sm:$0xff]
        %v463 = vld [vmem:[#allocation2 + $0x68] sm:$0xff]
        %v464 = vld [vmem:[#allocation2 + $0x70] sm:$0xff]
        %v465 = vld [vmem:[#allocation2 + $0x78] sm:$0xff]
        %v466 = vld [vmem:[#allocation2 + $0x80] sm:$0xff]
        %v467 = vld [vmem:[#allocation2 + $0x88] sm:$0xff]
        %v468 = vld [vmem:[#allocation2 + $0x90] sm:$0xff]
        %v469 = vld [vmem:[#allocation2 + $0x98] sm:$0xff]
        %v470 = vld [vmem:[#allocation2 + $0xa0] sm:$0xff]
        %v471 = vld [vmem:[#allocation2 + $0xa8] sm:$0xff]
        %v472 = vld [vmem:[#allocation2 + $0xb0] sm:$0xff]
        %v473 = vld [vmem:[#allocation2 + $0xb8] sm:$0xff]
        %v474 = vld [vmem:[#allocation2 + $0xc0] sm:$0xff]
        %v475 = vld [vmem:[#allocation2 + $0xc8] sm:$0xff]
        %v476 = vld [vmem:[#allocation2 + $0xd0] sm:$0xff]
        %v477 = vld [vmem:[#allocation2 + $0xd8] sm:$0xff]
        %v478 = vld [vmem:[#allocation2 + $0xe0] sm:$0xff]
        %v479 = vld [vmem:[#allocation2 + $0xe8] sm:$0xff]
        %v480 = vld [vmem:[#allocation2 + $0xf0] sm:$0xff]
        %v481 = vld [vmem:[#allocation2 + $0xf8] sm:$0xff]
        %v482 = vld [vmem:[%s348] sm:$0xff]
        %v483 = vld [vmem:[%s348 + $0x8] sm:$0xf]
        %v484 = vld [vmem:[%s348 + $0xc] sm:$0xff]
        %v485 = vld [vmem:[%s348 + $0x14] sm:$0xf]
        %v486 = vld [vmem:[%s348 + $0x18] sm:$0xff]
        %v487 = vld [vmem:[%s348 + $0x20] sm:$0xf]
        %v488 = vld [vmem:[%s348 + $0x24] sm:$0xff]
        %v489 = vld [vmem:[%s348 + $0x2c] sm:$0xf]
        %v490 = vld [vmem:[%s348 + $0x30] sm:$0xff]
        %v491 = vld [vmem:[%s348 + $0x38] sm:$0xf]
        %v492 = vld [vmem:[%s348 + $0x3c] sm:$0xff]
        %v493 = vld [vmem:[%s348 + $0x44] sm:$0xf]
        %v494 = vld [vmem:[%s348 + $0x48] sm:$0xff]
        %v495 = vld [vmem:[%s348 + $0x50] sm:$0xf]
        %v496 = vld [vmem:[%s348 + $0x54] sm:$0xff]
        %v497 = vld [vmem:[%s348 + $0x5c] sm:$0xf]
        %v498 = vld [vmem:[%s348 + $0x60] sm:$0xff]
        %v499 = vld [vmem:[%s348 + $0x68] sm:$0xf]
        %v500 = vld [vmem:[%s348 + $0x6c] sm:$0xff]
        %v501 = vld [vmem:[%s348 + $0x74] sm:$0xf]
        %v502 = vld [vmem:[%s348 + $0x78] sm:$0xff]
        %v503 = vld [vmem:[%s348 + $0x80] sm:$0xf]
        %v504 = vld [vmem:[%s348 + $0x84] sm:$0xff]
        %v505 = vld [vmem:[%s348 + $0x8c] sm:$0xf]
        %v506 = vld [vmem:[%s348 + $0x90] sm:$0xff]
        %v507 = vld [vmem:[%s348 + $0x98] sm:$0xf]
        %v508 = vld [vmem:[%s348 + $0x9c] sm:$0xff]
        %v509 = vld [vmem:[%s348 + $0xa4] sm:$0xf]
        %v510 = vld [vmem:[%s348 + $0xa8] sm:$0xff]
        %v511 = vld [vmem:[%s348 + $0xb0] sm:$0xf]
        %v512 = vld [vmem:[%s348 + $0xb4] sm:$0xff]
        %v513 = vld [vmem:[%s348 + $0xbc] sm:$0xf]
        %v514 = vld [vmem:[%s348 + $0xc0] sm:$0xff]
        %v515 = vld [vmem:[%s348 + $0xc8] sm:$0xf]
        %v516 = vld [vmem:[%s348 + $0xcc] sm:$0xff]
        %v517 = vld [vmem:[%s348 + $0xd4] sm:$0xf]
        %v518 = vld [vmem:[%s348 + $0xd8] sm:$0xff]
        %v519 = vld [vmem:[%s348 + $0xe0] sm:$0xf]
        %v520 = vld [vmem:[%s348 + $0xe4] sm:$0xff]
        %v521 = vld [vmem:[%s348 + $0xec] sm:$0xf]
        %v522 = vld [vmem:[%s348 + $0xf0] sm:$0xff]
        %v523 = vld [vmem:[%s348 + $0xf8] sm:$0xf]
        %v524 = vld [vmem:[%s348 + $0xfc] sm:$0xff]
        %v525 = vld [vmem:[%s348 + $0x104] sm:$0xf]
        %v526 = vld [vmem:[%s348 + $0x108] sm:$0xff]
        %v527 = vld [vmem:[%s348 + $0x110] sm:$0xf]
        %v528 = vld [vmem:[%s348 + $0x114] sm:$0xff]
        %v529 = vld [vmem:[%s348 + $0x11c] sm:$0xf]
        %v530 = vld [vmem:[%s348 + $0x120] sm:$0xff]
        %v531 = vld [vmem:[%s348 + $0x128] sm:$0xf]
        %v532 = vld [vmem:[%s348 + $0x12c] sm:$0xff]
        %v533 = vld [vmem:[%s348 + $0x134] sm:$0xf]
        %v534 = vld [vmem:[%s348 + $0x138] sm:$0xff]
        %v535 = vld [vmem:[%s348 + $0x140] sm:$0xf]
        %v536 = vld [vmem:[%s348 + $0x144] sm:$0xff]
        %v537 = vld [vmem:[%s348 + $0x14c] sm:$0xf]
        %v538 = vld [vmem:[%s348 + $0x150] sm:$0xff]
        %v539 = vld [vmem:[%s348 + $0x158] sm:$0xf]
        %v540 = vld [vmem:[%s348 + $0x15c] sm:$0xff]
        %v541 = vld [vmem:[%s348 + $0x164] sm:$0xf]
        %v542 = vld [vmem:[%s348 + $0x168] sm:$0xff]
        %v543 = vld [vmem:[%s348 + $0x170] sm:$0xf]
        %v544 = vld [vmem:[%s348 + $0x174] sm:$0xff]
        %v545 = vld [vmem:[%s348 + $0x17c] sm:$0xf]
        %v546 = vld [vmem:[%s396] sm:$0xf]
        %v547 = vld [vmem:[%s396 + $0x4] sm:$0xf]
        %v548 = vld [vmem:[%s396 + $0x8] sm:$0xf]
        %v549 = vld [vmem:[%s396 + $0xc] sm:$0xf]
        %v550 = vld [vmem:[%s396 + $0x10] sm:$0xf]
        %v551 = vld [vmem:[%s396 + $0x14] sm:$0xf]
        %v552 = vld [vmem:[%s396 + $0x18] sm:$0xf]
        %v553 = vld [vmem:[%s396 + $0x1c] sm:$0xf]
        %v554 = vld [vmem:[%s396 + $0x20] sm:$0xf]
        %v555 = vld [vmem:[%s396 + $0x24] sm:$0xf]
        %v556 = vld [vmem:[%s396 + $0x28] sm:$0xf]
        %v557 = vld [vmem:[%s396 + $0x2c] sm:$0xf]
        %v558 = vld [vmem:[%s396 + $0x30] sm:$0xf]
        %v559 = vld [vmem:[%s396 + $0x34] sm:$0xf]
        %v560 = vld [vmem:[%s396 + $0x38] sm:$0xf]
        %v561 = vld [vmem:[%s396 + $0x3c] sm:$0xf]
        %v562 = vld [vmem:[%s396 + $0x40] sm:$0xf]
        %v563 = vld [vmem:[%s396 + $0x44] sm:$0xf]
        %v564 = vld [vmem:[%s396 + $0x48] sm:$0xf]
        %v565 = vld [vmem:[%s396 + $0x4c] sm:$0xf]
        %v566 = vld [vmem:[%s396 + $0x50] sm:$0xf]
        %v567 = vld [vmem:[%s396 + $0x54] sm:$0xf]
        %v568 = vld [vmem:[%s396 + $0x58] sm:$0xf]
        %v569 = vld [vmem:[%s396 + $0x5c] sm:$0xf]
        %v570 = vld [vmem:[%s396 + $0x60] sm:$0xf]
        %v571 = vld [vmem:[%s396 + $0x64] sm:$0xf]
        %v572 = vld [vmem:[%s396 + $0x68] sm:$0xf]
        %v573 = vld [vmem:[%s396 + $0x6c] sm:$0xf]
        %v574 = vld [vmem:[%s396 + $0x70] sm:$0xf]
        %v575 = vld [vmem:[%s396 + $0x74] sm:$0xf]
        %v576 = vld [vmem:[%s396 + $0x78] sm:$0xf]
        %v577 = vld [vmem:[%s396 + $0x7c] sm:$0xf]
        %v578 = vld [vmem:[%s396 + $0x80] sm:$0xf]
        %v579 = vld [vmem:[%s396 + $0x84] sm:$0xf]
        %v580 = vld [vmem:[%s396 + $0x88] sm:$0xf]
        %v581 = vld [vmem:[%s396 + $0x8c] sm:$0xf]
        %v582 = vld [vmem:[%s396 + $0x90] sm:$0xf]
        %v583 = vld [vmem:[%s396 + $0x94] sm:$0xf]
        %v584 = vld [vmem:[%s396 + $0x98] sm:$0xf]
        %v585 = vld [vmem:[%s396 + $0x9c] sm:$0xf]
        %v586 = vld [vmem:[%s396 + $0xa0] sm:$0xf]
        %v587 = vld [vmem:[%s396 + $0xa4] sm:$0xf]
        %v588 = vld [vmem:[%s396 + $0xa8] sm:$0xf]
        %v589 = vld [vmem:[%s396 + $0xac] sm:$0xf]
        %v590 = vld [vmem:[%s396 + $0xb0] sm:$0xf]
        %v591 = vld [vmem:[%s396 + $0xb4] sm:$0xf]
        %v592 = vld [vmem:[%s396 + $0xb8] sm:$0xf]
        %v593 = vld [vmem:[%s396 + $0xbc] sm:$0xf]
        %v658 = vunpack.c.l.b16 %v482
        %v659 = vunpack.c.h.b16 %v482
        %v660 = vunpack.c.l.b16 %v483
        %v661 = vunpack.c.l.b16 %v484
        %v662 = vunpack.c.h.b16 %v484
        %v663 = vunpack.c.l.b16 %v485
        %v664 = vunpack.c.l.b16 %v486
        %v665 = vunpack.c.h.b16 %v486
        %v666 = vunpack.c.l.b16 %v487
        %v667 = vunpack.c.l.b16 %v488
        %v668 = vunpack.c.h.b16 %v488
        %v669 = vunpack.c.l.b16 %v489
        %v670 = vunpack.c.l.b16 %v490
        %v671 = vunpack.c.h.b16 %v490
        %v672 = vunpack.c.l.b16 %v491
        %v673 = vunpack.c.l.b16 %v492
        %v674 = vunpack.c.h.b16 %v492
        %v675 = vunpack.c.l.b16 %v493
        %v676 = vunpack.c.l.b16 %v494
        %v677 = vunpack.c.h.b16 %v494
        %v678 = vunpack.c.l.b16 %v495
        %v679 = vunpack.c.l.b16 %v496
        %v680 = vunpack.c.h.b16 %v496
        %v681 = vunpack.c.l.b16 %v497
        %v682 = vunpack.c.l.b16 %v498
        %v683 = vunpack.c.h.b16 %v498
        %v684 = vunpack.c.l.b16 %v499
        %v685 = vunpack.c.l.b16 %v500
        %v686 = vunpack.c.h.b16 %v500
        %v687 = vunpack.c.l.b16 %v501
        %v688 = vunpack.c.l.b16 %v502
        %v689 = vunpack.c.h.b16 %v502
        %v690 = vunpack.c.l.b16 %v503
        %v691 = vunpack.c.l.b16 %v504
        %v692 = vunpack.c.h.b16 %v504
        %v693 = vunpack.c.l.b16 %v505
        %v694 = vunpack.c.l.b16 %v506
        %v695 = vunpack.c.h.b16 %v506
        %v696 = vunpack.c.l.b16 %v507
        %v697 = vunpack.c.l.b16 %v508
        %v698 = vunpack.c.h.b16 %v508
        %v699 = vunpack.c.l.b16 %v509
        %v700 = vunpack.c.l.b16 %v510
        %v701 = vunpack.c.h.b16 %v510
        %v702 = vunpack.c.l.b16 %v511
        %v703 = vunpack.c.l.b16 %v512
        %v704 = vunpack.c.h.b16 %v512
        %v705 = vunpack.c.l.b16 %v513
        %v706 = vunpack.c.l.b16 %v514
        %v707 = vunpack.c.h.b16 %v514
        %v708 = vunpack.c.l.b16 %v515
        %v709 = vunpack.c.l.b16 %v516
        %v710 = vunpack.c.h.b16 %v516
        %v711 = vunpack.c.l.b16 %v517
        %v712 = vunpack.c.l.b16 %v518
        %v713 = vunpack.c.h.b16 %v518
        %v714 = vunpack.c.l.b16 %v519
        %v715 = vunpack.c.l.b16 %v520
        %v716 = vunpack.c.h.b16 %v520
        %v717 = vunpack.c.l.b16 %v521
        %v718 = vunpack.c.l.b16 %v522
        %v719 = vunpack.c.h.b16 %v522
        %v720 = vunpack.c.l.b16 %v523
        %v721 = vunpack.c.l.b16 %v524
        %v722 = vunpack.c.h.b16 %v524
        %v723 = vunpack.c.l.b16 %v525
        %v724 = vunpack.c.l.b16 %v526
        %v725 = vunpack.c.h.b16 %v526
        %v726 = vunpack.c.l.b16 %v527
        %v727 = vunpack.c.l.b16 %v528
        %v728 = vunpack.c.h.b16 %v528
        %v729 = vunpack.c.l.b16 %v529
        %v730 = vunpack.c.l.b16 %v530
        %v731 = vunpack.c.h.b16 %v530
        %v732 = vunpack.c.l.b16 %v531
        %v733 = vunpack.c.l.b16 %v532
        %v734 = vunpack.c.h.b16 %v532
        %v735 = vunpack.c.l.b16 %v533
        %v736 = vunpack.c.l.b16 %v534
        %v737 = vunpack.c.h.b16 %v534
        %v738 = vunpack.c.l.b16 %v535
        %v739 = vunpack.c.l.b16 %v536
        %v740 = vunpack.c.h.b16 %v536
        %v741 = vunpack.c.l.b16 %v537
        %v742 = vunpack.c.l.b16 %v538
        %v743 = vunpack.c.h.b16 %v538
        %v744 = vunpack.c.l.b16 %v539
        %v745 = vunpack.c.l.b16 %v540
        %v746 = vunpack.c.h.b16 %v540
        %v747 = vunpack.c.l.b16 %v541
        %v748 = vunpack.c.l.b16 %v542
        %v749 = vunpack.c.h.b16 %v542
        %v750 = vunpack.c.l.b16 %v543
        %v751 = vunpack.c.l.b16 %v544
        %v752 = vunpack.c.h.b16 %v544
        %v753 = vunpack.c.l.b16 %v545
        %v754 = vpack.c.b16 %v661, %v658
        %v755 = vpack.c.b16 %v662, %v659
        %v756 = vpack.c.b16 %v663, %v660
        %v757 = vpack.c.b16 %v667, %v664
        %v758 = vpack.c.b16 %v668, %v665
        %v759 = vpack.c.b16 %v669, %v666
        %v760 = vpack.c.b16 %v673, %v670
        %v761 = vpack.c.b16 %v674, %v671
        %v762 = vpack.c.b16 %v675, %v672
        %v763 = vpack.c.b16 %v679, %v676
        %v764 = vpack.c.b16 %v680, %v677
        %v765 = vpack.c.b16 %v681, %v678
        %v766 = vpack.c.b16 %v685, %v682
        %v767 = vpack.c.b16 %v686, %v683
        %v768 = vpack.c.b16 %v687, %v684
        %v769 = vpack.c.b16 %v691, %v688
        %v770 = vpack.c.b16 %v692, %v689
        %v771 = vpack.c.b16 %v693, %v690
        %v772 = vpack.c.b16 %v697, %v694
        %v773 = vpack.c.b16 %v698, %v695
        %v774 = vpack.c.b16 %v699, %v696
        %v775 = vpack.c.b16 %v703, %v700
        %v776 = vpack.c.b16 %v704, %v701
        %v777 = vpack.c.b16 %v705, %v702
        %v778 = vpack.c.b16 %v709, %v706
        %v779 = vpack.c.b16 %v710, %v707
        %v780 = vpack.c.b16 %v711, %v708
        %v781 = vpack.c.b16 %v715, %v712
        %v782 = vpack.c.b16 %v716, %v713
        %v783 = vpack.c.b16 %v717, %v714
        %v784 = vpack.c.b16 %v721, %v718
        %v785 = vpack.c.b16 %v722, %v719
        %v786 = vpack.c.b16 %v723, %v720
        %v787 = vpack.c.b16 %v727, %v724
        %v788 = vpack.c.b16 %v728, %v725
        %v789 = vpack.c.b16 %v729, %v726
        %v790 = vpack.c.b16 %v733, %v730
        %v791 = vpack.c.b16 %v734, %v731
        %v792 = vpack.c.b16 %v735, %v732
        %v793 = vpack.c.b16 %v739, %v736
        %v794 = vpack.c.b16 %v740, %v737
        %v795 = vpack.c.b16 %v741, %v738
        %v796 = vpack.c.b16 %v745, %v742
        %v797 = vpack.c.b16 %v746, %v743
        %v798 = vpack.c.b16 %v747, %v744
        %v799 = vpack.c.b16 %v751, %v748
        %v800 = vpack.c.b16 %v752, %v749
        %v801 = vpack.c.b16 %v753, %v750
        %v898 = vunpack.c.l.b16 %v546
        %v899 = vunpack.c.l.b16 %v547
        %v900 = vunpack.c.l.b16 %v548
        %v901 = vunpack.c.l.b16 %v549
        %v902 = vunpack.c.l.b16 %v550
        %v903 = vunpack.c.l.b16 %v551
        %v904 = vunpack.c.l.b16 %v552
        %v905 = vunpack.c.l.b16 %v553
        %v906 = vunpack.c.l.b16 %v554
        %v907 = vunpack.c.l.b16 %v555
        %v908 = vunpack.c.l.b16 %v556
        %v909 = vunpack.c.l.b16 %v557
        %v910 = vunpack.c.l.b16 %v558
        %v911 = vunpack.c.l.b16 %v559
        %v912 = vunpack.c.l.b16 %v560
        %v913 = vunpack.c.l.b16 %v561
        %v914 = vunpack.c.l.b16 %v562
        %v915 = vunpack.c.l.b16 %v563
        %v916 = vunpack.c.l.b16 %v564
        %v917 = vunpack.c.l.b16 %v565
        %v918 = vunpack.c.l.b16 %v566
        %v919 = vunpack.c.l.b16 %v567
        %v920 = vunpack.c.l.b16 %v568
        %v921 = vunpack.c.l.b16 %v569
        %v922 = vunpack.c.l.b16 %v570
        %v923 = vunpack.c.l.b16 %v571
        %v924 = vunpack.c.l.b16 %v572
        %v925 = vunpack.c.l.b16 %v573
        %v926 = vunpack.c.l.b16 %v574
        %v927 = vunpack.c.l.b16 %v575
        %v928 = vunpack.c.l.b16 %v576
        %v929 = vunpack.c.l.b16 %v577
        %v930 = vunpack.c.l.b16 %v578
        %v931 = vunpack.c.l.b16 %v579
        %v932 = vunpack.c.l.b16 %v580
        %v933 = vunpack.c.l.b16 %v581
        %v934 = vunpack.c.l.b16 %v582
        %v935 = vunpack.c.l.b16 %v583
        %v936 = vunpack.c.l.b16 %v584
        %v937 = vunpack.c.l.b16 %v585
        %v938 = vunpack.c.l.b16 %v586
        %v939 = vunpack.c.l.b16 %v587
        %v940 = vunpack.c.l.b16 %v588
        %v941 = vunpack.c.l.b16 %v589
        %v942 = vunpack.c.l.b16 %v590
        %v943 = vunpack.c.l.b16 %v591
        %v944 = vunpack.c.l.b16 %v592
        %v945 = vunpack.c.l.b16 %v593
        %v946 = vpack.c.b16 %v899, %v898
        %v947 = vpack.c.b16 %v901, %v900
        %v948 = vpack.c.b16 %v903, %v902
        %v949 = vpack.c.b16 %v905, %v904
        %v950 = vpack.c.b16 %v907, %v906
        %v951 = vpack.c.b16 %v909, %v908
        %v952 = vpack.c.b16 %v911, %v910
        %v953 = vpack.c.b16 %v913, %v912
        %v954 = vpack.c.b16 %v915, %v914
        %v955 = vpack.c.b16 %v917, %v916
        %v956 = vpack.c.b16 %v919, %v918
        %v957 = vpack.c.b16 %v921, %v920
        %v958 = vpack.c.b16 %v923, %v922
        %v959 = vpack.c.b16 %v925, %v924
        %v960 = vpack.c.b16 %v927, %v926
        %v961 = vpack.c.b16 %v929, %v928
        %v962 = vpack.c.b16 %v931, %v930
        %v963 = vpack.c.b16 %v933, %v932
        %v964 = vpack.c.b16 %v935, %v934
        %v965 = vpack.c.b16 %v937, %v936
        %v966 = vpack.c.b16 %v939, %v938
        %v967 = vpack.c.b16 %v941, %v940
        %v968 = vpack.c.b16 %v943, %v942
        %v969 = vpack.c.b16 %v945, %v944
        %994 = vmatpush.bf16.msra.mxu0 %v953
        %995 = vmatpush.bf16.msra.mxu0 %v952
        %996 = vmatpush.bf16.msra.mxu0 %v951
        %997 = vmatpush.bf16.msra.mxu0 %v950
        %998 = vmatpush.bf16.msra.mxu0 %v949
        %999 = vmatpush.bf16.msra.mxu0 %v948
        %1000 = vmatpush.bf16.msra.mxu0 %v947
        %1001 = vmatpush.bf16.msra.mxu0 %v946
        %1002 = vmatmul.bf16.gmra.mxu0 %v754
        %v1003 = vpop.f32.mrf.mxu0
        %v1004 = vadd.f32 0.0, %v1003
        %v1005 = vpop.f32.mrf.mxu0
        %v1006 = vadd.f32 0.0, %v1005
        %1007 = vmatmul.bf16.gmra.mxu0 %v757
        %v1008 = vpop.f32.mrf.mxu0
        %v1009 = vadd.f32 0.0, %v1008
        %v1010 = vpop.f32.mrf.mxu0
        %v1011 = vadd.f32 0.0, %v1010
        %1012 = vmatmul.bf16.gmra.mxu0 %v760
        %v1013 = vpop.f32.mrf.mxu0
        %v1014 = vadd.f32 0.0, %v1013
        %v1015 = vpop.f32.mrf.mxu0
        %v1016 = vadd.f32 0.0, %v1015
        %1017 = vmatmul.bf16.gmra.mxu0 %v763
        %v1018 = vpop.f32.mrf.mxu0
        %v1019 = vadd.f32 0.0, %v1018
        %v1020 = vpop.f32.mrf.mxu0
        %v1021 = vadd.f32 0.0, %v1020
        %1022 = vmatmul.bf16.gmra.mxu0 %v766
        %v1023 = vpop.f32.mrf.mxu0
        %v1024 = vadd.f32 0.0, %v1023
        %v1025 = vpop.f32.mrf.mxu0
        %v1026 = vadd.f32 0.0, %v1025
        %1027 = vmatmul.bf16.gmra.mxu0 %v769
        %v1028 = vpop.f32.mrf.mxu0
        %v1029 = vadd.f32 0.0, %v1028
        %v1030 = vpop.f32.mrf.mxu0
        %v1031 = vadd.f32 0.0, %v1030
        %1032 = vmatmul.bf16.gmra.mxu0 %v772
        %v1033 = vpop.f32.mrf.mxu0
        %v1034 = vadd.f32 0.0, %v1033
        %v1035 = vpop.f32.mrf.mxu0
        %v1036 = vadd.f32 0.0, %v1035
        %1037 = vmatmul.bf16.gmra.mxu0 %v775
        %v1038 = vpop.f32.mrf.mxu0
        %v1039 = vadd.f32 0.0, %v1038
        %v1040 = vpop.f32.mrf.mxu0
        %v1041 = vadd.f32 0.0, %v1040
        %1042 = vmatmul.bf16.gmra.mxu0 %v778
        %v1043 = vpop.f32.mrf.mxu0
        %v1044 = vadd.f32 0.0, %v1043
        %v1045 = vpop.f32.mrf.mxu0
        %v1046 = vadd.f32 0.0, %v1045
        %1047 = vmatmul.bf16.gmra.mxu0 %v781
        %v1048 = vpop.f32.mrf.mxu0
        %v1049 = vadd.f32 0.0, %v1048
        %v1050 = vpop.f32.mrf.mxu0
        %v1051 = vadd.f32 0.0, %v1050
        %1052 = vmatmul.bf16.gmra.mxu0 %v784
        %v1053 = vpop.f32.mrf.mxu0
        %v1054 = vadd.f32 0.0, %v1053
        %v1055 = vpop.f32.mrf.mxu0
        %v1056 = vadd.f32 0.0, %v1055
        %1057 = vmatmul.bf16.gmra.mxu0 %v787
        %v1058 = vpop.f32.mrf.mxu0
        %v1059 = vadd.f32 0.0, %v1058
        %v1060 = vpop.f32.mrf.mxu0
        %v1061 = vadd.f32 0.0, %v1060
        %1062 = vmatmul.bf16.gmra.mxu0 %v790
        %v1063 = vpop.f32.mrf.mxu0
        %v1064 = vadd.f32 0.0, %v1063
        %v1065 = vpop.f32.mrf.mxu0
        %v1066 = vadd.f32 0.0, %v1065
        %1067 = vmatmul.bf16.gmra.mxu0 %v793
        %v1068 = vpop.f32.mrf.mxu0
        %v1069 = vadd.f32 0.0, %v1068
        %v1070 = vpop.f32.mrf.mxu0
        %v1071 = vadd.f32 0.0, %v1070
        %1072 = vmatmul.bf16.gmra.mxu0 %v796
        %v1073 = vpop.f32.mrf.mxu0
        %v1074 = vadd.f32 0.0, %v1073
        %v1075 = vpop.f32.mrf.mxu0
        %v1076 = vadd.f32 0.0, %v1075
        %1077 = vmatmul.bf16.gmra.mxu0 %v799
        %v1078 = vpop.f32.mrf.mxu0
        %v1079 = vadd.f32 0.0, %v1078
        %v1080 = vpop.f32.mrf.mxu0
        %v1081 = vadd.f32 0.0, %v1080
        %1082 = vdwg.mxu0
        %1083 = vmatpush.bf16.msra.mxu0 %v961
        %1084 = vmatpush.bf16.msra.mxu0 %v960
        %1085 = vmatpush.bf16.msra.mxu0 %v959
        %1086 = vmatpush.bf16.msra.mxu0 %v958
        %1087 = vmatpush.bf16.msra.mxu0 %v957
        %1088 = vmatpush.bf16.msra.mxu0 %v956
        %1089 = vmatpush.bf16.msra.mxu0 %v955
        %1090 = vmatpush.bf16.msra.mxu0 %v954
        %1091 = vmatmul.bf16.gmra.mxu0 %v755
        %v1092 = vpop.f32.mrf.mxu0
        %v1093 = vadd.f32 %v1004, %v1092
        %v1094 = vpop.f32.mrf.mxu0
        %v1095 = vadd.f32 %v1006, %v1094
        %1096 = vmatmul.bf16.gmra.mxu0 %v758
        %v1097 = vpop.f32.mrf.mxu0
        %v1098 = vadd.f32 %v1009, %v1097
        %v1099 = vpop.f32.mrf.mxu0
        %v1100 = vadd.f32 %v1011, %v1099
        %1101 = vmatmul.bf16.gmra.mxu0 %v761
        %v1102 = vpop.f32.mrf.mxu0
        %v1103 = vadd.f32 %v1014, %v1102
        %v1104 = vpop.f32.mrf.mxu0
        %v1105 = vadd.f32 %v1016, %v1104
        %1106 = vmatmul.bf16.gmra.mxu0 %v764
        %v1107 = vpop.f32.mrf.mxu0
        %v1108 = vadd.f32 %v1019, %v1107
        %v1109 = vpop.f32.mrf.mxu0
        %v1110 = vadd.f32 %v1021, %v1109
        %1111 = vmatmul.bf16.gmra.mxu0 %v767
        %v1112 = vpop.f32.mrf.mxu0
        %v1113 = vadd.f32 %v1024, %v1112
        %v1114 = vpop.f32.mrf.mxu0
        %v1115 = vadd.f32 %v1026, %v1114
        %1116 = vmatmul.bf16.gmra.mxu0 %v770
        %v1117 = vpop.f32.mrf.mxu0
        %v1118 = vadd.f32 %v1029, %v1117
        %v1119 = vpop.f32.mrf.mxu0
        %v1120 = vadd.f32 %v1031, %v1119
        %1121 = vmatmul.bf16.gmra.mxu0 %v773
        %v1122 = vpop.f32.mrf.mxu0
        %v1123 = vadd.f32 %v1034, %v1122
        %v1124 = vpop.f32.mrf.mxu0
        %v1125 = vadd.f32 %v1036, %v1124
        %1126 = vmatmul.bf16.gmra.mxu0 %v776
        %v1127 = vpop.f32.mrf.mxu0
        %v1128 = vadd.f32 %v1039, %v1127
        %v1129 = vpop.f32.mrf.mxu0
        %v1130 = vadd.f32 %v1041, %v1129
        %1131 = vmatmul.bf16.gmra.mxu0 %v779
        %v1132 = vpop.f32.mrf.mxu0
        %v1133 = vadd.f32 %v1044, %v1132
        %v1134 = vpop.f32.mrf.mxu0
        %v1135 = vadd.f32 %v1046, %v1134
        %1136 = vmatmul.bf16.gmra.mxu0 %v782
        %v1137 = vpop.f32.mrf.mxu0
        %v1138 = vadd.f32 %v1049, %v1137
        %v1139 = vpop.f32.mrf.mxu0
        %v1140 = vadd.f32 %v1051, %v1139
        %1141 = vmatmul.bf16.gmra.mxu0 %v785
        %v1142 = vpop.f32.mrf.mxu0
        %v1143 = vadd.f32 %v1054, %v1142
        %v1144 = vpop.f32.mrf.mxu0
        %v1145 = vadd.f32 %v1056, %v1144
        %1146 = vmatmul.bf16.gmra.mxu0 %v788
        %v1147 = vpop.f32.mrf.mxu0
        %v1148 = vadd.f32 %v1059, %v1147
        %v1149 = vpop.f32.mrf.mxu0
        %v1150 = vadd.f32 %v1061, %v1149
        %1151 = vmatmul.bf16.gmra.mxu0 %v791
        %v1152 = vpop.f32.mrf.mxu0
        %v1153 = vadd.f32 %v1064, %v1152
        %v1154 = vpop.f32.mrf.mxu0
        %v1155 = vadd.f32 %v1066, %v1154
        %1156 = vmatmul.bf16.gmra.mxu0 %v794
        %v1157 = vpop.f32.mrf.mxu0
        %v1158 = vadd.f32 %v1069, %v1157
        %v1159 = vpop.f32.mrf.mxu0
        %v1160 = vadd.f32 %v1071, %v1159
        %1161 = vmatmul.bf16.gmra.mxu0 %v797
        %v1162 = vpop.f32.mrf.mxu0
        %v1163 = vadd.f32 %v1074, %v1162
        %v1164 = vpop.f32.mrf.mxu0
        %v1165 = vadd.f32 %v1076, %v1164
        %1166 = vmatmul.bf16.gmra.mxu0 %v800
        %v1167 = vpop.f32.mrf.mxu0
        %v1168 = vadd.f32 %v1079, %v1167
        %v1169 = vpop.f32.mrf.mxu0
        %v1170 = vadd.f32 %v1081, %v1169
        %1171 = vdwg.mxu0
        %1172 = vmatpush.bf16.msra.mxu0 %v969
        %1173 = vmatpush.bf16.msra.mxu0 %v968
        %1174 = vmatpush.bf16.msra.mxu0 %v967
        %1175 = vmatpush.bf16.msra.mxu0 %v966
        %1176 = vmatpush.bf16.msra.mxu0 %v965
        %1177 = vmatpush.bf16.msra.mxu0 %v964
        %1178 = vmatpush.bf16.msra.mxu0 %v963
        %1179 = vmatpush.bf16.msra.mxu0 %v962
        %1180 = vmatmul.bf16.gmra.mxu0 %v756
        %v1181 = vpop.f32.mrf.mxu0
        %v1182 = vadd.f32 %v1093, %v1181
        %v1183 = vpop.f32.mrf.mxu0
        %v1184 = vadd.f32 %v1095, %v1183
        %1185 = vmatmul.bf16.gmra.mxu0 %v759
        %v1186 = vpop.f32.mrf.mxu0
        %v1187 = vadd.f32 %v1098, %v1186
        %v1188 = vpop.f32.mrf.mxu0
        %v1189 = vadd.f32 %v1100, %v1188
        %1190 = vmatmul.bf16.gmra.mxu0 %v762
        %v1191 = vpop.f32.mrf.mxu0
        %v1192 = vadd.f32 %v1103, %v1191
        %v1193 = vpop.f32.mrf.mxu0
        %v1194 = vadd.f32 %v1105, %v1193
        %1195 = vmatmul.bf16.gmra.mxu0 %v765
        %v1196 = vpop.f32.mrf.mxu0
        %v1197 = vadd.f32 %v1108, %v1196
        %v1198 = vpop.f32.mrf.mxu0
        %v1199 = vadd.f32 %v1110, %v1198
        %1200 = vmatmul.bf16.gmra.mxu0 %v768
        %v1201 = vpop.f32.mrf.mxu0
        %v1202 = vadd.f32 %v1113, %v1201
        %v1203 = vpop.f32.mrf.mxu0
        %v1204 = vadd.f32 %v1115, %v1203
        %1205 = vmatmul.bf16.gmra.mxu0 %v771
        %v1206 = vpop.f32.mrf.mxu0
        %v1207 = vadd.f32 %v1118, %v1206
        %v1208 = vpop.f32.mrf.mxu0
        %v1209 = vadd.f32 %v1120, %v1208
        %1210 = vmatmul.bf16.gmra.mxu0 %v774
        %v1211 = vpop.f32.mrf.mxu0
        %v1212 = vadd.f32 %v1123, %v1211
        %v1213 = vpop.f32.mrf.mxu0
        %v1214 = vadd.f32 %v1125, %v1213
        %1215 = vmatmul.bf16.gmra.mxu0 %v777
        %v1216 = vpop.f32.mrf.mxu0
        %v1217 = vadd.f32 %v1128, %v1216
        %v1218 = vpop.f32.mrf.mxu0
        %v1219 = vadd.f32 %v1130, %v1218
        %1220 = vmatmul.bf16.gmra.mxu0 %v780
        %v1221 = vpop.f32.mrf.mxu0
        %v1222 = vadd.f32 %v1133, %v1221
        %v1223 = vpop.f32.mrf.mxu0
        %v1224 = vadd.f32 %v1135, %v1223
        %1225 = vmatmul.bf16.gmra.mxu0 %v783
        %v1226 = vpop.f32.mrf.mxu0
        %v1227 = vadd.f32 %v1138, %v1226
        %v1228 = vpop.f32.mrf.mxu0
        %v1229 = vadd.f32 %v1140, %v1228
        %1230 = vmatmul.bf16.gmra.mxu0 %v786
        %v1231 = vpop.f32.mrf.mxu0
        %v1232 = vadd.f32 %v1143, %v1231
        %v1233 = vpop.f32.mrf.mxu0
        %v1234 = vadd.f32 %v1145, %v1233
        %1235 = vmatmul.bf16.gmra.mxu0 %v789
        %v1236 = vpop.f32.mrf.mxu0
        %v1237 = vadd.f32 %v1148, %v1236
        %v1238 = vpop.f32.mrf.mxu0
        %v1239 = vadd.f32 %v1150, %v1238
        %1240 = vmatmul.bf16.gmra.mxu0 %v792
        %v1241 = vpop.f32.mrf.mxu0
        %v1242 = vadd.f32 %v1153, %v1241
        %v1243 = vpop.f32.mrf.mxu0
        %v1244 = vadd.f32 %v1155, %v1243
        %1245 = vmatmul.bf16.gmra.mxu0 %v795
        %v1246 = vpop.f32.mrf.mxu0
        %v1247 = vadd.f32 %v1158, %v1246
        %v1248 = vpop.f32.mrf.mxu0
        %v1249 = vadd.f32 %v1160, %v1248
        %1250 = vmatmul.bf16.gmra.mxu0 %v798
        %v1251 = vpop.f32.mrf.mxu0
        %v1252 = vadd.f32 %v1163, %v1251
        %v1253 = vpop.f32.mrf.mxu0
        %v1254 = vadd.f32 %v1165, %v1253
        %1255 = vmatmul.bf16.gmra.mxu0 %v801
        %v1256 = vpop.f32.mrf.mxu0
        %v1257 = vadd.f32 %v1168, %v1256
        %v1258 = vpop.f32.mrf.mxu0
        %v1259 = vadd.f32 %v1170, %v1258
        %1260 = vdwg.mxu0
        %v1261 = vadd.f32 %v450, %v1182
        %v1262 = vadd.f32 %v451, %v1184
        %v1263 = vadd.f32 %v452, %v1187
        %v1264 = vadd.f32 %v453, %v1189
        %v1265 = vadd.f32 %v454, %v1192
        %v1266 = vadd.f32 %v455, %v1194
        %v1267 = vadd.f32 %v456, %v1197
        %v1268 = vadd.f32 %v457, %v1199
        %v1269 = vadd.f32 %v458, %v1202
        %v1270 = vadd.f32 %v459, %v1204
        %v1271 = vadd.f32 %v460, %v1207
        %v1272 = vadd.f32 %v461, %v1209
        %v1273 = vadd.f32 %v462, %v1212
        %v1274 = vadd.f32 %v463, %v1214
        %v1275 = vadd.f32 %v464, %v1217
        %v1276 = vadd.f32 %v465, %v1219
        %v1277 = vadd.f32 %v466, %v1222
        %v1278 = vadd.f32 %v467, %v1224
        %v1279 = vadd.f32 %v468, %v1227
        %v1280 = vadd.f32 %v469, %v1229
        %v1281 = vadd.f32 %v470, %v1232
        %v1282 = vadd.f32 %v471, %v1234
        %v1283 = vadd.f32 %v472, %v1237
        %v1284 = vadd.f32 %v473, %v1239
        %v1285 = vadd.f32 %v474, %v1242
        %v1286 = vadd.f32 %v475, %v1244
        %v1287 = vadd.f32 %v476, %v1247
        %v1288 = vadd.f32 %v477, %v1249
        %v1289 = vadd.f32 %v478, %v1252
        %v1290 = vadd.f32 %v479, %v1254
        %v1291 = vadd.f32 %v480, %v1257
        %v1292 = vadd.f32 %v481, %v1259
        %1293 = vst [vmem:[#allocation2] sm:$0xff] %v1261
        %1294 = vst [vmem:[#allocation2 + $0x8] sm:$0xff] %v1262
        %1295 = vst [vmem:[#allocation2 + $0x10] sm:$0xff] %v1263
        %1296 = vst [vmem:[#allocation2 + $0x18] sm:$0xff] %v1264
        %1297 = vst [vmem:[#allocation2 + $0x20] sm:$0xff] %v1265
        %1298 = vst [vmem:[#allocation2 + $0x28] sm:$0xff] %v1266
        %1299 = vst [vmem:[#allocation2 + $0x30] sm:$0xff] %v1267
        %1300 = vst [vmem:[#allocation2 + $0x38] sm:$0xff] %v1268
        %1301 = vst [vmem:[#allocation2 + $0x40] sm:$0xff] %v1269
        %1302 = vst [vmem:[#allocation2 + $0x48] sm:$0xff] %v1270
        %1303 = vst [vmem:[#allocation2 + $0x50] sm:$0xff] %v1271
        %1304 = vst [vmem:[#allocation2 + $0x58] sm:$0xff] %v1272
        %1305 = vst [vmem:[#allocation2 + $0x60] sm:$0xff] %v1273
        %1306 = vst [vmem:[#allocation2 + $0x68] sm:$0xff] %v1274
        %1307 = vst [vmem:[#allocation2 + $0x70] sm:$0xff] %v1275
        %1308 = vst [vmem:[#allocation2 + $0x78] sm:$0xff] %v1276
        %1309 = vst [vmem:[#allocation2 + $0x80] sm:$0xff] %v1277
        %1310 = vst [vmem:[#allocation2 + $0x88] sm:$0xff] %v1278
        %1311 = vst [vmem:[#allocation2 + $0x90] sm:$0xff] %v1279
        %1312 = vst [vmem:[#allocation2 + $0x98] sm:$0xff] %v1280
        %1313 = vst [vmem:[#allocation2 + $0xa0] sm:$0xff] %v1281
        %1314 = vst [vmem:[#allocation2 + $0xa8] sm:$0xff] %v1282
        %1315 = vst [vmem:[#allocation2 + $0xb0] sm:$0xff] %v1283
        %1316 = vst [vmem:[#allocation2 + $0xb8] sm:$0xff] %v1284
        %1317 = vst [vmem:[#allocation2 + $0xc0] sm:$0xff] %v1285
        %1318 = vst [vmem:[#allocation2 + $0xc8] sm:$0xff] %v1286
        %1319 = vst [vmem:[#allocation2 + $0xd0] sm:$0xff] %v1287
        %1320 = vst [vmem:[#allocation2 + $0xd8] sm:$0xff] %v1288
        %1321 = vst [vmem:[#allocation2 + $0xe0] sm:$0xff] %v1289
        %1322 = vst [vmem:[#allocation2 + $0xe8] sm:$0xff] %v1290
        %1323 = vst [vmem:[#allocation2 + $0xf0] sm:$0xff] %v1291
        %1324 = vst [vmem:[#allocation2 + $0xf8] sm:$0xff] %v1292
        %p1325 = scmp.eq.s32.totalorder %s22, 2
        // Predicated region
        $region59: #{up_forward.6} parent=49 // pred_check
          %p1326 = pneg %p1325
        $region60: #{up_forward.6} parent=49 // pred_check_branch
          %1328 = sbr.rel (%p1326) target = $region62
        $region61: #{up_forward.6} parent=49 // pred_region
          %v1329 = vld [vmem:[#allocation2] sm:$0xff]
          %v1330 = vld [vmem:[#allocation2 + $0x8] sm:$0xff]
          %v1331 = vld [vmem:[#allocation2 + $0x10] sm:$0xff]
          %v1332 = vld [vmem:[#allocation2 + $0x18] sm:$0xff]
          %v1333 = vld [vmem:[#allocation2 + $0x20] sm:$0xff]
          %v1334 = vld [vmem:[#allocation2 + $0x28] sm:$0xff]
          %v1335 = vld [vmem:[#allocation2 + $0x30] sm:$0xff]
          %v1336 = vld [vmem:[#allocation2 + $0x38] sm:$0xff]
          %v1337 = vld [vmem:[#allocation2 + $0x40] sm:$0xff]
          %v1338 = vld [vmem:[#allocation2 + $0x48] sm:$0xff]
          %v1339 = vld [vmem:[#allocation2 + $0x50] sm:$0xff]
          %v1340 = vld [vmem:[#allocation2 + $0x58] sm:$0xff]
          %v1341 = vld [vmem:[#allocation2 + $0x60] sm:$0xff]
          %v1342 = vld [vmem:[#allocation2 + $0x68] sm:$0xff]
          %v1343 = vld [vmem:[#allocation2 + $0x70] sm:$0xff]
          %v1344 = vld [vmem:[#allocation2 + $0x78] sm:$0xff]
          %v1345 = vld [vmem:[#allocation2 + $0x80] sm:$0xff]
          %v1346 = vld [vmem:[#allocation2 + $0x88] sm:$0xff]
          %v1347 = vld [vmem:[#allocation2 + $0x90] sm:$0xff]
          %v1348 = vld [vmem:[#allocation2 + $0x98] sm:$0xff]
          %v1349 = vld [vmem:[#allocation2 + $0xa0] sm:$0xff]
          %v1350 = vld [vmem:[#allocation2 + $0xa8] sm:$0xff]
          %v1351 = vld [vmem:[#allocation2 + $0xb0] sm:$0xff]
          %v1352 = vld [vmem:[#allocation2 + $0xb8] sm:$0xff]
          %v1353 = vld [vmem:[#allocation2 + $0xc0] sm:$0xff]
          %v1354 = vld [vmem:[#allocation2 + $0xc8] sm:$0xff]
          %v1355 = vld [vmem:[#allocation2 + $0xd0] sm:$0xff]
          %v1356 = vld [vmem:[#allocation2 + $0xd8] sm:$0xff]
          %v1357 = vld [vmem:[#allocation2 + $0xe0] sm:$0xff]
          %v1358 = vld [vmem:[#allocation2 + $0xe8] sm:$0xff]
          %v1359 = vld [vmem:[#allocation2 + $0xf0] sm:$0xff]
          %v1360 = vld [vmem:[#allocation2 + $0xf8] sm:$0xff]
          %1361 = vst [vmem:[%s405] sm:$0xff] %v1329
          %1362 = vst [vmem:[%s405 + $0x8] sm:$0xff] %v1330
          %1363 = vst [vmem:[%s405 + $0x10] sm:$0xff] %v1331
          %1364 = vst [vmem:[%s405 + $0x18] sm:$0xff] %v1332
          %1365 = vst [vmem:[%s405 + $0x20] sm:$0xff] %v1333
          %1366 = vst [vmem:[%s405 + $0x28] sm:$0xff] %v1334
          %1367 = vst [vmem:[%s405 + $0x30] sm:$0xff] %v1335
          %1368 = vst [vmem:[%s405 + $0x38] sm:$0xff] %v1336
          %1369 = vst [vmem:[%s405 + $0x40] sm:$0xff] %v1337
          %1370 = vst [vmem:[%s405 + $0x48] sm:$0xff] %v1338
          %1371 = vst [vmem:[%s405 + $0x50] sm:$0xff] %v1339
          %1372 = vst [vmem:[%s405 + $0x58] sm:$0xff] %v1340
          %1373 = vst [vmem:[%s405 + $0x60] sm:$0xff] %v1341
          %1374 = vst [vmem:[%s405 + $0x68] sm:$0xff] %v1342
          %1375 = vst [vmem:[%s405 + $0x70] sm:$0xff] %v1343
          %1376 = vst [vmem:[%s405 + $0x78] sm:$0xff] %v1344
          %1377 = vst [vmem:[%s405 + $0x80] sm:$0xff] %v1345
          %1378 = vst [vmem:[%s405 + $0x88] sm:$0xff] %v1346
          %1379 = vst [vmem:[%s405 + $0x90] sm:$0xff] %v1347
          %1380 = vst [vmem:[%s405 + $0x98] sm:$0xff] %v1348
          %1381 = vst [vmem:[%s405 + $0xa0] sm:$0xff] %v1349
          %1382 = vst [vmem:[%s405 + $0xa8] sm:$0xff] %v1350
          %1383 = vst [vmem:[%s405 + $0xb0] sm:$0xff] %v1351
          %1384 = vst [vmem:[%s405 + $0xb8] sm:$0xff] %v1352
          %1385 = vst [vmem:[%s405 + $0xc0] sm:$0xff] %v1353
          %1386 = vst [vmem:[%s405 + $0xc8] sm:$0xff] %v1354
          %1387 = vst [vmem:[%s405 + $0xd0] sm:$0xff] %v1355
          %1388 = vst [vmem:[%s405 + $0xd8] sm:$0xff] %v1356
          %1389 = vst [vmem:[%s405 + $0xe0] sm:$0xff] %v1357
          %1390 = vst [vmem:[%s405 + $0xe8] sm:$0xff] %v1358
          %1391 = vst [vmem:[%s405 + $0xf0] sm:$0xff] %v1359
          %1392 = vst [vmem:[%s405 + $0xf8] sm:$0xff] %v1360
          %v1393 = vadd.f32 %v1329, %v1330
          %v1394 = vadd.f32 %v1393, %v1331
          %v1395 = vadd.f32 %v1394, %v1332
          %v1396 = vadd.f32 %v1395, %v1333
          %v1397 = vadd.f32 %v1396, %v1334
          %v1398 = vadd.f32 %v1397, %v1335
          %v1399 = vadd.f32 %v1398, %v1336
          %v1400 = vadd.f32 %v1399, %v1337
          %v1401 = vadd.f32 %v1400, %v1338
          %v1402 = vadd.f32 %v1401, %v1339
          %v1403 = vadd.f32 %v1402, %v1340
          %v1404 = vadd.f32 %v1403, %v1341
          %v1405 = vadd.f32 %v1404, %v1342
          %v1406 = vadd.f32 %v1405, %v1343
          %v1407 = vadd.f32 %v1406, %v1344
          %v1408 = vadd.f32 %v1407, %v1345
          %v1409 = vadd.f32 %v1408, %v1346
          %v1410 = vadd.f32 %v1409, %v1347
          %v1411 = vadd.f32 %v1410, %v1348
          %v1412 = vadd.f32 %v1411, %v1349
          %v1413 = vadd.f32 %v1412, %v1350
          %v1414 = vadd.f32 %v1413, %v1351
          %v1415 = vadd.f32 %v1414, %v1352
          %v1416 = vadd.f32 %v1415, %v1353
          %v1417 = vadd.f32 %v1416, %v1354
          %v1418 = vadd.f32 %v1417, %v1355
          %v1419 = vadd.f32 %v1418, %v1356
          %v1420 = vadd.f32 %v1419, %v1357
          %v1421 = vadd.f32 %v1420, %v1358
          %v1422 = vadd.f32 %v1421, %v1359
          %v1423 = vadd.f32 %v1422, %v1360
          %v1424 = vrot.slane %v1423, 4
          %v1425 = vadd.f32 %v1423, %v1424
          %v1426 = vrot.slane %v1425, 2
          %v1427 = vadd.f32 %v1425, %v1426
          %v1428 = vrot.slane %v1427, 1
          %v1429 = vadd.f32 %v1427, %v1428
          %1430 = vst [vmem:[%s413] sm:$0x1] %v1429
          %v1431 = vmul.f32 %v1329, %v1329
          %v1432 = vmul.f32 %v1330, %v1330
          %v1433 = vmul.f32 %v1331, %v1331
          %v1434 = vmul.f32 %v1332, %v1332
          %v1435 = vmul.f32 %v1333, %v1333
          %v1436 = vmul.f32 %v1334, %v1334
          %v1437 = vmul.f32 %v1335, %v1335
          %v1438 = vmul.f32 %v1336, %v1336
          %v1439 = vmul.f32 %v1337, %v1337
          %v1440 = vmul.f32 %v1338, %v1338
          %v1441 = vmul.f32 %v1339, %v1339
          %v1442 = vmul.f32 %v1340, %v1340
          %v1443 = vmul.f32 %v1341, %v1341
          %v1444 = vmul.f32 %v1342, %v1342
          %v1445 = vmul.f32 %v1343, %v1343
          %v1446 = vmul.f32 %v1344, %v1344
          %v1447 = vmul.f32 %v1345, %v1345
          %v1448 = vmul.f32 %v1346, %v1346
          %v1449 = vmul.f32 %v1347, %v1347
          %v1450 = vmul.f32 %v1348, %v1348
          %v1451 = vmul.f32 %v1349, %v1349
          %v1452 = vmul.f32 %v1350, %v1350
          %v1453 = vmul.f32 %v1351, %v1351
          %v1454 = vmul.f32 %v1352, %v1352
          %v1455 = vmul.f32 %v1353, %v1353
          %v1456 = vmul.f32 %v1354, %v1354
          %v1457 = vmul.f32 %v1355, %v1355
          %v1458 = vmul.f32 %v1356, %v1356
          %v1459 = vmul.f32 %v1357, %v1357
          %v1460 = vmul.f32 %v1358, %v1358
          %v1461 = vmul.f32 %v1359, %v1359
          %v1462 = vmul.f32 %v1360, %v1360
          %v1463 = vadd.f32 %v1431, %v1432
          %v1464 = vadd.f32 %v1463, %v1433
          %v1465 = vadd.f32 %v1464, %v1434
          %v1466 = vadd.f32 %v1465, %v1435
          %v1467 = vadd.f32 %v1466, %v1436
          %v1468 = vadd.f32 %v1467, %v1437
          %v1469 = vadd.f32 %v1468, %v1438
          %v1470 = vadd.f32 %v1469, %v1439
          %v1471 = vadd.f32 %v1470, %v1440
          %v1472 = vadd.f32 %v1471, %v1441
          %v1473 = vadd.f32 %v1472, %v1442
          %v1474 = vadd.f32 %v1473, %v1443
          %v1475 = vadd.f32 %v1474, %v1444
          %v1476 = vadd.f32 %v1475, %v1445
          %v1477 = vadd.f32 %v1476, %v1446
          %v1478 = vadd.f32 %v1477, %v1447
          %v1479 = vadd.f32 %v1478, %v1448
          %v1480 = vadd.f32 %v1479, %v1449
          %v1481 = vadd.f32 %v1480, %v1450
          %v1482 = vadd.f32 %v1481, %v1451
          %v1483 = vadd.f32 %v1482, %v1452
          %v1484 = vadd.f32 %v1483, %v1453
          %v1485 = vadd.f32 %v1484, %v1454
          %v1486 = vadd.f32 %v1485, %v1455
          %v1487 = vadd.f32 %v1486, %v1456
          %v1488 = vadd.f32 %v1487, %v1457
          %v1489 = vadd.f32 %v1488, %v1458
          %v1490 = vadd.f32 %v1489, %v1459
          %v1491 = vadd.f32 %v1490, %v1460
          %v1492 = vadd.f32 %v1491, %v1461
          %v1493 = vadd.f32 %v1492, %v1462
          %v1494 = vrot.slane %v1493, 4
          %v1495 = vadd.f32 %v1493, %v1494
          %v1496 = vrot.slane %v1495, 2
          %v1497 = vadd.f32 %v1495, %v1496
          %v1498 = vrot.slane %v1497, 1
          %v1499 = vadd.f32 %v1497, %v1498
          %1500 = vst [vmem:[%s413 + $0x1] sm:$0x1] %v1499
        $region62: #{up_forward.6} parent=49 // pred_fallthru
          _
        %s1501 = smul.u32 32, %s20
        %p1502 = scmp.lt.s32.totalorder %s1501, 63
        %s1503 = scalar_select %p1502, %s1501, 63
        %p1504 = scmp.lt.s32.totalorder %s21, 0
        %s1505 = scalar_select %p1504, %s21, 0
        %s1506 = sadd.s32 %s1505, %s1503
        %s1507 = smul.addr %s1506, 8
        %s1508 = scalar_lea.vmem %s2, %s1507
        %p1509 = scmp.lt.s32.totalorder %s20, 1
        %s1510 = scalar_select %p1509, %s20, 1
        %p1511 = scmp.lt.s32.totalorder %s21, 0
        %s1512 = scalar_select %p1511, %s21, 0
        %s1513 = sadd.s32 %s1512, %s1510
        %s1514 = smul.addr %s1513, 2
        %s1515 = scalar_lea.vmem %s3, %s1514
        // Predicated region
        $region63: #{up_forward.6} parent=49 // pred_check
          %p1516 = pneg %p110
        $region64: #{up_forward.6} parent=49 // pred_check_branch
          %1518 = sbr.rel (%p1516) target = $region66
        $region65: #{up_forward.6} parent=49 // pred_region
          %s1519 = smul.u32 32, %s20
        $region66: #{up_forward.6} parent=49 // pred_fallthru
          _
        // Predicated region
        $region67: #{up_forward.6} parent=49 // pred_check
          %p1520 = pneg %p138
        $region68: #{up_forward.6} parent=49 // pred_check_branch
          %1522 = sbr.rel (%p1520) target = $region70
        $region69: #{up_forward.6} parent=49 // pred_region
          _
        $region70: #{up_forward.6} parent=49 // pred_fallthru
          _
      $region50: #{up_forward.6} parent=5 // pred_fallthru
        _
      %p1523 = scmp.le.s32.totalorder 2, %s10
      // Predicated region
      $region71: #{up_forward.6} parent=5 // pred_check
        %p1524 = pneg %p1523
      $region72: #{up_forward.6} parent=5 // pred_check_branch
        %1526 = sbr.rel (%p1524) target = $region74
      $region73: #{up_forward.6} parent=5 // pred_region
        %s1527 = ssub.s32 %s10, 2
        // Predicated region
        $region75: #{up_forward.6} parent=73 // pred_check
          %p1528 = pneg %p116
        $region76: #{up_forward.6} parent=73 // pred_check_branch
          %1530 = sbr.rel (%p1528) target = $region78
        $region77: #{up_forward.6} parent=73 // pred_region
          %s1531 = smul.u32 32, %s23
          %p1532 = scmp.lt.s32.totalorder %s1531, 63
          %s1533 = scalar_select %p1532, %s1531, 63
          %p1534 = scmp.lt.s32.totalorder %s24, 0
          %s1535 = scalar_select %p1534, %s24, 0
          %s1536 = sadd.s32 %s1535, %s1533
          %s1537 = smul.addr %s1536, 8
          %s1538 = scalar_lea.vmem %s2, %s1537
        $region78: #{up_forward.6} parent=73 // pred_fallthru
          _
        // Predicated region
        $region79: #{up_forward.6} parent=73 // pred_check
          %p1539 = pneg %p144
        $region80: #{up_forward.6} parent=73 // pred_check_branch
          %1541 = sbr.rel (%p1539) target = $region82
        $region81: #{up_forward.6} parent=73 // pred_region
          %p1542 = scmp.lt.s32.totalorder %s23, 1
          %s1543 = scalar_select %p1542, %s23, 1
          %p1544 = scmp.lt.s32.totalorder %s24, 0
          %s1545 = scalar_select %p1544, %s24, 0
          %s1546 = sadd.s32 %s1545, %s1543
          %s1547 = smul.addr %s1546, 2
          %s1548 = scalar_lea.vmem %s3, %s1547
        $region82: #{up_forward.6} parent=73 // pred_fallthru
          _
      $region74: #{up_forward.6} parent=5 // pred_fallthru
        _
    $region6: #{up_forward.6} parent=1 // loop_footer
      %s14 = sadd.s32 1, %s10
    $region7: #{up_forward.6} parent=1 // loop_footer_branch
      %9 = sbr.rel target = $region3
    $region8: #{up_forward.6} parent=1 // loop_exit
      _

</llo_original>
